<compile_context>
chip_gen: v7x
topology: tpu7x:2x2x1
jax: 0.10.0
libtpu: 0.0.40
codegen_flags: <defaults>
</compile_context>

<pallas_src>
import functools
import math

import jax
import jax.numpy as jnp
from jax.experimental import pallas as pl
from jax.experimental.pallas import tpu as pltpu


# --------------------------------------------------------------------------
# Small helpers
# --------------------------------------------------------------------------
def _compiler_params(dimension_semantics):
    kwargs = dict(dimension_semantics=dimension_semantics)
    try:
        cap = pltpu.get_tpu_info().vmem_capacity_bytes
        kwargs["vmem_limit_bytes"] = int(cap * 0.85)   # ~108 MiB v5e/v6e, ~54 MiB v7x
    except Exception:
        pass                                           # leave compiler default
    return pltpu.CompilerParams(**kwargs)


def _const_spec(shape, buffers=1):
    """BlockSpec for a grid-constant (weight) block; single-buffered if possible."""
    ndim = len(shape)
    index_map = lambda *_: (0,) * ndim
    if buffers is not None and hasattr(pl, "Buffered"):
        try:
            return pl.BlockSpec(shape, index_map, pipeline_mode=pl.Buffered(buffers))
        except TypeError:
            pass
    return pl.BlockSpec(shape, index_map)


def _pick_tile(s, prefs):
    for t in prefs:
        if t <= s and s % t == 0:
            return t
    return s


def _layernorm(x, eps=1e-5):
    mean = jnp.mean(x, axis=-1, keepdims=True)
    var = jnp.mean((x - mean) ** 2, axis=-1, keepdims=True)
    return (x - mean) * jax.lax.rsqrt(var + eps)


# --------------------------------------------------------------------------
# Kernel 1: AdaLN parameter generator  (B, 256) -> (B, 6*D), single grid step
# --------------------------------------------------------------------------
def _adaln_mlp_kernel(s_ref, w1_ref, b1_ref, w2_ref, b2_ref, out_ref):
    h = jnp.dot(s_ref[...].astype(jnp.bfloat16), w1_ref[...],
                preferred_element_type=jnp.float32) + b1_ref[...]
    h = h * jax.nn.sigmoid(h)                                    # SiLU (f32)
    out_ref[...] = jnp.dot(h.astype(jnp.bfloat16), w2_ref[...],
                           preferred_element_type=jnp.float32) + b2_ref[...]


def adaln_param_generator(speech, w1, b1, w2, b2):
    B, s_in = speech.shape
    D = w1.shape[1]
    out_dim = w2.shape[1]                                        # 6 * D
    w1b = w1.astype(jnp.bfloat16)
    w2b = w2.astype(jnp.bfloat16)

    def _call(buffers):
        return pl.pallas_call(
            _adaln_mlp_kernel,
            out_shape=jax.ShapeDtypeStruct((B, out_dim), jnp.float32),
            grid=(1,),
            in_specs=[
                pl.BlockSpec((B, s_in), lambda i: (0, 0)),
                _const_spec((s_in, D), buffers),
                _const_spec((1, D), buffers),
                _const_spec((D, out_dim), buffers),
                _const_spec((1, out_dim), buffers),
            ],
            out_specs=pl.BlockSpec((B, out_dim), lambda i: (0, 0)),
            compiler_params=_compiler_params(("arbitrary",)),
        )(speech, w1b, b1, w2b, b2)

    try:
        return _call(1)          # single-buffer constant weights
    except Exception:
        return _call(None)       # fallback: default (double) buffering


# --------------------------------------------------------------------------
# Kernel 2: modulated LayerNorm + fused QKV projection (once per row)
#   emits Q (pre-scaled), K, V head-major in bf16: (B, H, S, hd)
# --------------------------------------------------------------------------
def _qkv_kernel(x_ref, p_ref, wqkv_ref, bqkv_ref, q_ref, k_ref, v_ref, *,
                num_heads, head_dim):
    x_t = x_ref[0]                           # (ts, D) f32
    p = p_ref[0]                             # (6, D)  f32
    alpha1 = p[0:1, :]
    beta1 = p[1:2, :]
    D = x_t.shape[1]

    xm = (_layernorm(x_t) * (1.0 + alpha1) + beta1).astype(jnp.bfloat16)
    qkv = jnp.dot(xm, wqkv_ref[...],
                  preferred_element_type=jnp.float32) + bqkv_ref[...]   # (ts, 3D)

    scale = 1.0 / math.sqrt(head_dim)
    for h in range(num_heads):               # static unroll; 128-aligned lane slices
        lo = h * head_dim
        q_ref[0, h] = (qkv[:, lo:lo + head_dim] * scale).astype(jnp.bfloat16)
        k_ref[0, h] = qkv[:, D + lo:D + lo + head_dim].astype(jnp.bfloat16)
        v_ref[0, h] = qkv[:, 2 * D + lo:2 * D + lo + head_dim].astype(jnp.bfloat16)


# --------------------------------------------------------------------------
# Kernel 3: flash-style attention over K/V tiles + out-proj + AdaLN MLP
#   grid = (B, q_tiles, kv_tiles); kv axis is the innermost reduction axis.
# --------------------------------------------------------------------------
def _flash_block_kernel(x_ref, q_ref, k_ref, v_ref, p_ref,
                        wo_ref, bo_ref, w1_ref, b1_ref, w2_ref, b2_ref,
                        out_ref, m_sc, l_sc, acc_sc, *, num_heads):
    kv = pl.program_id(2)

    @pl.when(kv == 0)
    def _():
        m_sc[...] = jnp.full(m_sc.shape, -jnp.inf, dtype=m_sc.dtype)
        l_sc[...] = jnp.zeros(l_sc.shape, dtype=l_sc.dtype)
        acc_sc[...] = jnp.zeros(acc_sc.shape, dtype=acc_sc.dtype)

    qh = q_ref[0]                                            # (H, tq, hd) bf16
    kh = k_ref[0]                                            # (H, tk, hd) bf16
    vh = v_ref[0]                                            # (H, tk, hd) bf16

    s = jnp.einsum('hqd,hkd->hqk', qh, kh,
                   preferred_element_type=jnp.float32)       # (H, tq, tk) f32
    m_new = jnp.maximum(m_sc[...], jnp.max(s, axis=-1, keepdims=True))
    alpha = jnp.exp(m_sc[...] - m_new)
    e = jnp.exp(s - m_new)
    l_sc[...] = alpha * l_sc[...] + jnp.sum(e, axis=-1, keepdims=True)
    acc_sc[...] = alpha * acc_sc[...] + jnp.einsum(
        'hqk,hkd->hqd', e.astype(jnp.bfloat16), vh,
        preferred_element_type=jnp.float32)                  # (H, tq, hd)
    m_sc[...] = m_new

    @pl.when(kv == pl.num_programs(2) - 1)
    def _():
        o = acc_sc[...] * pl.reciprocal(l_sc[...], approx=True)   # (H, tq, hd) f32
        ob = o.astype(jnp.bfloat16)
        tq = o.shape[1]
        D = wo_ref.shape[-1]

        # Fused head-concat + output projection: sum_h o[h] @ wo[h].
        attn = jnp.zeros((tq, D), jnp.float32)
        for h in range(num_heads):
            attn = attn + jnp.dot(ob[h], wo_ref[h],
                                  preferred_element_type=jnp.float32)
        attn = attn + bo_ref[...]

        p6 = p_ref[0]                                        # (6, D)
        gamma1 = p6[2:3, :]
        alpha2 = p6[3:4, :]
        beta2 = p6[4:5, :]
        gamma2 = p6[5:6, :]

        x_t = x_ref[0]                                       # (tq, D) f32 residual
        h1 = x_t + gamma1 * attn

        xm2 = (_layernorm(h1) * (1.0 + alpha2) + beta2).astype(jnp.bfloat16)
        m = jnp.dot(xm2, w1_ref[...],
                    preferred_element_type=jnp.float32) + b1_ref[...]
        m = jax.nn.gelu(m, approximate=True)                 # tanh GELU (EUP)
        m = jnp.dot(m.astype(jnp.bfloat16), w2_ref[...],
                    preferred_element_type=jnp.float32) + b2_ref[...]
        # TODO(synk): emit bf16 here if the downstream consumer tolerates it
        # (halves the (B,S,D) HBM writeback).
        out_ref[0] = (h1 + gamma2 * m).astype(out_ref.dtype)


def transformer_block_adaln(x, params6, wqkv, bqkv, wo, bo, w1, b1, w2, b2,
                            *, num_heads):
    B, S, D = x.shape
    assert D % num_heads == 0
    hd = D // num_heads

    # 256-row tiles fill the v6e/v7x 256-wide MXU; fall back to full S for toy sizes.
    ts_p = _pick_tile(S, (256, 128))       # projection tile
    ts_q = _pick_tile(S, (256, 128))       # query tile
    ts_kv = _pick_tile(S, (256, 128))      # K/V tile (>=256 preferred on v6e/v7x)
    n_q, n_kv = S // ts_q, S // ts_kv
    # TODO(synk): for B * n_q < 2 on v7x, force a sequence split so both
    # TensorCores get work.

    wqkv_b = wqkv.astype(jnp.bfloat16)
    wo_h = wo.reshape(num_heads, hd, D).astype(jnp.bfloat16)   # per-head out-proj
    w1_b = w1.astype(jnp.bfloat16)
    w2_b = w2.astype(jnp.bfloat16)

    # ---- stage 1: Q/K/V computed exactly once per row, head-major bf16 ----
    qkv_kernel = functools.partial(_qkv_kernel, num_heads=num_heads, head_dim=hd)
    hv_shape = jax.ShapeDtypeStruct((B, num_heads, S, hd), jnp.bfloat16)
    hv_spec = pl.BlockSpec((1, num_heads, ts_p, hd), lambda b, si: (b, 0, si, 0))

    def _call_qkv(buffers):
        return pl.pallas_call(
            qkv_kernel,
            out_shape=(hv_shape, hv_shape, hv_shape),
            grid=(B, S // ts_p),
            in_specs=[
                pl.BlockSpec((1, ts_p, D), lambda b, si: (b, si, 0)),
                pl.BlockSpec((1, 6, D), lambda b, si: (b, 0, 0)),
                _const_spec((D, 3 * D), buffers),
                _const_spec((1, 3 * D), buffers),
            ],
            out_specs=(hv_spec, hv_spec, hv_spec),
            compiler_params=_compiler_params(("parallel", "parallel")),
        )(x, params6, wqkv_b, bqkv)

    try:
        q, k, v = _call_qkv(1)
    except Exception:
        q, k, v = _call_qkv(None)

    # ---- stage 2: flash attention + output proj + AdaLN MLP ----
    blk_kernel = functools.partial(_flash_block_kernel, num_heads=num_heads)

    def _call_block(buffers):
        return pl.pallas_call(
            blk_kernel,
            out_shape=jax.ShapeDtypeStruct((B, S, D), jnp.float32),
            grid=(B, n_q, n_kv),
            in_specs=[
                pl.BlockSpec((1, ts_q, D), lambda b, qi, ki: (b, qi, 0)),
                pl.BlockSpec((1, num_heads, ts_q, hd),
                             lambda b, qi, ki: (b, 0, qi, 0)),
                pl.BlockSpec((1, num_heads, ts_kv, hd),
                             lambda b, qi, ki: (b, 0, ki, 0)),
                pl.BlockSpec((1, num_heads, ts_kv, hd),
                             lambda b, qi, ki: (b, 0, ki, 0)),
                pl.BlockSpec((1, 6, D), lambda b, qi, ki: (b, 0, 0)),
                _const_spec((num_heads, hd, D), buffers),
                _const_spec((1, D), buffers),
                _const_spec((D, 4 * D), buffers),
                _const_spec((1, 4 * D), buffers),
                _const_spec((4 * D, D), buffers),
                _const_spec((1, D), buffers),
            ],
            out_specs=pl.BlockSpec((1, ts_q, D), lambda b, qi, ki: (b, qi, 0)),
            scratch_shapes=[
                pltpu.VMEM((num_heads, ts_q, 1), jnp.float32),    # running max
                pltpu.VMEM((num_heads, ts_q, 1), jnp.float32),    # running sum
                pltpu.VMEM((num_heads, ts_q, hd), jnp.float32),   # accumulator
            ],
            compiler_params=_compiler_params(("parallel", "parallel", "arbitrary")),
        )(x, q, k, v, params6, wo_h, bo, w1_b, b1, w2_b, b2)

    try:
        return _call_block(1)
    except Exception:
        return _call_block(None)


# --------------------------------------------------------------------------
# Full forward (embedding / positional-encoding lookup is glue in plain JAX)
# --------------------------------------------------------------------------
def transformer_encoder_adaln(token_ids, speech_embedding, params, *, num_heads):
    B, S = token_ids.shape

    # nn.Embedding(padding_idx=0): row 0 of the table is zero.
    x = jnp.take(params["embedding"], token_ids, axis=0)         # (B, S, D)
    x = x + params["pos"][:S][None, :, :]                        # learnable pos enc
    # Dropout: eval mode -> identity.

    gen = adaln_param_generator(
        speech_embedding,
        params["gen_w1"], params["gen_b1"], params["gen_w2"], params["gen_b2"],
    )                                                            # (B, 6*D)
    D = params["embedding"].shape[1]
    params6 = gen.reshape(B, 6, D)                               # chunk(6) order

    return transformer_block_adaln(
        x, params6,
        params["wqkv"], params["bqkv"], params["wo"], params["bo"],
        params["wm1"], params["bm1"], params["wm2"], params["bm2"],
        num_heads=num_heads,
    )


# --------------------------------------------------------------------------
# Deterministic parameter init + example run
# --------------------------------------------------------------------------
def init_params(key, vocab_size, hidden_dim, max_len, speech_dim=256):
    D = hidden_dim
    ks = jax.random.split(key, 16)
    n = lambda k, shape, s=0.02: (s * jax.random.normal(k, shape)).astype(jnp.float32)

    emb = n(ks[0], (vocab_size, D))
    emb = emb.at[0].set(0.0)  # padding_idx=0

    return {
        "embedding": emb,
        "pos": n(ks[1], (max_len, D)),
        # MlpAdaLN: Linear(256, D) -> SiLU -> Linear(D, 6D)
        "gen_w1": n(ks[2], (speech_dim, D)), "gen_b1": jnp.zeros((1, D), jnp.float32),
        "gen_w2": n(ks[3], (D, 6 * D)),      "gen_b2": jnp.zeros((1, 6 * D), jnp.float32),
        # TransformerBlockAdaLN: MHA (fused qkv) + MLP(D -> 4D -> D)
        "wqkv": n(ks[4], (D, 3 * D)), "bqkv": jnp.zeros((1, 3 * D), jnp.float32),
        "wo":   n(ks[5], (D, D)),     "bo":   jnp.zeros((1, D), jnp.float32),
        "wm1":  n(ks[6], (D, 4 * D)), "bm1":  jnp.zeros((1, 4 * D), jnp.float32),
        "wm2":  n(ks[7], (4 * D, D)), "bm2":  jnp.zeros((1, D), jnp.float32),
    }


if __name__ == "__main__":
    # Small but lane-dense config; S=512 exercises multi-tile q and kv grids.
    B, S = 2, 512
    vocab_size = 100
    hidden_dim = 256
    num_heads = 2
    max_len = 512
    speech_dim = 256

    key = jax.random.PRNGKey(0)
    k_tok, k_speech, k_param = jax.random.split(key, 3)

    token_ids = jax.random.randint(k_tok, (B, S), 0, vocab_size, dtype=jnp.int32)
    speech_embedding = jax.random.normal(k_speech, (B, speech_dim), dtype=jnp.float32)
    params = init_params(k_param, vocab_size, hidden_dim, max_len, speech_dim)

    out = transformer_encoder_adaln(
        token_ids, speech_embedding, params, num_heads=num_heads
    )
    out = jax.block_until_ready(out)
    assert out.shape == (B, S, hidden_dim)
    assert bool(jnp.isfinite(out).all())
    print("KERNEL_OK")
</pallas_src>

<mosaic_0001>
module attributes {stable_mosaic.version = 11 : i64} {
  func.func @_adaln_mlp_kernel(%arg0: i32, %arg1: memref<2x256xf32, #tpu.memory_space<vmem>>, %arg2: memref<256x256xbf16, #tpu.memory_space<vmem>>, %arg3: memref<1x256xf32, #tpu.memory_space<vmem>>, %arg4: memref<256x1536xbf16, #tpu.memory_space<vmem>>, %arg5: memref<1x1536xf32, #tpu.memory_space<vmem>>, %arg6: memref<2x1536xf32, #tpu.memory_space<vmem>>) attributes {dimension_semantics = [#tpu.dimension_semantics<arbitrary>], iteration_bounds = array<i64: 1>, scalar_prefetch = 0 : i64, scratch_operands = 0 : i64, tpu.core_type = #tpu.core_type<tc>, window_params = [{pipeline_mode = #tpu.pipeline_mode<synchronous>, transform_indices = @transform_0, window_bounds = array<i64: 2, 256>}, {pipeline_mode = #tpu.pipeline_mode<synchronous>, transform_indices = @transform_1, window_bounds = array<i64: 256, 256>}, {pipeline_mode = #tpu.pipeline_mode<synchronous>, transform_indices = @transform_2, window_bounds = array<i64: 1, 256>}, {pipeline_mode = #tpu.pipeline_mode<synchronous>, transform_indices = @transform_3, window_bounds = array<i64: 256, 1536>}, {pipeline_mode = #tpu.pipeline_mode<synchronous>, transform_indices = @transform_4, window_bounds = array<i64: 1, 1536>}, {pipeline_mode = #tpu.pipeline_mode<synchronous>, transform_indices = @transform_5, window_bounds = array<i64: 2, 1536>}]} {
    %c0 = arith.constant 0 : index
    %c0_0 = arith.constant 0 : index
    %0 = vector.load %arg1[%c0, %c0_0] : memref<2x256xf32, #tpu.memory_space<vmem>>, vector<2x256xf32>
    %1 = arith.truncf %0 : vector<2x256xf32> to vector<2x256xbf16>
    %c0_1 = arith.constant 0 : index
    %c0_2 = arith.constant 0 : index
    %2 = vector.load %arg2[%c0_1, %c0_2] : memref<256x256xbf16, #tpu.memory_space<vmem>>, vector<256x256xbf16>
    %cst = arith.constant dense<0.000000e+00> : vector<2x256xf32>
    %3 = tpu.matmul %1, %2, %cst {dimension_numbers = #tpu.dot_dimension_numbers<[1], [0], [0], [1], [0, 0, 1, 1], [], []>} : vector<2x256xbf16>, vector<256x256xbf16>, vector<2x256xf32> -> vector<2x256xf32>
    %c0_3 = arith.constant 0 : index
    %c0_4 = arith.constant 0 : index
    %4 = vector.load %arg3[%c0_3, %c0_4] : memref<1x256xf32, #tpu.memory_space<vmem>>, vector<1x256xf32>
    %5 = vector.broadcast %4 : vector<1x256xf32> to vector<2x256xf32>
    %6 = arith.addf %3, %5 : vector<2x256xf32>
    %7 = arith.negf %6 : vector<2x256xf32>
    %8 = math.exp %7 : vector<2x256xf32>
    %cst_5 = arith.constant 1.000000e+00 : f32
    %9 = vector.broadcast %cst_5 : f32 to vector<2x256xf32>
    %10 = arith.addf %9, %8 : vector<2x256xf32>
    %11 = arith.divf %9, %10 : vector<2x256xf32>
    %12 = arith.mulf %6, %11 : vector<2x256xf32>
    %13 = arith.truncf %12 : vector<2x256xf32> to vector<2x256xbf16>
    %c0_6 = arith.constant 0 : index
    %c0_7 = arith.constant 0 : index
    %14 = vector.load %arg4[%c0_6, %c0_7] : memref<256x1536xbf16, #tpu.memory_space<vmem>>, vector<256x1536xbf16>
    %cst_8 = arith.constant dense<0.000000e+00> : vector<2x1536xf32>
    %15 = tpu.matmul %13, %14, %cst_8 {dimension_numbers = #tpu.dot_dimension_numbers<[1], [0], [0], [1], [0, 0, 1, 1], [], []>} : vector<2x256xbf16>, vector<256x1536xbf16>, vector<2x1536xf32> -> vector<2x1536xf32>
    %c0_9 = arith.constant 0 : index
    %c0_10 = arith.constant 0 : index
    %16 = vector.load %arg5[%c0_9, %c0_10] : memref<1x1536xf32, #tpu.memory_space<vmem>>, vector<1x1536xf32>
    %17 = vector.broadcast %16 : vector<1x1536xf32> to vector<2x1536xf32>
    %18 = arith.addf %15, %17 : vector<2x1536xf32>
    %c0_11 = arith.constant 0 : index
    %c0_12 = arith.constant 0 : index
    %19 = vector.load %arg6[%c0_11, %c0_12] : memref<2x1536xf32, #tpu.memory_space<vmem>>, vector<2x1536xf32>
    tpu.vector_store %arg6[%c0_11, %c0_12], %18 {strides = array<i32>} : memref<2x1536xf32, #tpu.memory_space<vmem>>, vector<2x1536xf32>,
    return
  }
  func.func @transform_0(%arg0: i32) -> (i32, i32) {
    %c0_i32 = arith.constant 0 : i32
    %c0_i32_0 = arith.constant 0 : i32
    %c0_i32_1 = arith.constant 0 : i32
    return %c0_i32, %c0_i32_0 : i32, i32
  }
  func.func @transform_1(%arg0: i32) -> (i32, i32) {
    %c0_i32 = arith.constant 0 : i32
    %c0_i32_0 = arith.constant 0 : i32
    %c0_i32_1 = arith.constant 0 : i32
    return %c0_i32, %c0_i32_0 : i32, i32
  }
  func.func @transform_2(%arg0: i32) -> (i32, i32) {
    %c0_i32 = arith.constant 0 : i32
    %c0_i32_0 = arith.constant 0 : i32
    %c0_i32_1 = arith.constant 0 : i32
    return %c0_i32, %c0_i32_0 : i32, i32
  }
  func.func @transform_3(%arg0: i32) -> (i32, i32) {
    %c0_i32 = arith.constant 0 : i32
    %c0_i32_0 = arith.constant 0 : i32
    %c0_i32_1 = arith.constant 0 : i32
    return %c0_i32, %c0_i32_0 : i32, i32
  }
  func.func @transform_4(%arg0: i32) -> (i32, i32) {
    %c0_i32 = arith.constant 0 : i32
    %c0_i32_0 = arith.constant 0 : i32
    %c0_i32_1 = arith.constant 0 : i32
    return %c0_i32, %c0_i32_0 : i32, i32
  }
  func.func @transform_5(%arg0: i32) -> (i32, i32) {
    %c0_i32 = arith.constant 0 : i32
    %c0_i32_0 = arith.constant 0 : i32
    %c0_i32_1 = arith.constant 0 : i32
    return %c0_i32, %c0_i32_0 : i32, i32
  }
}

module attributes {stable_mosaic.version = 11 : i64} {
  func.func @_adaln_mlp_kernel(%arg0: i32, %arg1: memref<2x256xf32, #tpu.memory_space<vmem>>, %arg2: memref<256x256xbf16, #tpu.memory_space<vmem>>, %arg3: memref<1x256xf32, #tpu.memory_space<vmem>>, %arg4: memref<256x1536xbf16, #tpu.memory_space<vmem>>, %arg5: memref<1x1536xf32, #tpu.memory_space<vmem>>, %arg6: memref<2x1536xf32, #tpu.memory_space<vmem>>) attributes {dimension_semantics = [#tpu.dimension_semantics<arbitrary>], iteration_bounds = array<i64: 1>, scalar_prefetch = 0 : i64, scratch_operands = 0 : i64, tpu.core_type = #tpu.core_type<tc>, window_params = [{pipeline_mode = #tpu.pipeline_mode<synchronous>, transform_indices = @transform_0, window_bounds = array<i64: 2, 256>}, {pipeline_mode = #tpu.pipeline_mode<synchronous>, transform_indices = @transform_1, window_bounds = array<i64: 256, 256>}, {pipeline_mode = #tpu.pipeline_mode<synchronous>, transform_indices = @transform_2, window_bounds = array<i64: 1, 256>}, {pipeline_mode = #tpu.pipeline_mode<synchronous>, transform_indices = @transform_3, window_bounds = array<i64: 256, 1536>}, {pipeline_mode = #tpu.pipeline_mode<synchronous>, transform_indices = @transform_4, window_bounds = array<i64: 1, 1536>}, {pipeline_mode = #tpu.pipeline_mode<synchronous>, transform_indices = @transform_5, window_bounds = array<i64: 2, 1536>}]} {
    %c0 = arith.constant 0 : index
    %c0_0 = arith.constant 0 : index
    %0 = vector.load %arg1[%c0, %c0_0] : memref<2x256xf32, #tpu.memory_space<vmem>>, vector<2x256xf32>
    %1 = arith.truncf %0 : vector<2x256xf32> to vector<2x256xbf16>
    %c0_1 = arith.constant 0 : index
    %c0_2 = arith.constant 0 : index
    %2 = vector.load %arg2[%c0_1, %c0_2] : memref<256x256xbf16, #tpu.memory_space<vmem>>, vector<256x256xbf16>
    %cst = arith.constant dense<0.000000e+00> : vector<2x256xf32>
    %3 = tpu.matmul %1, %2, %cst {dimension_numbers = #tpu.dot_dimension_numbers<[1], [0], [0], [1], [0, 0, 1, 1], [], []>} : vector<2x256xbf16>, vector<256x256xbf16>, vector<2x256xf32> -> vector<2x256xf32>
    %c0_3 = arith.constant 0 : index
    %c0_4 = arith.constant 0 : index
    %4 = vector.load %arg3[%c0_3, %c0_4] : memref<1x256xf32, #tpu.memory_space<vmem>>, vector<1x256xf32>
    %5 = vector.broadcast %4 : vector<1x256xf32> to vector<2x256xf32>
    %6 = arith.addf %3, %5 : vector<2x256xf32>
    %7 = arith.negf %6 : vector<2x256xf32>
    %8 = math.exp %7 : vector<2x256xf32>
    %cst_5 = arith.constant 1.000000e+00 : f32
    %9 = vector.broadcast %cst_5 : f32 to vector<2x256xf32>
    %10 = arith.addf %9, %8 : vector<2x256xf32>
    %11 = arith.divf %9, %10 : vector<2x256xf32>
    %12 = arith.mulf %6, %11 : vector<2x256xf32>
    %13 = arith.truncf %12 : vector<2x256xf32> to vector<2x256xbf16>
    %c0_6 = arith.constant 0 : index
    %c0_7 = arith.constant 0 : index
    %14 = vector.load %arg4[%c0_6, %c0_7] : memref<256x1536xbf16, #tpu.memory_space<vmem>>, vector<256x1536xbf16>
    %cst_8 = arith.constant dense<0.000000e+00> : vector<2x1536xf32>
    %15 = tpu.matmul %13, %14, %cst_8 {dimension_numbers = #tpu.dot_dimension_numbers<[1], [0], [0], [1], [0, 0, 1, 1], [], []>} : vector<2x256xbf16>, vector<256x1536xbf16>, vector<2x1536xf32> -> vector<2x1536xf32>
    %c0_9 = arith.constant 0 : index
    %c0_10 = arith.constant 0 : index
    %16 = vector.load %arg5[%c0_9, %c0_10] : memref<1x1536xf32, #tpu.memory_space<vmem>>, vector<1x1536xf32>
    %17 = vector.broadcast %16 : vector<1x1536xf32> to vector<2x1536xf32>
    %18 = arith.addf %15, %17 : vector<2x1536xf32>
    %c0_11 = arith.constant 0 : index
    %c0_12 = arith.constant 0 : index
    %19 = vector.load %arg6[%c0_11, %c0_12] : memref<2x1536xf32, #tpu.memory_space<vmem>>, vector<2x1536xf32>
    tpu.vector_store %arg6[%c0_11, %c0_12], %18 {strides = array<i32>} : memref<2x1536xf32, #tpu.memory_space<vmem>>, vector<2x1536xf32>,
    return
  }
  func.func @transform_0(%arg0: i32) -> (i32, i32) {
    %c0_i32 = arith.constant 0 : i32
    %c0_i32_0 = arith.constant 0 : i32
    %c0_i32_1 = arith.constant 0 : i32
    return %c0_i32, %c0_i32_0 : i32, i32
  }
  func.func @transform_1(%arg0: i32) -> (i32, i32) {
    %c0_i32 = arith.constant 0 : i32
    %c0_i32_0 = arith.constant 0 : i32
    %c0_i32_1 = arith.constant 0 : i32
    return %c0_i32, %c0_i32_0 : i32, i32
  }
  func.func @transform_2(%arg0: i32) -> (i32, i32) {
    %c0_i32 = arith.constant 0 : i32
    %c0_i32_0 = arith.constant 0 : i32
    %c0_i32_1 = arith.constant 0 : i32
    return %c0_i32, %c0_i32_0 : i32, i32
  }
  func.func @transform_3(%arg0: i32) -> (i32, i32) {
    %c0_i32 = arith.constant 0 : i32
    %c0_i32_0 = arith.constant 0 : i32
    %c0_i32_1 = arith.constant 0 : i32
    return %c0_i32, %c0_i32_0 : i32, i32
  }
  func.func @transform_4(%arg0: i32) -> (i32, i32) {
    %c0_i32 = arith.constant 0 : i32
    %c0_i32_0 = arith.constant 0 : i32
    %c0_i32_1 = arith.constant 0 : i32
    return %c0_i32, %c0_i32_0 : i32, i32
  }
  func.func @transform_5(%arg0: i32) -> (i32, i32) {
    %c0_i32 = arith.constant 0 : i32
    %c0_i32_0 = arith.constant 0 : i32
    %c0_i32_1 = arith.constant 0 : i32
    return %c0_i32, %c0_i32_0 : i32, i32
  }
}

</mosaic_0001>

<llo_original>
// kernel: tpu_custom_call.1
$region0: #{tpu_custom_call.1}
  #allocation0 [shape = 'u32[]', space=smem, size = 0x4, offset = 0x4, fixed_abs, tag = 'smem constant byte address 0x4 - core index']
  #allocation1 [shape = 'u32[144,128]{1,0:T(1,128)}', space=vmem, size = 0x12000, scoped, tag = 'internal scratch']
  %s0 = inlined_call_operand.hbm [shape: f32[2,256], index: 0, kind: input, shape index: {}]
  %s1 = inlined_call_operand.hbm [shape: bf16[256,256], index: 1, kind: input, shape index: {}]
  %s2 = inlined_call_operand.vmem [shape: f32[1,256], index: 2, kind: input, shape index: {}]
  %s3 = inlined_call_operand.hbm [shape: bf16[256,1536], index: 3, kind: input, shape index: {}]
  %s4 = inlined_call_operand.vmem [shape: f32[1,1536], index: 4, kind: input, shape index: {}]
  %s5 = inlined_call_operand.hbm [shape: f32[2,1536], index: 5, kind: output, shape index: {}]
  %s6 = sld [smem:[#allocation0]]
  $region42: #{tpu_custom_call.1} parent=0
    _
  %s8 = ssub.s32 1, %s6
  %s9 = scalar_select 0, %s8, %s6
  $region1: #{tpu_custom_call.1} parent=0
    #allocation2 [shape = 'u8[2048]{0}', space=vmem, size = 0x800, scoped, tag = 'input window, operand 0, single buffered']
    #allocation3 [shape = 's32[1]{0}', space=sflag, size = 0x4, scoped, tag = 'scoped memory for tpu_custom_call.1']
    #allocation4 [shape = 's32[1]{0}', space=sflag, size = 0x4, scoped, tag = 'scoped memory for tpu_custom_call.1']
    #allocation5 [shape = 'u8[131072]{0}', space=vmem, size = 0x20000, scoped, tag = 'input window, operand 1, single buffered']
    #allocation6 [shape = 's32[1]{0}', space=sflag, size = 0x4, scoped, tag = 'scoped memory for tpu_custom_call.1']
    #allocation7 [shape = 'u8[786432]{0}', space=vmem, size = 0xc0000, scoped, tag = 'input window, operand 3, single buffered']
    #allocation8 [shape = 'u8[12288]{0}', space=vmem, size = 0x3000, scoped, tag = 'output window, operand 0, single buffered']
    %10 = vsyncpa [#allocation3], 0
    %11 = vsyncpa [#allocation6], 0
    %12 = vsyncpa [#allocation4], 0
    // Predicated region
    $region2: #{tpu_custom_call.1} parent=1 // pred_check
      _
    $region3: #{tpu_custom_call.1} parent=1 // pred_check_branch
      %14 = sbr.rel (0) target = $region5
    $region4: #{tpu_custom_call.1} parent=1 // pred_region
      %s16 = ssub.s32 64, 64
      %17 = vsyncadd [#allocation3], %s16
      %s19 = sshll.u32 [#allocation2], 4
      %s20 = int_to_ptr.vmem [resolvable:$true] %s19
      %22 = dma.hbm_to_vmem [thread:$0]  %s0, 64, %s20, [#allocation3]
    $region5: #{tpu_custom_call.1} parent=1 // pred_fallthru
      _
    // Predicated region
    $region6: #{tpu_custom_call.1} parent=1 // pred_check
      _
    $region7: #{tpu_custom_call.1} parent=1 // pred_check_branch
      %24 = sbr.rel (0) target = $region9
    $region8: #{tpu_custom_call.1} parent=1 // pred_region
      %s26 = ssub.s32 4096, 4096
      %27 = vsyncadd [#allocation6], %s26
      %s28 = sshll.u32 [#allocation5], 4
      %s29 = int_to_ptr.vmem [resolvable:$true] %s28
      %34 = dma.hbm_to_vmem [thread:$0]  %s1, 4096, %s29, [#allocation6], 128, 128, 8
    $region9: #{tpu_custom_call.1} parent=1 // pred_fallthru
      _
    // Predicated region
    $region10: #{tpu_custom_call.1} parent=1 // pred_check
      _
    $region11: #{tpu_custom_call.1} parent=1 // pred_check_branch
      %36 = sbr.rel (0) target = $region13
    $region12: #{tpu_custom_call.1} parent=1 // pred_region
      _
    $region13: #{tpu_custom_call.1} parent=1 // pred_fallthru
      _
    // Predicated region
    $region14: #{tpu_custom_call.1} parent=1 // pred_check
      _
    $region15: #{tpu_custom_call.1} parent=1 // pred_check_branch
      %38 = sbr.rel (0) target = $region17
    $region16: #{tpu_custom_call.1} parent=1 // pred_region
      %s40 = ssub.s32 24576, 24576
      %41 = vsyncadd [#allocation6], %s40
      %s42 = sshll.u32 [#allocation7], 4
      %s43 = int_to_ptr.vmem [resolvable:$true] %s42
      %48 = dma.hbm_to_vmem [thread:$0]  %s3, 24576, %s43, [#allocation6], 768, 768, 48
    $region17: #{tpu_custom_call.1} parent=1 // pred_fallthru
      _
    // Predicated region
    $region18: #{tpu_custom_call.1} parent=1 // pred_check
      _
    $region19: #{tpu_custom_call.1} parent=1 // pred_check_branch
      %50 = sbr.rel (0) target = $region21
    $region20: #{tpu_custom_call.1} parent=1 // pred_region
      _
    $region21: #{tpu_custom_call.1} parent=1 // pred_fallthru
      _
    // Predicated region
    $region22: #{tpu_custom_call.1} parent=1 // pred_check
      _
    $region23: #{tpu_custom_call.1} parent=1 // pred_check_branch
      %52 = sbr.rel (0) target = $region25
    $region24: #{tpu_custom_call.1} parent=1 // pred_region
      %53 = dma.done [#allocation3], 64
    $region25: #{tpu_custom_call.1} parent=1 // pred_fallthru
      _
    // Predicated region
    $region26: #{tpu_custom_call.1} parent=1 // pred_check
      _
    $region27: #{tpu_custom_call.1} parent=1 // pred_check_branch
      %55 = sbr.rel (0) target = $region29
    $region28: #{tpu_custom_call.1} parent=1 // pred_region
      %56 = dma.done [#allocation6], 4096
    $region29: #{tpu_custom_call.1} parent=1 // pred_fallthru
      _
    // Predicated region
    $region30: #{tpu_custom_call.1} parent=1 // pred_check
      _
    $region31: #{tpu_custom_call.1} parent=1 // pred_check_branch
      %58 = sbr.rel (0) target = $region33
    $region32: #{tpu_custom_call.1} parent=1 // pred_region
      %59 = dma.done [#allocation6], 24576
    $region33: #{tpu_custom_call.1} parent=1 // pred_fallthru
      _
    %v60 = vld [vmem:[#allocation2] sm:$0xf]
    %v63 = vunpack.c.l.s4 1983009808
    %v64 = vunpack.c.0.s8 %v63
    %v65 = vlaneseq
    %v66 = vshrl.u32 %v65, 7
    %v67 = vsub.s32 %v64, %v66
    %v68 = vrot.slane %v60, %v67
    %v69 = vcombine.high %v68, %v68
    %v72 = vpack.c.bf16 %v68, %v68
    %v73 = vpack.c.bf16 %v69, %v69
    %v74 = vld [vmem:[#allocation5] sm:$0xff]
    %v75 = vld [vmem:[#allocation5 + $0x8] sm:$0xff]
    %v76 = vld [vmem:[#allocation5 + $0x10] sm:$0xff]
    %v77 = vld [vmem:[#allocation5 + $0x18] sm:$0xff]
    %v78 = vld [vmem:[#allocation5 + $0x20] sm:$0xff]
    %v79 = vld [vmem:[#allocation5 + $0x28] sm:$0xff]
    %v80 = vld [vmem:[#allocation5 + $0x30] sm:$0xff]
    %v81 = vld [vmem:[#allocation5 + $0x38] sm:$0xff]
    %v82 = vld [vmem:[#allocation5 + $0x40] sm:$0xff]
    %v83 = vld [vmem:[#allocation5 + $0x48] sm:$0xff]
    %v84 = vld [vmem:[#allocation5 + $0x50] sm:$0xff]
    %v85 = vld [vmem:[#allocation5 + $0x58] sm:$0xff]
    %v86 = vld [vmem:[#allocation5 + $0x60] sm:$0xff]
    %v87 = vld [vmem:[#allocation5 + $0x68] sm:$0xff]
    %v88 = vld [vmem:[#allocation5 + $0x70] sm:$0xff]
    %v89 = vld [vmem:[#allocation5 + $0x78] sm:$0xff]
    %v90 = vld [vmem:[#allocation5 + $0x80] sm:$0xff]
    %v91 = vld [vmem:[#allocation5 + $0x88] sm:$0xff]
    %v92 = vld [vmem:[#allocation5 + $0x90] sm:$0xff]
    %v93 = vld [vmem:[#allocation5 + $0x98] sm:$0xff]
    %v94 = vld [vmem:[#allocation5 + $0xa0] sm:$0xff]
    %v95 = vld [vmem:[#allocation5 + $0xa8] sm:$0xff]
    %v96 = vld [vmem:[#allocation5 + $0xb0] sm:$0xff]
    %v97 = vld [vmem:[#allocation5 + $0xb8] sm:$0xff]
    %v98 = vld [vmem:[#allocation5 + $0xc0] sm:$0xff]
    %v99 = vld [vmem:[#allocation5 + $0xc8] sm:$0xff]
    %v100 = vld [vmem:[#allocation5 + $0xd0] sm:$0xff]
    %v101 = vld [vmem:[#allocation5 + $0xd8] sm:$0xff]
    %v102 = vld [vmem:[#allocation5 + $0xe0] sm:$0xff]
    %v103 = vld [vmem:[#allocation5 + $0xe8] sm:$0xff]
    %v104 = vld [vmem:[#allocation5 + $0xf0] sm:$0xff]
    %v105 = vld [vmem:[#allocation5 + $0xf8] sm:$0xff]
    %v106 = vld [vmem:[%s2] sm:$0x3]
    %v108 = vlaneseq
    %v109 = vshrl.u32 %v108, 7
    %v110 = vsub.s32 0, %v109
    %v111 = vrot.slane %v106, %v110
    %v112 = vlaneseq
    %v113 = vshrl.u32 %v112, 7
    %v114 = vsub.s32 1, %v113
    %v115 = vrot.slane %v106, %v114
    %v150 = vunpack.c.l.b16 %v74
    %v151 = vunpack.c.h.b16 %v74
    %v152 = vunpack.c.l.b16 %v75
    %v153 = vunpack.c.h.b16 %v75
    %v154 = vunpack.c.l.b16 %v76
    %v155 = vunpack.c.h.b16 %v76
    %v156 = vunpack.c.l.b16 %v77
    %v157 = vunpack.c.h.b16 %v77
    %v158 = vunpack.c.l.b16 %v78
    %v159 = vunpack.c.h.b16 %v78
    %v160 = vunpack.c.l.b16 %v79
    %v161 = vunpack.c.h.b16 %v79
    %v162 = vunpack.c.l.b16 %v80
    %v163 = vunpack.c.h.b16 %v80
    %v164 = vunpack.c.l.b16 %v81
    %v165 = vunpack.c.h.b16 %v81
    %v166 = vunpack.c.l.b16 %v82
    %v167 = vunpack.c.h.b16 %v82
    %v168 = vunpack.c.l.b16 %v83
    %v169 = vunpack.c.h.b16 %v83
    %v170 = vunpack.c.l.b16 %v84
    %v171 = vunpack.c.h.b16 %v84
    %v172 = vunpack.c.l.b16 %v85
    %v173 = vunpack.c.h.b16 %v85
    %v174 = vunpack.c.l.b16 %v86
    %v175 = vunpack.c.h.b16 %v86
    %v176 = vunpack.c.l.b16 %v87
    %v177 = vunpack.c.h.b16 %v87
    %v178 = vunpack.c.l.b16 %v88
    %v179 = vunpack.c.h.b16 %v88
    %v180 = vunpack.c.l.b16 %v89
    %v181 = vunpack.c.h.b16 %v89
    %v182 = vunpack.c.l.b16 %v90
    %v183 = vunpack.c.h.b16 %v90
    %v184 = vunpack.c.l.b16 %v91
    %v185 = vunpack.c.h.b16 %v91
    %v186 = vunpack.c.l.b16 %v92
    %v187 = vunpack.c.h.b16 %v92
    %v188 = vunpack.c.l.b16 %v93
    %v189 = vunpack.c.h.b16 %v93
    %v190 = vunpack.c.l.b16 %v94
    %v191 = vunpack.c.h.b16 %v94
    %v192 = vunpack.c.l.b16 %v95
    %v193 = vunpack.c.h.b16 %v95
    %v194 = vunpack.c.l.b16 %v96
    %v195 = vunpack.c.h.b16 %v96
    %v196 = vunpack.c.l.b16 %v97
    %v197 = vunpack.c.h.b16 %v97
    %v198 = vunpack.c.l.b16 %v98
    %v199 = vunpack.c.h.b16 %v98
    %v200 = vunpack.c.l.b16 %v99
    %v201 = vunpack.c.h.b16 %v99
    %v202 = vunpack.c.l.b16 %v100
    %v203 = vunpack.c.h.b16 %v100
    %v204 = vunpack.c.l.b16 %v101
    %v205 = vunpack.c.h.b16 %v101
    %v206 = vunpack.c.l.b16 %v102
    %v207 = vunpack.c.h.b16 %v102
    %v208 = vunpack.c.l.b16 %v103
    %v209 = vunpack.c.h.b16 %v103
    %v210 = vunpack.c.l.b16 %v104
    %v211 = vunpack.c.h.b16 %v104
    %v212 = vunpack.c.l.b16 %v105
    %v213 = vunpack.c.h.b16 %v105
    %v214 = vpack.c.b16 %v152, %v150
    %v215 = vpack.c.b16 %v153, %v151
    %v216 = vpack.c.b16 %v156, %v154
    %v217 = vpack.c.b16 %v157, %v155
    %v218 = vpack.c.b16 %v160, %v158
    %v219 = vpack.c.b16 %v161, %v159
    %v220 = vpack.c.b16 %v164, %v162
    %v221 = vpack.c.b16 %v165, %v163
    %v222 = vpack.c.b16 %v168, %v166
    %v223 = vpack.c.b16 %v169, %v167
    %v224 = vpack.c.b16 %v172, %v170
    %v225 = vpack.c.b16 %v173, %v171
    %v226 = vpack.c.b16 %v176, %v174
    %v227 = vpack.c.b16 %v177, %v175
    %v228 = vpack.c.b16 %v180, %v178
    %v229 = vpack.c.b16 %v181, %v179
    %v230 = vpack.c.b16 %v184, %v182
    %v231 = vpack.c.b16 %v185, %v183
    %v232 = vpack.c.b16 %v188, %v186
    %v233 = vpack.c.b16 %v189, %v187
    %v234 = vpack.c.b16 %v192, %v190
    %v235 = vpack.c.b16 %v193, %v191
    %v236 = vpack.c.b16 %v196, %v194
    %v237 = vpack.c.b16 %v197, %v195
    %v238 = vpack.c.b16 %v200, %v198
    %v239 = vpack.c.b16 %v201, %v199
    %v240 = vpack.c.b16 %v204, %v202
    %v241 = vpack.c.b16 %v205, %v203
    %v242 = vpack.c.b16 %v208, %v206
    %v243 = vpack.c.b16 %v209, %v207
    %v244 = vpack.c.b16 %v212, %v210
    %v245 = vpack.c.b16 %v213, %v211
    %278 = vmatprep.subr.bf16.mxu0 %v215
    %279 = vmatpush1.bf16.msra.mxu0 %v214
    %280 = vmatprep.subr.bf16.mxu0 %v217
    %281 = vmatpush1.bf16.msra.mxu0 %v216
    %282 = vmatprep.subr.bf16.mxu0 %v219
    %283 = vmatpush1.bf16.msra.mxu0 %v218
    %284 = vmatprep.subr.bf16.mxu0 %v221
    %285 = vmatpush1.bf16.msra.mxu0 %v220
    %286 = vmatprep.subr.bf16.mxu0 %v223
    %287 = vmatpush1.bf16.msra.mxu0 %v222
    %288 = vmatprep.subr.bf16.mxu0 %v225
    %289 = vmatpush1.bf16.msra.mxu0 %v224
    %290 = vmatprep.subr.bf16.mxu0 %v227
    %291 = vmatpush1.bf16.msra.mxu0 %v226
    %292 = vmatprep.subr.bf16.mxu0 %v229
    %293 = vmatpush1.bf16.msra.mxu0 %v228
    %294 = vmatprep.subr.bf16.mxu0 %v231
    %295 = vmatpush1.bf16.msra.mxu0 %v230
    %296 = vmatprep.subr.bf16.mxu0 %v233
    %297 = vmatpush1.bf16.msra.mxu0 %v232
    %298 = vmatprep.subr.bf16.mxu0 %v235
    %299 = vmatpush1.bf16.msra.mxu0 %v234
    %300 = vmatprep.subr.bf16.mxu0 %v237
    %301 = vmatpush1.bf16.msra.mxu0 %v236
    %302 = vmatprep.subr.bf16.mxu0 %v239
    %303 = vmatpush1.bf16.msra.mxu0 %v238
    %304 = vmatprep.subr.bf16.mxu0 %v241
    %305 = vmatpush1.bf16.msra.mxu0 %v240
    %306 = vmatprep.subr.bf16.mxu0 %v243
    %307 = vmatpush1.bf16.msra.mxu0 %v242
    %308 = vmatprep.subr.bf16.mxu0 %v245
    %309 = vmatpush1.bf16.msra.mxu0 %v244
    %310 = vmatprep.mubr.bf16.mxu0 %v73
    %311 = vmatmul.mubr.bf16.gmra.mrb[0].mxu0 %v72
    %v312 = vpop.f32.mrb[0].mxu0
    %v313 = vadd.f32 %v111, %v312
    %v314 = vpop.f32.mrb[0].mxu0
    %v315 = vadd.f32 %v115, %v314
    %v316 = vpop.f32.mrb[0].mxu0
    %v317 = vpop.f32.mrb[0].mxu0
    %318 = vdwg.mxu0
    %v319 = vxor.u32 %v313, 2147483648
    %v320 = vxor.u32 %v315, 2147483648
    %v321 = vmul.f32 %v319, 1.442695
    %v322 = vpow.pop %v321
    %v323 = vmul.f32 %v320, 1.442695
    %v324 = vpow.pop %v323
    %v325 = vadd.f32 %v322, 1.0
    %v326 = vadd.f32 %v324, 1.0
    %v327 = vrcp.pop %v325
    %v328 = vmul.f32 1.0, %v327
    %v329 = vrcp.pop %v326
    %v330 = vmul.f32 1.0, %v329
    %v331 = vmul.f32 %v313, %v328
    %v332 = vmul.f32 %v315, %v330
    %v333 = vpack.c.bf16 %v331, %v331
    %v334 = vpack.c.bf16 %v332, %v332
    %v335 = vld [vmem:[#allocation7] sm:$0xff]
    %v336 = vld [vmem:[#allocation7 + $0x8] sm:$0xff]
    %v337 = vld [vmem:[#allocation7 + $0x10] sm:$0xff]
    %v338 = vld [vmem:[#allocation7 + $0x18] sm:$0xff]
    %v339 = vld [vmem:[#allocation7 + $0x20] sm:$0xff]
    %v340 = vld [vmem:[#allocation7 + $0x28] sm:$0xff]
    %v341 = vld [vmem:[#allocation7 + $0x30] sm:$0xff]
    %v342 = vld [vmem:[#allocation7 + $0x38] sm:$0xff]
    %v343 = vld [vmem:[#allocation7 + $0x40] sm:$0xff]
    %v344 = vld [vmem:[#allocation7 + $0x48] sm:$0xff]
    %v345 = vld [vmem:[#allocation7 + $0x50] sm:$0xff]
    %v346 = vld [vmem:[#allocation7 + $0x58] sm:$0xff]
    %v347 = vld [vmem:[#allocation7 + $0x60] sm:$0xff]
    %v348 = vld [vmem:[#allocation7 + $0x68] sm:$0xff]
    %v349 = vld [vmem:[#allocation7 + $0x70] sm:$0xff]
    %v350 = vld [vmem:[#allocation7 + $0x78] sm:$0xff]
    %v351 = vld [vmem:[#allocation7 + $0x80] sm:$0xff]
    %v352 = vld [vmem:[#allocation7 + $0x88] sm:$0xff]
    %v353 = vld [vmem:[#allocation7 + $0x90] sm:$0xff]
    %v354 = vld [vmem:[#allocation7 + $0x98] sm:$0xff]
    %v355 = vld [vmem:[#allocation7 + $0xa0] sm:$0xff]
    %v356 = vld [vmem:[#allocation7 + $0xa8] sm:$0xff]
    %v357 = vld [vmem:[#allocation7 + $0xb0] sm:$0xff]
    %v358 = vld [vmem:[#allocation7 + $0xb8] sm:$0xff]
    %v359 = vld [vmem:[#allocation7 + $0xc0] sm:$0xff]
    %v360 = vld [vmem:[#allocation7 + $0xc8] sm:$0xff]
    %v361 = vld [vmem:[#allocation7 + $0xd0] sm:$0xff]
    %v362 = vld [vmem:[#allocation7 + $0xd8] sm:$0xff]
    %v363 = vld [vmem:[#allocation7 + $0xe0] sm:$0xff]
    %v364 = vld [vmem:[#allocation7 + $0xe8] sm:$0xff]
    %v365 = vld [vmem:[#allocation7 + $0xf0] sm:$0xff]
    %v366 = vld [vmem:[#allocation7 + $0xf8] sm:$0xff]
    %v367 = vld [vmem:[#allocation7 + $0x100] sm:$0xff]
    %v368 = vld [vmem:[#allocation7 + $0x108] sm:$0xff]
    %v369 = vld [vmem:[#allocation7 + $0x110] sm:$0xff]
    %v370 = vld [vmem:[#allocation7 + $0x118] sm:$0xff]
    %v371 = vld [vmem:[#allocation7 + $0x120] sm:$0xff]
    %v372 = vld [vmem:[#allocation7 + $0x128] sm:$0xff]
    %v373 = vld [vmem:[#allocation7 + $0x130] sm:$0xff]
    %v374 = vld [vmem:[#allocation7 + $0x138] sm:$0xff]
    %v375 = vld [vmem:[#allocation7 + $0x140] sm:$0xff]
    %v376 = vld [vmem:[#allocation7 + $0x148] sm:$0xff]
    %v377 = vld [vmem:[#allocation7 + $0x150] sm:$0xff]
    %v378 = vld [vmem:[#allocation7 + $0x158] sm:$0xff]
    %v379 = vld [vmem:[#allocation7 + $0x160] sm:$0xff]
    %v380 = vld [vmem:[#allocation7 + $0x168] sm:$0xff]
    %v381 = vld [vmem:[#allocation7 + $0x170] sm:$0xff]
    %v382 = vld [vmem:[#allocation7 + $0x178] sm:$0xff]
    %v383 = vld [vmem:[#allocation7 + $0x180] sm:$0xff]
    %v384 = vld [vmem:[#allocation7 + $0x188] sm:$0xff]
    %v385 = vld [vmem:[#allocation7 + $0x190] sm:$0xff]
    %v386 = vld [vmem:[#allocation7 + $0x198] sm:$0xff]
    %v387 = vld [vmem:[#allocation7 + $0x1a0] sm:$0xff]
    %v388 = vld [vmem:[#allocation7 + $0x1a8] sm:$0xff]
    %v389 = vld [vmem:[#allocation7 + $0x1b0] sm:$0xff]
    %v390 = vld [vmem:[#allocation7 + $0x1b8] sm:$0xff]
    %v391 = vld [vmem:[#allocation7 + $0x1c0] sm:$0xff]
    %v392 = vld [vmem:[#allocation7 + $0x1c8] sm:$0xff]
    %v393 = vld [vmem:[#allocation7 + $0x1d0] sm:$0xff]
    %v394 = vld [vmem:[#allocation7 + $0x1d8] sm:$0xff]
    %v395 = vld [vmem:[#allocation7 + $0x1e0] sm:$0xff]
    %v396 = vld [vmem:[#allocation7 + $0x1e8] sm:$0xff]
    %v397 = vld [vmem:[#allocation7 + $0x1f0] sm:$0xff]
    %v398 = vld [vmem:[#allocation7 + $0x1f8] sm:$0xff]
    %v399 = vld [vmem:[#allocation7 + $0x200] sm:$0xff]
    %v400 = vld [vmem:[#allocation7 + $0x208] sm:$0xff]
    %v401 = vld [vmem:[#allocation7 + $0x210] sm:$0xff]
    %v402 = vld [vmem:[#allocation7 + $0x218] sm:$0xff]
    %v403 = vld [vmem:[#allocation7 + $0x220] sm:$0xff]
    %v404 = vld [vmem:[#allocation7 + $0x228] sm:$0xff]
    %v405 = vld [vmem:[#allocation7 + $0x230] sm:$0xff]
    %v406 = vld [vmem:[#allocation7 + $0x238] sm:$0xff]
    %v407 = vld [vmem:[#allocation7 + $0x240] sm:$0xff]
    %v408 = vld [vmem:[#allocation7 + $0x248] sm:$0xff]
    %v409 = vld [vmem:[#allocation7 + $0x250] sm:$0xff]
    %v410 = vld [vmem:[#allocation7 + $0x258] sm:$0xff]
    %v411 = vld [vmem:[#allocation7 + $0x260] sm:$0xff]
    %v412 = vld [vmem:[#allocation7 + $0x268] sm:$0xff]
    %v413 = vld [vmem:[#allocation7 + $0x270] sm:$0xff]
    %v414 = vld [vmem:[#allocation7 + $0x278] sm:$0xff]
    %v415 = vld [vmem:[#allocation7 + $0x280] sm:$0xff]
    %v416 = vld [vmem:[#allocation7 + $0x288] sm:$0xff]
    %v417 = vld [vmem:[#allocation7 + $0x290] sm:$0xff]
    %v418 = vld [vmem:[#allocation7 + $0x298] sm:$0xff]
    %v419 = vld [vmem:[#allocation7 + $0x2a0] sm:$0xff]
    %v420 = vld [vmem:[#allocation7 + $0x2a8] sm:$0xff]
    %v421 = vld [vmem:[#allocation7 + $0x2b0] sm:$0xff]
    %v422 = vld [vmem:[#allocation7 + $0x2b8] sm:$0xff]
    %v423 = vld [vmem:[#allocation7 + $0x2c0] sm:$0xff]
    %v424 = vld [vmem:[#allocation7 + $0x2c8] sm:$0xff]
    %v425 = vld [vmem:[#allocation7 + $0x2d0] sm:$0xff]
    %v426 = vld [vmem:[#allocation7 + $0x2d8] sm:$0xff]
    %v427 = vld [vmem:[#allocation7 + $0x2e0] sm:$0xff]
    %v428 = vld [vmem:[#allocation7 + $0x2e8] sm:$0xff]
    %v429 = vld [vmem:[#allocation7 + $0x2f0] sm:$0xff]
    %v430 = vld [vmem:[#allocation7 + $0x2f8] sm:$0xff]
    %v431 = vld [vmem:[#allocation7 + $0x300] sm:$0xff]
    %v432 = vld [vmem:[#allocation7 + $0x308] sm:$0xff]
    %v433 = vld [vmem:[#allocation7 + $0x310] sm:$0xff]
    %v434 = vld [vmem:[#allocation7 + $0x318] sm:$0xff]
    %v435 = vld [vmem:[#allocation7 + $0x320] sm:$0xff]
    %v436 = vld [vmem:[#allocation7 + $0x328] sm:$0xff]
    %v437 = vld [vmem:[#allocation7 + $0x330] sm:$0xff]
    %v438 = vld [vmem:[#allocation7 + $0x338] sm:$0xff]
    %v439 = vld [vmem:[#allocation7 + $0x340] sm:$0xff]
    %v440 = vld [vmem:[#allocation7 + $0x348] sm:$0xff]
    %v441 = vld [vmem:[#allocation7 + $0x350] sm:$0xff]
    %v442 = vld [vmem:[#allocation7 + $0x358] sm:$0xff]
    %v443 = vld [vmem:[#allocation7 + $0x360] sm:$0xff]
    %v444 = vld [vmem:[#allocation7 + $0x368] sm:$0xff]
    %v445 = vld [vmem:[#allocation7 + $0x370] sm:$0xff]
    %v446 = vld [vmem:[#allocation7 + $0x378] sm:$0xff]
    %v447 = vld [vmem:[#allocation7 + $0x380] sm:$0xff]
    %v448 = vld [vmem:[#allocation7 + $0x388] sm:$0xff]
    %v449 = vld [vmem:[#allocation7 + $0x390] sm:$0xff]
    %v450 = vld [vmem:[#allocation7 + $0x398] sm:$0xff]
    %v451 = vld [vmem:[#allocation7 + $0x3a0] sm:$0xff]
    %v452 = vld [vmem:[#allocation7 + $0x3a8] sm:$0xff]
    %v453 = vld [vmem:[#allocation7 + $0x3b0] sm:$0xff]
    %v454 = vld [vmem:[#allocation7 + $0x3b8] sm:$0xff]
    %v455 = vld [vmem:[#allocation7 + $0x3c0] sm:$0xff]
    %v456 = vld [vmem:[#allocation7 + $0x3c8] sm:$0xff]
    %v457 = vld [vmem:[#allocation7 + $0x3d0] sm:$0xff]
    %v458 = vld [vmem:[#allocation7 + $0x3d8] sm:$0xff]
    %v459 = vld [vmem:[#allocation7 + $0x3e0] sm:$0xff]
    %v460 = vld [vmem:[#allocation7 + $0x3e8] sm:$0xff]
    %v461 = vld [vmem:[#allocation7 + $0x3f0] sm:$0xff]
    %v462 = vld [vmem:[#allocation7 + $0x3f8] sm:$0xff]
    %v463 = vld [vmem:[#allocation7 + $0x400] sm:$0xff]
    %v464 = vld [vmem:[#allocation7 + $0x408] sm:$0xff]
    %v465 = vld [vmem:[#allocation7 + $0x410] sm:$0xff]
    %v466 = vld [vmem:[#allocation7 + $0x418] sm:$0xff]
    %v467 = vld [vmem:[#allocation7 + $0x420] sm:$0xff]
    %v468 = vld [vmem:[#allocation7 + $0x428] sm:$0xff]
    %v469 = vld [vmem:[#allocation7 + $0x430] sm:$0xff]
    %v470 = vld [vmem:[#allocation7 + $0x438] sm:$0xff]
    %v471 = vld [vmem:[#allocation7 + $0x440] sm:$0xff]
    %v472 = vld [vmem:[#allocation7 + $0x448] sm:$0xff]
    %v473 = vld [vmem:[#allocation7 + $0x450] sm:$0xff]
    %v474 = vld [vmem:[#allocation7 + $0x458] sm:$0xff]
    %v475 = vld [vmem:[#allocation7 + $0x460] sm:$0xff]
    %v476 = vld [vmem:[#allocation7 + $0x468] sm:$0xff]
    %v477 = vld [vmem:[#allocation7 + $0x470] sm:$0xff]
    %v478 = vld [vmem:[#allocation7 + $0x478] sm:$0xff]
    %v479 = vld [vmem:[#allocation7 + $0x480] sm:$0xff]
    %v480 = vld [vmem:[#allocation7 + $0x488] sm:$0xff]
    %v481 = vld [vmem:[#allocation7 + $0x490] sm:$0xff]
    %v482 = vld [vmem:[#allocation7 + $0x498] sm:$0xff]
    %v483 = vld [vmem:[#allocation7 + $0x4a0] sm:$0xff]
    %v484 = vld [vmem:[#allocation7 + $0x4a8] sm:$0xff]
    %v485 = vld [vmem:[#allocation7 + $0x4b0] sm:$0xff]
    %v486 = vld [vmem:[#allocation7 + $0x4b8] sm:$0xff]
    %v487 = vld [vmem:[#allocation7 + $0x4c0] sm:$0xff]
    %v488 = vld [vmem:[#allocation7 + $0x4c8] sm:$0xff]
    %v489 = vld [vmem:[#allocation7 + $0x4d0] sm:$0xff]
    %v490 = vld [vmem:[#allocation7 + $0x4d8] sm:$0xff]
    %v491 = vld [vmem:[#allocation7 + $0x4e0] sm:$0xff]
    %v492 = vld [vmem:[#allocation7 + $0x4e8] sm:$0xff]
    %v493 = vld [vmem:[#allocation7 + $0x4f0] sm:$0xff]
    %v494 = vld [vmem:[#allocation7 + $0x4f8] sm:$0xff]
    %v495 = vld [vmem:[#allocation7 + $0x500] sm:$0xff]
    %v496 = vld [vmem:[#allocation7 + $0x508] sm:$0xff]
    %v497 = vld [vmem:[#allocation7 + $0x510] sm:$0xff]
    %v498 = vld [vmem:[#allocation7 + $0x518] sm:$0xff]
    %v499 = vld [vmem:[#allocation7 + $0x520] sm:$0xff]
    %v500 = vld [vmem:[#allocation7 + $0x528] sm:$0xff]
    %v501 = vld [vmem:[#allocation7 + $0x530] sm:$0xff]
    %v502 = vld [vmem:[#allocation7 + $0x538] sm:$0xff]
    %v503 = vld [vmem:[#allocation7 + $0x540] sm:$0xff]
    %v504 = vld [vmem:[#allocation7 + $0x548] sm:$0xff]
    %v505 = vld [vmem:[#allocation7 + $0x550] sm:$0xff]
    %v506 = vld [vmem:[#allocation7 + $0x558] sm:$0xff]
    %v507 = vld [vmem:[#allocation7 + $0x560] sm:$0xff]
    %v508 = vld [vmem:[#allocation7 + $0x568] sm:$0xff]
    %v509 = vld [vmem:[#allocation7 + $0x570] sm:$0xff]
    %v510 = vld [vmem:[#allocation7 + $0x578] sm:$0xff]
    %v511 = vld [vmem:[#allocation7 + $0x580] sm:$0xff]
    %v512 = vld [vmem:[#allocation7 + $0x588] sm:$0xff]
    %v513 = vld [vmem:[#allocation7 + $0x590] sm:$0xff]
    %v514 = vld [vmem:[#allocation7 + $0x598] sm:$0xff]
    %v515 = vld [vmem:[#allocation7 + $0x5a0] sm:$0xff]
    %v516 = vld [vmem:[#allocation7 + $0x5a8] sm:$0xff]
    %v517 = vld [vmem:[#allocation7 + $0x5b0] sm:$0xff]
    %v518 = vld [vmem:[#allocation7 + $0x5b8] sm:$0xff]
    %v519 = vld [vmem:[#allocation7 + $0x5c0] sm:$0xff]
    %v520 = vld [vmem:[#allocation7 + $0x5c8] sm:$0xff]
    %v521 = vld [vmem:[#allocation7 + $0x5d0] sm:$0xff]
    %v522 = vld [vmem:[#allocation7 + $0x5d8] sm:$0xff]
    %v523 = vld [vmem:[#allocation7 + $0x5e0] sm:$0xff]
    %v524 = vld [vmem:[#allocation7 + $0x5e8] sm:$0xff]
    %v525 = vld [vmem:[#allocation7 + $0x5f0] sm:$0xff]
    %v526 = vld [vmem:[#allocation7 + $0x5f8] sm:$0xff]
    %v527 = vld [vmem:[%s4] sm:$0xff]
    %v528 = vld [vmem:[%s4 + $0x8] sm:$0xf]
    %v531 = vlaneseq
    %v532 = vshrl.u32 %v531, 7
    %v533 = vsub.s32 0, %v532
    %v534 = vrot.slane %v527, %v533
    %v535 = vlaneseq
    %v536 = vshrl.u32 %v535, 7
    %v537 = vsub.s32 1, %v536
    %v538 = vrot.slane %v527, %v537
    %v539 = vlaneseq
    %v540 = vshrl.u32 %v539, 7
    %v541 = vsub.s32 2, %v540
    %v542 = vrot.slane %v527, %v541
    %v543 = vlaneseq
    %v544 = vshrl.u32 %v543, 7
    %v545 = vsub.s32 3, %v544
    %v546 = vrot.slane %v527, %v545
    %v547 = vlaneseq
    %v548 = vshrl.u32 %v547, 7
    %v549 = vsub.s32 4, %v548
    %v550 = vrot.slane %v527, %v549
    %v551 = vlaneseq
    %v552 = vshrl.u32 %v551, 7
    %v553 = vsub.s32 5, %v552
    %v554 = vrot.slane %v527, %v553
    %v555 = vlaneseq
    %v556 = vshrl.u32 %v555, 7
    %v557 = vsub.s32 6, %v556
    %v558 = vrot.slane %v527, %v557
    %v559 = vlaneseq
    %v560 = vshrl.u32 %v559, 7
    %v561 = vsub.s32 7, %v560
    %v562 = vrot.slane %v527, %v561
    %v563 = vlaneseq
    %v564 = vshrl.u32 %v563, 7
    %v565 = vsub.s32 0, %v564
    %v566 = vrot.slane %v528, %v565
    %v567 = vlaneseq
    %v568 = vshrl.u32 %v567, 7
    %v569 = vsub.s32 1, %v568
    %v570 = vrot.slane %v528, %v569
    %v571 = vlaneseq
    %v572 = vshrl.u32 %v571, 7
    %v573 = vsub.s32 2, %v572
    %v574 = vrot.slane %v528, %v573
    %v575 = vlaneseq
    %v576 = vshrl.u32 %v575, 7
    %v577 = vsub.s32 3, %v576
    %v578 = vrot.slane %v528, %v577
    %v783 = vunpack.c.l.b16 %v335
    %v784 = vunpack.c.h.b16 %v335
    %v785 = vunpack.c.l.b16 %v336
    %v786 = vunpack.c.h.b16 %v336
    %v787 = vunpack.c.l.b16 %v337
    %v788 = vunpack.c.h.b16 %v337
    %v789 = vunpack.c.l.b16 %v338
    %v790 = vunpack.c.h.b16 %v338
    %v791 = vunpack.c.l.b16 %v339
    %v792 = vunpack.c.h.b16 %v339
    %v793 = vunpack.c.l.b16 %v340
    %v794 = vunpack.c.h.b16 %v340
    %v795 = vunpack.c.l.b16 %v341
    %v796 = vunpack.c.h.b16 %v341
    %v797 = vunpack.c.l.b16 %v342
    %v798 = vunpack.c.h.b16 %v342
    %v799 = vunpack.c.l.b16 %v343
    %v800 = vunpack.c.h.b16 %v343
    %v801 = vunpack.c.l.b16 %v344
    %v802 = vunpack.c.h.b16 %v344
    %v803 = vunpack.c.l.b16 %v345
    %v804 = vunpack.c.h.b16 %v345
    %v805 = vunpack.c.l.b16 %v346
    %v806 = vunpack.c.h.b16 %v346
    %v807 = vunpack.c.l.b16 %v347
    %v808 = vunpack.c.h.b16 %v347
    %v809 = vunpack.c.l.b16 %v348
    %v810 = vunpack.c.h.b16 %v348
    %v811 = vunpack.c.l.b16 %v349
    %v812 = vunpack.c.h.b16 %v349
    %v813 = vunpack.c.l.b16 %v350
    %v814 = vunpack.c.h.b16 %v350
    %v815 = vunpack.c.l.b16 %v351
    %v816 = vunpack.c.h.b16 %v351
    %v817 = vunpack.c.l.b16 %v352
    %v818 = vunpack.c.h.b16 %v352
    %v819 = vunpack.c.l.b16 %v353
    %v820 = vunpack.c.h.b16 %v353
    %v821 = vunpack.c.l.b16 %v354
    %v822 = vunpack.c.h.b16 %v354
    %v823 = vunpack.c.l.b16 %v355
    %v824 = vunpack.c.h.b16 %v355
    %v825 = vunpack.c.l.b16 %v356
    %v826 = vunpack.c.h.b16 %v356
    %v827 = vunpack.c.l.b16 %v357
    %v828 = vunpack.c.h.b16 %v357
    %v829 = vunpack.c.l.b16 %v358
    %v830 = vunpack.c.h.b16 %v358
    %v831 = vunpack.c.l.b16 %v359
    %v832 = vunpack.c.h.b16 %v359
    %v833 = vunpack.c.l.b16 %v360
    %v834 = vunpack.c.h.b16 %v360
    %v835 = vunpack.c.l.b16 %v361
    %v836 = vunpack.c.h.b16 %v361
    %v837 = vunpack.c.l.b16 %v362
    %v838 = vunpack.c.h.b16 %v362
    %v839 = vunpack.c.l.b16 %v363
    %v840 = vunpack.c.h.b16 %v363
    %v841 = vunpack.c.l.b16 %v364
    %v842 = vunpack.c.h.b16 %v364
    %v843 = vunpack.c.l.b16 %v365
    %v844 = vunpack.c.h.b16 %v365
    %v845 = vunpack.c.l.b16 %v366
    %v846 = vunpack.c.h.b16 %v366
    %v847 = vunpack.c.l.b16 %v367
    %v848 = vunpack.c.h.b16 %v367
    %v849 = vunpack.c.l.b16 %v368
    %v850 = vunpack.c.h.b16 %v368
    %v851 = vunpack.c.l.b16 %v369
    %v852 = vunpack.c.h.b16 %v369
    %v853 = vunpack.c.l.b16 %v370
    %v854 = vunpack.c.h.b16 %v370
    %v855 = vunpack.c.l.b16 %v371
    %v856 = vunpack.c.h.b16 %v371
    %v857 = vunpack.c.l.b16 %v372
    %v858 = vunpack.c.h.b16 %v372
    %v859 = vunpack.c.l.b16 %v373
    %v860 = vunpack.c.h.b16 %v373
    %v861 = vunpack.c.l.b16 %v374
    %v862 = vunpack.c.h.b16 %v374
    %v863 = vunpack.c.l.b16 %v375
    %v864 = vunpack.c.h.b16 %v375
    %v865 = vunpack.c.l.b16 %v376
    %v866 = vunpack.c.h.b16 %v376
    %v867 = vunpack.c.l.b16 %v377
    %v868 = vunpack.c.h.b16 %v377
    %v869 = vunpack.c.l.b16 %v378
    %v870 = vunpack.c.h.b16 %v378
    %v871 = vunpack.c.l.b16 %v379
    %v872 = vunpack.c.h.b16 %v379
    %v873 = vunpack.c.l.b16 %v380
    %v874 = vunpack.c.h.b16 %v380
    %v875 = vunpack.c.l.b16 %v381
    %v876 = vunpack.c.h.b16 %v381
    %v877 = vunpack.c.l.b16 %v382
    %v878 = vunpack.c.h.b16 %v382
    %v879 = vunpack.c.l.b16 %v383
    %v880 = vunpack.c.h.b16 %v383
    %v881 = vunpack.c.l.b16 %v384
    %v882 = vunpack.c.h.b16 %v384
    %v883 = vunpack.c.l.b16 %v385
    %v884 = vunpack.c.h.b16 %v385
    %v885 = vunpack.c.l.b16 %v386
    %v886 = vunpack.c.h.b16 %v386
    %v887 = vunpack.c.l.b16 %v387
    %v888 = vunpack.c.h.b16 %v387
    %v889 = vunpack.c.l.b16 %v388
    %v890 = vunpack.c.h.b16 %v388
    %v891 = vunpack.c.l.b16 %v389
    %v892 = vunpack.c.h.b16 %v389
    %v893 = vunpack.c.l.b16 %v390
    %v894 = vunpack.c.h.b16 %v390
    %v895 = vunpack.c.l.b16 %v391
    %v896 = vunpack.c.h.b16 %v391
    %v897 = vunpack.c.l.b16 %v392
    %v898 = vunpack.c.h.b16 %v392
    %v899 = vunpack.c.l.b16 %v393
    %v900 = vunpack.c.h.b16 %v393
    %v901 = vunpack.c.l.b16 %v394
    %v902 = vunpack.c.h.b16 %v394
    %v903 = vunpack.c.l.b16 %v395
    %v904 = vunpack.c.h.b16 %v395
    %v905 = vunpack.c.l.b16 %v396
    %v906 = vunpack.c.h.b16 %v396
    %v907 = vunpack.c.l.b16 %v397
    %v908 = vunpack.c.h.b16 %v397
    %v909 = vunpack.c.l.b16 %v398
    %v910 = vunpack.c.h.b16 %v398
    %v911 = vunpack.c.l.b16 %v399
    %v912 = vunpack.c.h.b16 %v399
    %v913 = vunpack.c.l.b16 %v400
    %v914 = vunpack.c.h.b16 %v400
    %v915 = vunpack.c.l.b16 %v401
    %v916 = vunpack.c.h.b16 %v401
    %v917 = vunpack.c.l.b16 %v402
    %v918 = vunpack.c.h.b16 %v402
    %v919 = vunpack.c.l.b16 %v403
    %v920 = vunpack.c.h.b16 %v403
    %v921 = vunpack.c.l.b16 %v404
    %v922 = vunpack.c.h.b16 %v404
    %v923 = vunpack.c.l.b16 %v405
    %v924 = vunpack.c.h.b16 %v405
    %v925 = vunpack.c.l.b16 %v406
    %v926 = vunpack.c.h.b16 %v406
    %v927 = vunpack.c.l.b16 %v407
    %v928 = vunpack.c.h.b16 %v407
    %v929 = vunpack.c.l.b16 %v408
    %v930 = vunpack.c.h.b16 %v408
    %v931 = vunpack.c.l.b16 %v409
    %v932 = vunpack.c.h.b16 %v409
    %v933 = vunpack.c.l.b16 %v410
    %v934 = vunpack.c.h.b16 %v410
    %v935 = vunpack.c.l.b16 %v411
    %v936 = vunpack.c.h.b16 %v411
    %v937 = vunpack.c.l.b16 %v412
    %v938 = vunpack.c.h.b16 %v412
    %v939 = vunpack.c.l.b16 %v413
    %v940 = vunpack.c.h.b16 %v413
    %v941 = vunpack.c.l.b16 %v414
    %v942 = vunpack.c.h.b16 %v414
    %v943 = vunpack.c.l.b16 %v415
    %v944 = vunpack.c.h.b16 %v415
    %v945 = vunpack.c.l.b16 %v416
    %v946 = vunpack.c.h.b16 %v416
    %v947 = vunpack.c.l.b16 %v417
    %v948 = vunpack.c.h.b16 %v417
    %v949 = vunpack.c.l.b16 %v418
    %v950 = vunpack.c.h.b16 %v418
    %v951 = vunpack.c.l.b16 %v419
    %v952 = vunpack.c.h.b16 %v419
    %v953 = vunpack.c.l.b16 %v420
    %v954 = vunpack.c.h.b16 %v420
    %v955 = vunpack.c.l.b16 %v421
    %v956 = vunpack.c.h.b16 %v421
    %v957 = vunpack.c.l.b16 %v422
    %v958 = vunpack.c.h.b16 %v422
    %v959 = vunpack.c.l.b16 %v423
    %v960 = vunpack.c.h.b16 %v423
    %v961 = vunpack.c.l.b16 %v424
    %v962 = vunpack.c.h.b16 %v424
    %v963 = vunpack.c.l.b16 %v425
    %v964 = vunpack.c.h.b16 %v425
    %v965 = vunpack.c.l.b16 %v426
    %v966 = vunpack.c.h.b16 %v426
    %v967 = vunpack.c.l.b16 %v427
    %v968 = vunpack.c.h.b16 %v427
    %v969 = vunpack.c.l.b16 %v428
    %v970 = vunpack.c.h.b16 %v428
    %v971 = vunpack.c.l.b16 %v429
    %v972 = vunpack.c.h.b16 %v429
    %v973 = vunpack.c.l.b16 %v430
    %v974 = vunpack.c.h.b16 %v430
    %v975 = vunpack.c.l.b16 %v431
    %v976 = vunpack.c.h.b16 %v431
    %v977 = vunpack.c.l.b16 %v432
    %v978 = vunpack.c.h.b16 %v432
    %v979 = vunpack.c.l.b16 %v433
    %v980 = vunpack.c.h.b16 %v433
    %v981 = vunpack.c.l.b16 %v434
    %v982 = vunpack.c.h.b16 %v434
    %v983 = vunpack.c.l.b16 %v435
    %v984 = vunpack.c.h.b16 %v435
    %v985 = vunpack.c.l.b16 %v436
    %v986 = vunpack.c.h.b16 %v436
    %v987 = vunpack.c.l.b16 %v437
    %v988 = vunpack.c.h.b16 %v437
    %v989 = vunpack.c.l.b16 %v438
    %v990 = vunpack.c.h.b16 %v438
    %v991 = vunpack.c.l.b16 %v439
    %v992 = vunpack.c.h.b16 %v439
    %v993 = vunpack.c.l.b16 %v440
    %v994 = vunpack.c.h.b16 %v440
    %v995 = vunpack.c.l.b16 %v441
    %v996 = vunpack.c.h.b16 %v441
    %v997 = vunpack.c.l.b16 %v442
    %v998 = vunpack.c.h.b16 %v442
    %v999 = vunpack.c.l.b16 %v443
    %v1000 = vunpack.c.h.b16 %v443
    %v1001 = vunpack.c.l.b16 %v444
    %v1002 = vunpack.c.h.b16 %v444
    %v1003 = vunpack.c.l.b16 %v445
    %v1004 = vunpack.c.h.b16 %v445
    %v1005 = vunpack.c.l.b16 %v446
    %v1006 = vunpack.c.h.b16 %v446
    %v1007 = vunpack.c.l.b16 %v447
    %v1008 = vunpack.c.h.b16 %v447
    %v1009 = vunpack.c.l.b16 %v448
    %v1010 = vunpack.c.h.b16 %v448
    %v1011 = vunpack.c.l.b16 %v449
    %v1012 = vunpack.c.h.b16 %v449
    %v1013 = vunpack.c.l.b16 %v450
    %v1014 = vunpack.c.h.b16 %v450
    %v1015 = vunpack.c.l.b16 %v451
    %v1016 = vunpack.c.h.b16 %v451
    %v1017 = vunpack.c.l.b16 %v452
    %v1018 = vunpack.c.h.b16 %v452
    %v1019 = vunpack.c.l.b16 %v453
    %v1020 = vunpack.c.h.b16 %v453
    %v1021 = vunpack.c.l.b16 %v454
    %v1022 = vunpack.c.h.b16 %v454
    %v1023 = vunpack.c.l.b16 %v455
    %v1024 = vunpack.c.h.b16 %v455
    %v1025 = vunpack.c.l.b16 %v456
    %v1026 = vunpack.c.h.b16 %v456
    %v1027 = vunpack.c.l.b16 %v457
    %v1028 = vunpack.c.h.b16 %v457
    %v1029 = vunpack.c.l.b16 %v458
    %v1030 = vunpack.c.h.b16 %v458
    %v1031 = vunpack.c.l.b16 %v459
    %v1032 = vunpack.c.h.b16 %v459
    %v1033 = vunpack.c.l.b16 %v460
    %v1034 = vunpack.c.h.b16 %v460
    %v1035 = vunpack.c.l.b16 %v461
    %v1036 = vunpack.c.h.b16 %v461
    %v1037 = vunpack.c.l.b16 %v462
    %v1038 = vunpack.c.h.b16 %v462
    %v1039 = vunpack.c.l.b16 %v463
    %v1040 = vunpack.c.h.b16 %v463
    %v1041 = vunpack.c.l.b16 %v464
    %v1042 = vunpack.c.h.b16 %v464
    %v1043 = vunpack.c.l.b16 %v465
    %v1044 = vunpack.c.h.b16 %v465
    %v1045 = vunpack.c.l.b16 %v466
    %v1046 = vunpack.c.h.b16 %v466
    %v1047 = vunpack.c.l.b16 %v467
    %v1048 = vunpack.c.h.b16 %v467
    %v1049 = vunpack.c.l.b16 %v468
    %v1050 = vunpack.c.h.b16 %v468
    %v1051 = vunpack.c.l.b16 %v469
    %v1052 = vunpack.c.h.b16 %v469
    %v1053 = vunpack.c.l.b16 %v470
    %v1054 = vunpack.c.h.b16 %v470
    %v1055 = vunpack.c.l.b16 %v471
    %v1056 = vunpack.c.h.b16 %v471
    %v1057 = vunpack.c.l.b16 %v472
    %v1058 = vunpack.c.h.b16 %v472
    %v1059 = vunpack.c.l.b16 %v473
    %v1060 = vunpack.c.h.b16 %v473
    %v1061 = vunpack.c.l.b16 %v474
    %v1062 = vunpack.c.h.b16 %v474
    %v1063 = vunpack.c.l.b16 %v475
    %v1064 = vunpack.c.h.b16 %v475
    %v1065 = vunpack.c.l.b16 %v476
    %v1066 = vunpack.c.h.b16 %v476
    %v1067 = vunpack.c.l.b16 %v477
    %v1068 = vunpack.c.h.b16 %v477
    %v1069 = vunpack.c.l.b16 %v478
    %v1070 = vunpack.c.h.b16 %v478
    %v1071 = vunpack.c.l.b16 %v479
    %v1072 = vunpack.c.h.b16 %v479
    %v1073 = vunpack.c.l.b16 %v480
    %v1074 = vunpack.c.h.b16 %v480
    %v1075 = vunpack.c.l.b16 %v481
    %v1076 = vunpack.c.h.b16 %v481
    %v1077 = vunpack.c.l.b16 %v482
    %v1078 = vunpack.c.h.b16 %v482
    %v1079 = vunpack.c.l.b16 %v483
    %v1080 = vunpack.c.h.b16 %v483
    %v1081 = vunpack.c.l.b16 %v484
    %v1082 = vunpack.c.h.b16 %v484
    %v1083 = vunpack.c.l.b16 %v485
    %v1084 = vunpack.c.h.b16 %v485
    %v1085 = vunpack.c.l.b16 %v486
    %v1086 = vunpack.c.h.b16 %v486
    %v1087 = vunpack.c.l.b16 %v487
    %v1088 = vunpack.c.h.b16 %v487
    %v1089 = vunpack.c.l.b16 %v488
    %v1090 = vunpack.c.h.b16 %v488
    %v1091 = vunpack.c.l.b16 %v489
    %v1092 = vunpack.c.h.b16 %v489
    %v1093 = vunpack.c.l.b16 %v490
    %v1094 = vunpack.c.h.b16 %v490
    %v1095 = vunpack.c.l.b16 %v491
    %v1096 = vunpack.c.h.b16 %v491
    %v1097 = vunpack.c.l.b16 %v492
    %v1098 = vunpack.c.h.b16 %v492
    %v1099 = vunpack.c.l.b16 %v493
    %v1100 = vunpack.c.h.b16 %v493
    %v1101 = vunpack.c.l.b16 %v494
    %v1102 = vunpack.c.h.b16 %v494
    %v1103 = vunpack.c.l.b16 %v495
    %v1104 = vunpack.c.h.b16 %v495
    %v1105 = vunpack.c.l.b16 %v496
    %v1106 = vunpack.c.h.b16 %v496
    %v1107 = vunpack.c.l.b16 %v497
    %v1108 = vunpack.c.h.b16 %v497
    %v1109 = vunpack.c.l.b16 %v498
    %v1110 = vunpack.c.h.b16 %v498
    %v1111 = vunpack.c.l.b16 %v499
    %v1112 = vunpack.c.h.b16 %v499
    %v1113 = vunpack.c.l.b16 %v500
    %v1114 = vunpack.c.h.b16 %v500
    %v1115 = vunpack.c.l.b16 %v501
    %v1116 = vunpack.c.h.b16 %v501
    %v1117 = vunpack.c.l.b16 %v502
    %v1118 = vunpack.c.h.b16 %v502
    %v1119 = vunpack.c.l.b16 %v503
    %v1120 = vunpack.c.h.b16 %v503
    %v1121 = vunpack.c.l.b16 %v504
    %v1122 = vunpack.c.h.b16 %v504
    %v1123 = vunpack.c.l.b16 %v505
    %v1124 = vunpack.c.h.b16 %v505
    %v1125 = vunpack.c.l.b16 %v506
    %v1126 = vunpack.c.h.b16 %v506
    %v1127 = vunpack.c.l.b16 %v507
    %v1128 = vunpack.c.h.b16 %v507
    %v1129 = vunpack.c.l.b16 %v508
    %v1130 = vunpack.c.h.b16 %v508
    %v1131 = vunpack.c.l.b16 %v509
    %v1132 = vunpack.c.h.b16 %v509
    %v1133 = vunpack.c.l.b16 %v510
    %v1134 = vunpack.c.h.b16 %v510
    %v1135 = vunpack.c.l.b16 %v511
    %v1136 = vunpack.c.h.b16 %v511
    %v1137 = vunpack.c.l.b16 %v512
    %v1138 = vunpack.c.h.b16 %v512
    %v1139 = vunpack.c.l.b16 %v513
    %v1140 = vunpack.c.h.b16 %v513
    %v1141 = vunpack.c.l.b16 %v514
    %v1142 = vunpack.c.h.b16 %v514
    %v1143 = vunpack.c.l.b16 %v515
    %v1144 = vunpack.c.h.b16 %v515
    %v1145 = vunpack.c.l.b16 %v516
    %v1146 = vunpack.c.h.b16 %v516
    %v1147 = vunpack.c.l.b16 %v517
    %v1148 = vunpack.c.h.b16 %v517
    %v1149 = vunpack.c.l.b16 %v518
    %v1150 = vunpack.c.h.b16 %v518
    %v1151 = vunpack.c.l.b16 %v519
    %v1152 = vunpack.c.h.b16 %v519
    %v1153 = vunpack.c.l.b16 %v520
    %v1154 = vunpack.c.h.b16 %v520
    %v1155 = vunpack.c.l.b16 %v521
    %v1156 = vunpack.c.h.b16 %v521
    %v1157 = vunpack.c.l.b16 %v522
    %v1158 = vunpack.c.h.b16 %v522
    %v1159 = vunpack.c.l.b16 %v523
    %v1160 = vunpack.c.h.b16 %v523
    %v1161 = vunpack.c.l.b16 %v524
    %v1162 = vunpack.c.h.b16 %v524
    %v1163 = vunpack.c.l.b16 %v525
    %v1164 = vunpack.c.h.b16 %v525
    %v1165 = vunpack.c.l.b16 %v526
    %v1166 = vunpack.c.h.b16 %v526
    %v1167 = vpack.c.b16 %v795, %v783
    %v1168 = vpack.c.b16 %v796, %v784
    %v1169 = vpack.c.b16 %v797, %v785
    %v1170 = vpack.c.b16 %v798, %v786
    %v1171 = vpack.c.b16 %v799, %v787
    %v1172 = vpack.c.b16 %v800, %v788
    %v1173 = vpack.c.b16 %v801, %v789
    %v1174 = vpack.c.b16 %v802, %v790
    %v1175 = vpack.c.b16 %v803, %v791
    %v1176 = vpack.c.b16 %v804, %v792
    %v1177 = vpack.c.b16 %v805, %v793
    %v1178 = vpack.c.b16 %v806, %v794
    %v1179 = vpack.c.b16 %v819, %v807
    %v1180 = vpack.c.b16 %v820, %v808
    %v1181 = vpack.c.b16 %v821, %v809
    %v1182 = vpack.c.b16 %v822, %v810
    %v1183 = vpack.c.b16 %v823, %v811
    %v1184 = vpack.c.b16 %v824, %v812
    %v1185 = vpack.c.b16 %v825, %v813
    %v1186 = vpack.c.b16 %v826, %v814
    %v1187 = vpack.c.b16 %v827, %v815
    %v1188 = vpack.c.b16 %v828, %v816
    %v1189 = vpack.c.b16 %v829, %v817
    %v1190 = vpack.c.b16 %v830, %v818
    %v1191 = vpack.c.b16 %v843, %v831
    %v1192 = vpack.c.b16 %v844, %v832
    %v1193 = vpack.c.b16 %v845, %v833
    %v1194 = vpack.c.b16 %v846, %v834
    %v1195 = vpack.c.b16 %v847, %v835
    %v1196 = vpack.c.b16 %v848, %v836
    %v1197 = vpack.c.b16 %v849, %v837
    %v1198 = vpack.c.b16 %v850, %v838
    %v1199 = vpack.c.b16 %v851, %v839
    %v1200 = vpack.c.b16 %v852, %v840
    %v1201 = vpack.c.b16 %v853, %v841
    %v1202 = vpack.c.b16 %v854, %v842
    %v1203 = vpack.c.b16 %v867, %v855
    %v1204 = vpack.c.b16 %v868, %v856
    %v1205 = vpack.c.b16 %v869, %v857
    %v1206 = vpack.c.b16 %v870, %v858
    %v1207 = vpack.c.b16 %v871, %v859
    %v1208 = vpack.c.b16 %v872, %v860
    %v1209 = vpack.c.b16 %v873, %v861
    %v1210 = vpack.c.b16 %v874, %v862
    %v1211 = vpack.c.b16 %v875, %v863
    %v1212 = vpack.c.b16 %v876, %v864
    %v1213 = vpack.c.b16 %v877, %v865
    %v1214 = vpack.c.b16 %v878, %v866
    %v1215 = vpack.c.b16 %v891, %v879
    %v1216 = vpack.c.b16 %v892, %v880
    %v1217 = vpack.c.b16 %v893, %v881
    %v1218 = vpack.c.b16 %v894, %v882
    %v1219 = vpack.c.b16 %v895, %v883
    %v1220 = vpack.c.b16 %v896, %v884
    %v1221 = vpack.c.b16 %v897, %v885
    %v1222 = vpack.c.b16 %v898, %v886
    %v1223 = vpack.c.b16 %v899, %v887
    %v1224 = vpack.c.b16 %v900, %v888
    %v1225 = vpack.c.b16 %v901, %v889
    %v1226 = vpack.c.b16 %v902, %v890
    %v1227 = vpack.c.b16 %v915, %v903
    %v1228 = vpack.c.b16 %v916, %v904
    %v1229 = vpack.c.b16 %v917, %v905
    %v1230 = vpack.c.b16 %v918, %v906
    %v1231 = vpack.c.b16 %v919, %v907
    %v1232 = vpack.c.b16 %v920, %v908
    %v1233 = vpack.c.b16 %v921, %v909
    %v1234 = vpack.c.b16 %v922, %v910
    %v1235 = vpack.c.b16 %v923, %v911
    %v1236 = vpack.c.b16 %v924, %v912
    %v1237 = vpack.c.b16 %v925, %v913
    %v1238 = vpack.c.b16 %v926, %v914
    %v1239 = vpack.c.b16 %v939, %v927
    %v1240 = vpack.c.b16 %v940, %v928
    %v1241 = vpack.c.b16 %v941, %v929
    %v1242 = vpack.c.b16 %v942, %v930
    %v1243 = vpack.c.b16 %v943, %v931
    %v1244 = vpack.c.b16 %v944, %v932
    %v1245 = vpack.c.b16 %v945, %v933
    %v1246 = vpack.c.b16 %v946, %v934
    %v1247 = vpack.c.b16 %v947, %v935
    %v1248 = vpack.c.b16 %v948, %v936
    %v1249 = vpack.c.b16 %v949, %v937
    %v1250 = vpack.c.b16 %v950, %v938
    %v1251 = vpack.c.b16 %v963, %v951
    %v1252 = vpack.c.b16 %v964, %v952
    %v1253 = vpack.c.b16 %v965, %v953
    %v1254 = vpack.c.b16 %v966, %v954
    %v1255 = vpack.c.b16 %v967, %v955
    %v1256 = vpack.c.b16 %v968, %v956
    %v1257 = vpack.c.b16 %v969, %v957
    %v1258 = vpack.c.b16 %v970, %v958
    %v1259 = vpack.c.b16 %v971, %v959
    %v1260 = vpack.c.b16 %v972, %v960
    %v1261 = vpack.c.b16 %v973, %v961
    %v1262 = vpack.c.b16 %v974, %v962
    %v1263 = vpack.c.b16 %v987, %v975
    %v1264 = vpack.c.b16 %v988, %v976
    %v1265 = vpack.c.b16 %v989, %v977
    %v1266 = vpack.c.b16 %v990, %v978
    %v1267 = vpack.c.b16 %v991, %v979
    %v1268 = vpack.c.b16 %v992, %v980
    %v1269 = vpack.c.b16 %v993, %v981
    %v1270 = vpack.c.b16 %v994, %v982
    %v1271 = vpack.c.b16 %v995, %v983
    %v1272 = vpack.c.b16 %v996, %v984
    %v1273 = vpack.c.b16 %v997, %v985
    %v1274 = vpack.c.b16 %v998, %v986
    %v1275 = vpack.c.b16 %v1011, %v999
    %v1276 = vpack.c.b16 %v1012, %v1000
    %v1277 = vpack.c.b16 %v1013, %v1001
    %v1278 = vpack.c.b16 %v1014, %v1002
    %v1279 = vpack.c.b16 %v1015, %v1003
    %v1280 = vpack.c.b16 %v1016, %v1004
    %v1281 = vpack.c.b16 %v1017, %v1005
    %v1282 = vpack.c.b16 %v1018, %v1006
    %v1283 = vpack.c.b16 %v1019, %v1007
    %v1284 = vpack.c.b16 %v1020, %v1008
    %v1285 = vpack.c.b16 %v1021, %v1009
    %v1286 = vpack.c.b16 %v1022, %v1010
    %v1287 = vpack.c.b16 %v1035, %v1023
    %v1288 = vpack.c.b16 %v1036, %v1024
    %v1289 = vpack.c.b16 %v1037, %v1025
    %v1290 = vpack.c.b16 %v1038, %v1026
    %v1291 = vpack.c.b16 %v1039, %v1027
    %v1292 = vpack.c.b16 %v1040, %v1028
    %v1293 = vpack.c.b16 %v1041, %v1029
    %v1294 = vpack.c.b16 %v1042, %v1030
    %v1295 = vpack.c.b16 %v1043, %v1031
    %v1296 = vpack.c.b16 %v1044, %v1032
    %v1297 = vpack.c.b16 %v1045, %v1033
    %v1298 = vpack.c.b16 %v1046, %v1034
    %v1299 = vpack.c.b16 %v1059, %v1047
    %v1300 = vpack.c.b16 %v1060, %v1048
    %v1301 = vpack.c.b16 %v1061, %v1049
    %v1302 = vpack.c.b16 %v1062, %v1050
    %v1303 = vpack.c.b16 %v1063, %v1051
    %v1304 = vpack.c.b16 %v1064, %v1052
    %v1305 = vpack.c.b16 %v1065, %v1053
    %v1306 = vpack.c.b16 %v1066, %v1054
    %v1307 = vpack.c.b16 %v1067, %v1055
    %v1308 = vpack.c.b16 %v1068, %v1056
    %v1309 = vpack.c.b16 %v1069, %v1057
    %v1310 = vpack.c.b16 %v1070, %v1058
    %v1311 = vpack.c.b16 %v1083, %v1071
    %v1312 = vpack.c.b16 %v1084, %v1072
    %v1313 = vpack.c.b16 %v1085, %v1073
    %v1314 = vpack.c.b16 %v1086, %v1074
    %v1315 = vpack.c.b16 %v1087, %v1075
    %v1316 = vpack.c.b16 %v1088, %v1076
    %v1317 = vpack.c.b16 %v1089, %v1077
    %v1318 = vpack.c.b16 %v1090, %v1078
    %v1319 = vpack.c.b16 %v1091, %v1079
    %v1320 = vpack.c.b16 %v1092, %v1080
    %v1321 = vpack.c.b16 %v1093, %v1081
    %v1322 = vpack.c.b16 %v1094, %v1082
    %v1323 = vpack.c.b16 %v1107, %v1095
    %v1324 = vpack.c.b16 %v1108, %v1096
    %v1325 = vpack.c.b16 %v1109, %v1097
    %v1326 = vpack.c.b16 %v1110, %v1098
    %v1327 = vpack.c.b16 %v1111, %v1099
    %v1328 = vpack.c.b16 %v1112, %v1100
    %v1329 = vpack.c.b16 %v1113, %v1101
    %v1330 = vpack.c.b16 %v1114, %v1102
    %v1331 = vpack.c.b16 %v1115, %v1103
    %v1332 = vpack.c.b16 %v1116, %v1104
    %v1333 = vpack.c.b16 %v1117, %v1105
    %v1334 = vpack.c.b16 %v1118, %v1106
    %v1335 = vpack.c.b16 %v1131, %v1119
    %v1336 = vpack.c.b16 %v1132, %v1120
    %v1337 = vpack.c.b16 %v1133, %v1121
    %v1338 = vpack.c.b16 %v1134, %v1122
    %v1339 = vpack.c.b16 %v1135, %v1123
    %v1340 = vpack.c.b16 %v1136, %v1124
    %v1341 = vpack.c.b16 %v1137, %v1125
    %v1342 = vpack.c.b16 %v1138, %v1126
    %v1343 = vpack.c.b16 %v1139, %v1127
    %v1344 = vpack.c.b16 %v1140, %v1128
    %v1345 = vpack.c.b16 %v1141, %v1129
    %v1346 = vpack.c.b16 %v1142, %v1130
    %v1347 = vpack.c.b16 %v1155, %v1143
    %v1348 = vpack.c.b16 %v1156, %v1144
    %v1349 = vpack.c.b16 %v1157, %v1145
    %v1350 = vpack.c.b16 %v1158, %v1146
    %v1351 = vpack.c.b16 %v1159, %v1147
    %v1352 = vpack.c.b16 %v1160, %v1148
    %v1353 = vpack.c.b16 %v1161, %v1149
    %v1354 = vpack.c.b16 %v1162, %v1150
    %v1355 = vpack.c.b16 %v1163, %v1151
    %v1356 = vpack.c.b16 %v1164, %v1152
    %v1357 = vpack.c.b16 %v1165, %v1153
    %v1358 = vpack.c.b16 %v1166, %v1154
    %1551 = vmatprep.subr.bf16.mxu0 %v1168
    %1552 = vmatpush1.bf16.msra.mxu0 %v1167
    %1553 = vmatprep.subr.bf16.mxu0 %v1180
    %1554 = vmatpush1.bf16.msra.mxu0 %v1179
    %1555 = vmatprep.subr.bf16.mxu0 %v1192
    %1556 = vmatpush1.bf16.msra.mxu0 %v1191
    %1557 = vmatprep.subr.bf16.mxu0 %v1204
    %1558 = vmatpush1.bf16.msra.mxu0 %v1203
    %1559 = vmatprep.subr.bf16.mxu0 %v1216
    %1560 = vmatpush1.bf16.msra.mxu0 %v1215
    %1561 = vmatprep.subr.bf16.mxu0 %v1228
    %1562 = vmatpush1.bf16.msra.mxu0 %v1227
    %1563 = vmatprep.subr.bf16.mxu0 %v1240
    %1564 = vmatpush1.bf16.msra.mxu0 %v1239
    %1565 = vmatprep.subr.bf16.mxu0 %v1252
    %1566 = vmatpush1.bf16.msra.mxu0 %v1251
    %1567 = vmatprep.subr.bf16.mxu0 %v1264
    %1568 = vmatpush1.bf16.msra.mxu0 %v1263
    %1569 = vmatprep.subr.bf16.mxu0 %v1276
    %1570 = vmatpush1.bf16.msra.mxu0 %v1275
    %1571 = vmatprep.subr.bf16.mxu0 %v1288
    %1572 = vmatpush1.bf16.msra.mxu0 %v1287
    %1573 = vmatprep.subr.bf16.mxu0 %v1300
    %1574 = vmatpush1.bf16.msra.mxu0 %v1299
    %1575 = vmatprep.subr.bf16.mxu0 %v1312
    %1576 = vmatpush1.bf16.msra.mxu0 %v1311
    %1577 = vmatprep.subr.bf16.mxu0 %v1324
    %1578 = vmatpush1.bf16.msra.mxu0 %v1323
    %1579 = vmatprep.subr.bf16.mxu0 %v1336
    %1580 = vmatpush1.bf16.msra.mxu0 %v1335
    %1581 = vmatprep.subr.bf16.mxu0 %v1348
    %1582 = vmatpush1.bf16.msra.mxu0 %v1347
    %1583 = vmatprep.mubr.bf16.mxu0 %v334
    %1584 = vmatmul.mubr.bf16.gmra.mrb[0].mxu0 %v333
    %v1585 = vpop.f32.mrb[0].mxu0
    %v1586 = vadd.f32 %v534, %v1585
    %v1587 = vpop.f32.mrb[0].mxu0
    %v1588 = vadd.f32 %v538, %v1587
    %v1589 = vpop.f32.mrb[0].mxu0
    %v1590 = vpop.f32.mrb[0].mxu0
    %1591 = vdwg.mxu0
    %1592 = vmatprep.subr.bf16.mxu0 %v1170
    %1593 = vmatpush1.bf16.msra.mxu0 %v1169
    %1594 = vmatprep.subr.bf16.mxu0 %v1182
    %1595 = vmatpush1.bf16.msra.mxu0 %v1181
    %1596 = vmatprep.subr.bf16.mxu0 %v1194
    %1597 = vmatpush1.bf16.msra.mxu0 %v1193
    %1598 = vmatprep.subr.bf16.mxu0 %v1206
    %1599 = vmatpush1.bf16.msra.mxu0 %v1205
    %1600 = vmatprep.subr.bf16.mxu0 %v1218
    %1601 = vmatpush1.bf16.msra.mxu0 %v1217
    %1602 = vmatprep.subr.bf16.mxu0 %v1230
    %1603 = vmatpush1.bf16.msra.mxu0 %v1229
    %1604 = vmatprep.subr.bf16.mxu0 %v1242
    %1605 = vmatpush1.bf16.msra.mxu0 %v1241
    %1606 = vmatprep.subr.bf16.mxu0 %v1254
    %1607 = vmatpush1.bf16.msra.mxu0 %v1253
    %1608 = vmatprep.subr.bf16.mxu0 %v1266
    %1609 = vmatpush1.bf16.msra.mxu0 %v1265
    %1610 = vmatprep.subr.bf16.mxu0 %v1278
    %1611 = vmatpush1.bf16.msra.mxu0 %v1277
    %1612 = vmatprep.subr.bf16.mxu0 %v1290
    %1613 = vmatpush1.bf16.msra.mxu0 %v1289
    %1614 = vmatprep.subr.bf16.mxu0 %v1302
    %1615 = vmatpush1.bf16.msra.mxu0 %v1301
    %1616 = vmatprep.subr.bf16.mxu0 %v1314
    %1617 = vmatpush1.bf16.msra.mxu0 %v1313
    %1618 = vmatprep.subr.bf16.mxu0 %v1326
    %1619 = vmatpush1.bf16.msra.mxu0 %v1325
    %1620 = vmatprep.subr.bf16.mxu0 %v1338
    %1621 = vmatpush1.bf16.msra.mxu0 %v1337
    %1622 = vmatprep.subr.bf16.mxu0 %v1350
    %1623 = vmatpush1.bf16.msra.mxu0 %v1349
    %1624 = vmatprep.mubr.bf16.mxu0 %v334
    %1625 = vmatmul.mubr.bf16.gmra.mrb[0].mxu0 %v333
    %v1626 = vpop.f32.mrb[0].mxu0
    %v1627 = vadd.f32 %v542, %v1626
    %v1628 = vpop.f32.mrb[0].mxu0
    %v1629 = vadd.f32 %v546, %v1628
    %v1630 = vpop.f32.mrb[0].mxu0
    %v1631 = vpop.f32.mrb[0].mxu0
    %1632 = vdwg.mxu0
    %1633 = vmatprep.subr.bf16.mxu0 %v1172
    %1634 = vmatpush1.bf16.msra.mxu0 %v1171
    %1635 = vmatprep.subr.bf16.mxu0 %v1184
    %1636 = vmatpush1.bf16.msra.mxu0 %v1183
    %1637 = vmatprep.subr.bf16.mxu0 %v1196
    %1638 = vmatpush1.bf16.msra.mxu0 %v1195
    %1639 = vmatprep.subr.bf16.mxu0 %v1208
    %1640 = vmatpush1.bf16.msra.mxu0 %v1207
    %1641 = vmatprep.subr.bf16.mxu0 %v1220
    %1642 = vmatpush1.bf16.msra.mxu0 %v1219
    %1643 = vmatprep.subr.bf16.mxu0 %v1232
    %1644 = vmatpush1.bf16.msra.mxu0 %v1231
    %1645 = vmatprep.subr.bf16.mxu0 %v1244
    %1646 = vmatpush1.bf16.msra.mxu0 %v1243
    %1647 = vmatprep.subr.bf16.mxu0 %v1256
    %1648 = vmatpush1.bf16.msra.mxu0 %v1255
    %1649 = vmatprep.subr.bf16.mxu0 %v1268
    %1650 = vmatpush1.bf16.msra.mxu0 %v1267
    %1651 = vmatprep.subr.bf16.mxu0 %v1280
    %1652 = vmatpush1.bf16.msra.mxu0 %v1279
    %1653 = vmatprep.subr.bf16.mxu0 %v1292
    %1654 = vmatpush1.bf16.msra.mxu0 %v1291
    %1655 = vmatprep.subr.bf16.mxu0 %v1304
    %1656 = vmatpush1.bf16.msra.mxu0 %v1303
    %1657 = vmatprep.subr.bf16.mxu0 %v1316
    %1658 = vmatpush1.bf16.msra.mxu0 %v1315
    %1659 = vmatprep.subr.bf16.mxu0 %v1328
    %1660 = vmatpush1.bf16.msra.mxu0 %v1327
    %1661 = vmatprep.subr.bf16.mxu0 %v1340
    %1662 = vmatpush1.bf16.msra.mxu0 %v1339
    %1663 = vmatprep.subr.bf16.mxu0 %v1352
    %1664 = vmatpush1.bf16.msra.mxu0 %v1351
    %1665 = vmatprep.mubr.bf16.mxu0 %v334
    %1666 = vmatmul.mubr.bf16.gmra.mrb[0].mxu0 %v333
    %v1667 = vpop.f32.mrb[0].mxu0
    %v1668 = vadd.f32 %v550, %v1667
    %v1669 = vpop.f32.mrb[0].mxu0
    %v1670 = vadd.f32 %v554, %v1669
    %v1671 = vpop.f32.mrb[0].mxu0
    %v1672 = vpop.f32.mrb[0].mxu0
    %1673 = vdwg.mxu0
    %1674 = vmatprep.subr.bf16.mxu0 %v1174
    %1675 = vmatpush1.bf16.msra.mxu0 %v1173
    %1676 = vmatprep.subr.bf16.mxu0 %v1186
    %1677 = vmatpush1.bf16.msra.mxu0 %v1185
    %1678 = vmatprep.subr.bf16.mxu0 %v1198
    %1679 = vmatpush1.bf16.msra.mxu0 %v1197
    %1680 = vmatprep.subr.bf16.mxu0 %v1210
    %1681 = vmatpush1.bf16.msra.mxu0 %v1209
    %1682 = vmatprep.subr.bf16.mxu0 %v1222
    %1683 = vmatpush1.bf16.msra.mxu0 %v1221
    %1684 = vmatprep.subr.bf16.mxu0 %v1234
    %1685 = vmatpush1.bf16.msra.mxu0 %v1233
    %1686 = vmatprep.subr.bf16.mxu0 %v1246
    %1687 = vmatpush1.bf16.msra.mxu0 %v1245
    %1688 = vmatprep.subr.bf16.mxu0 %v1258
    %1689 = vmatpush1.bf16.msra.mxu0 %v1257
    %1690 = vmatprep.subr.bf16.mxu0 %v1270
    %1691 = vmatpush1.bf16.msra.mxu0 %v1269
    %1692 = vmatprep.subr.bf16.mxu0 %v1282
    %1693 = vmatpush1.bf16.msra.mxu0 %v1281
    %1694 = vmatprep.subr.bf16.mxu0 %v1294
    %1695 = vmatpush1.bf16.msra.mxu0 %v1293
    %1696 = vmatprep.subr.bf16.mxu0 %v1306
    %1697 = vmatpush1.bf16.msra.mxu0 %v1305
    %1698 = vmatprep.subr.bf16.mxu0 %v1318
    %1699 = vmatpush1.bf16.msra.mxu0 %v1317
    %1700 = vmatprep.subr.bf16.mxu0 %v1330
    %1701 = vmatpush1.bf16.msra.mxu0 %v1329
    %1702 = vmatprep.subr.bf16.mxu0 %v1342
    %1703 = vmatpush1.bf16.msra.mxu0 %v1341
    %1704 = vmatprep.subr.bf16.mxu0 %v1354
    %1705 = vmatpush1.bf16.msra.mxu0 %v1353
    %1706 = vmatprep.mubr.bf16.mxu0 %v334
    %1707 = vmatmul.mubr.bf16.gmra.mrb[0].mxu0 %v333
    %v1708 = vpop.f32.mrb[0].mxu0
    %v1709 = vadd.f32 %v558, %v1708
    %v1710 = vpop.f32.mrb[0].mxu0
    %v1711 = vadd.f32 %v562, %v1710
    %v1712 = vpop.f32.mrb[0].mxu0
    %v1713 = vpop.f32.mrb[0].mxu0
    %1714 = vdwg.mxu0
    %1715 = vmatprep.subr.bf16.mxu0 %v1176
    %1716 = vmatpush1.bf16.msra.mxu0 %v1175
    %1717 = vmatprep.subr.bf16.mxu0 %v1188
    %1718 = vmatpush1.bf16.msra.mxu0 %v1187
    %1719 = vmatprep.subr.bf16.mxu0 %v1200
    %1720 = vmatpush1.bf16.msra.mxu0 %v1199
    %1721 = vmatprep.subr.bf16.mxu0 %v1212
    %1722 = vmatpush1.bf16.msra.mxu0 %v1211
    %1723 = vmatprep.subr.bf16.mxu0 %v1224
    %1724 = vmatpush1.bf16.msra.mxu0 %v1223
    %1725 = vmatprep.subr.bf16.mxu0 %v1236
    %1726 = vmatpush1.bf16.msra.mxu0 %v1235
    %1727 = vmatprep.subr.bf16.mxu0 %v1248
    %1728 = vmatpush1.bf16.msra.mxu0 %v1247
    %1729 = vmatprep.subr.bf16.mxu0 %v1260
    %1730 = vmatpush1.bf16.msra.mxu0 %v1259
    %1731 = vmatprep.subr.bf16.mxu0 %v1272
    %1732 = vmatpush1.bf16.msra.mxu0 %v1271
    %1733 = vmatprep.subr.bf16.mxu0 %v1284
    %1734 = vmatpush1.bf16.msra.mxu0 %v1283
    %1735 = vmatprep.subr.bf16.mxu0 %v1296
    %1736 = vmatpush1.bf16.msra.mxu0 %v1295
    %1737 = vmatprep.subr.bf16.mxu0 %v1308
    %1738 = vmatpush1.bf16.msra.mxu0 %v1307
    %1739 = vmatprep.subr.bf16.mxu0 %v1320
    %1740 = vmatpush1.bf16.msra.mxu0 %v1319
    %1741 = vmatprep.subr.bf16.mxu0 %v1332
    %1742 = vmatpush1.bf16.msra.mxu0 %v1331
    %1743 = vmatprep.subr.bf16.mxu0 %v1344
    %1744 = vmatpush1.bf16.msra.mxu0 %v1343
    %1745 = vmatprep.subr.bf16.mxu0 %v1356
    %1746 = vmatpush1.bf16.msra.mxu0 %v1355
    %1747 = vmatprep.mubr.bf16.mxu0 %v334
    %1748 = vmatmul.mubr.bf16.gmra.mrb[0].mxu0 %v333
    %v1749 = vpop.f32.mrb[0].mxu0
    %v1750 = vadd.f32 %v566, %v1749
    %v1751 = vpop.f32.mrb[0].mxu0
    %v1752 = vadd.f32 %v570, %v1751
    %v1753 = vpop.f32.mrb[0].mxu0
    %v1754 = vpop.f32.mrb[0].mxu0
    %1755 = vdwg.mxu0
    %1756 = vmatprep.subr.bf16.mxu0 %v1178
    %1757 = vmatpush1.bf16.msra.mxu0 %v1177
    %1758 = vmatprep.subr.bf16.mxu0 %v1190
    %1759 = vmatpush1.bf16.msra.mxu0 %v1189
    %1760 = vmatprep.subr.bf16.mxu0 %v1202
    %1761 = vmatpush1.bf16.msra.mxu0 %v1201
    %1762 = vmatprep.subr.bf16.mxu0 %v1214
    %1763 = vmatpush1.bf16.msra.mxu0 %v1213
    %1764 = vmatprep.subr.bf16.mxu0 %v1226
    %1765 = vmatpush1.bf16.msra.mxu0 %v1225
    %1766 = vmatprep.subr.bf16.mxu0 %v1238
    %1767 = vmatpush1.bf16.msra.mxu0 %v1237
    %1768 = vmatprep.subr.bf16.mxu0 %v1250
    %1769 = vmatpush1.bf16.msra.mxu0 %v1249
    %1770 = vmatprep.subr.bf16.mxu0 %v1262
    %1771 = vmatpush1.bf16.msra.mxu0 %v1261
    %1772 = vmatprep.subr.bf16.mxu0 %v1274
    %1773 = vmatpush1.bf16.msra.mxu0 %v1273
    %1774 = vmatprep.subr.bf16.mxu0 %v1286
    %1775 = vmatpush1.bf16.msra.mxu0 %v1285
    %1776 = vmatprep.subr.bf16.mxu0 %v1298
    %1777 = vmatpush1.bf16.msra.mxu0 %v1297
    %1778 = vmatprep.subr.bf16.mxu0 %v1310
    %1779 = vmatpush1.bf16.msra.mxu0 %v1309
    %1780 = vmatprep.subr.bf16.mxu0 %v1322
    %1781 = vmatpush1.bf16.msra.mxu0 %v1321
    %1782 = vmatprep.subr.bf16.mxu0 %v1334
    %1783 = vmatpush1.bf16.msra.mxu0 %v1333
    %1784 = vmatprep.subr.bf16.mxu0 %v1346
    %1785 = vmatpush1.bf16.msra.mxu0 %v1345
    %1786 = vmatprep.subr.bf16.mxu0 %v1358
    %1787 = vmatpush1.bf16.msra.mxu0 %v1357
    %1788 = vmatprep.mubr.bf16.mxu0 %v334
    %1789 = vmatmul.mubr.bf16.gmra.mrb[0].mxu0 %v333
    %v1790 = vpop.f32.mrb[0].mxu0
    %v1791 = vadd.f32 %v574, %v1790
    %v1792 = vpop.f32.mrb[0].mxu0
    %v1793 = vadd.f32 %v578, %v1792
    %v1794 = vpop.f32.mrb[0].mxu0
    %v1795 = vpop.f32.mrb[0].mxu0
    %1796 = vdwg.mxu0
    %v1809 = vcombine.low %v1586, %v1588
    %v1810 = vcombine.low %v1627, %v1629
    %v1812 = vunpack.c.l.s4 1983009808
    %v1813 = vunpack.c.0.s8 %v1812
    %v1814 = vlaneseq
    %v1815 = vshrl.u32 %v1814, 7
    %v1816 = vsub.s32 %v1813, %v1815
    %v1817 = vrot.slane %v1809, %v1816
    %v1819 = vunpack.c.l.s4 1983009808
    %v1820 = vunpack.c.0.s8 %v1819
    %v1821 = vlaneseq
    %v1822 = vshrl.u32 %v1821, 7
    %v1823 = vsub.s32 %v1820, %v1822
    %v1824 = vrot.slane %v1810, %v1823
    %v1825 = vcombine.low %v1817, %v1824
    %v1826 = vcombine.low %v1668, %v1670
    %v1827 = vcombine.low %v1709, %v1711
    %v1829 = vunpack.c.l.s4 1983009808
    %v1830 = vunpack.c.0.s8 %v1829
    %v1831 = vlaneseq
    %v1832 = vshrl.u32 %v1831, 7
    %v1833 = vsub.s32 %v1830, %v1832
    %v1834 = vrot.slane %v1826, %v1833
    %v1836 = vunpack.c.l.s4 1983009808
    %v1837 = vunpack.c.0.s8 %v1836
    %v1838 = vlaneseq
    %v1839 = vshrl.u32 %v1838, 7
    %v1840 = vsub.s32 %v1837, %v1839
    %v1841 = vrot.slane %v1827, %v1840
    %v1842 = vcombine.low %v1834, %v1841
    %v1843 = vcombine.low %v1750, %v1752
    %v1844 = vcombine.low %v1791, %v1793
    %v1846 = vunpack.c.l.s4 1983009808
    %v1847 = vunpack.c.0.s8 %v1846
    %v1848 = vlaneseq
    %v1849 = vshrl.u32 %v1848, 7
    %v1850 = vsub.s32 %v1847, %v1849
    %v1851 = vrot.slane %v1843, %v1850
    %v1853 = vunpack.c.l.s4 1983009808
    %v1854 = vunpack.c.0.s8 %v1853
    %v1855 = vlaneseq
    %v1856 = vshrl.u32 %v1855, 7
    %v1857 = vsub.s32 %v1854, %v1856
    %v1858 = vrot.slane %v1844, %v1857
    %v1859 = vcombine.low %v1851, %v1858
    %1863 = vst [vmem:[#allocation8] sm:$0xff] %v1825
    %1864 = vst [vmem:[#allocation8 + $0x8] sm:$0xff] %v1842
    %1865 = vst [vmem:[#allocation8 + $0x10] sm:$0xff] %v1859
    // Predicated region
    $region34: #{tpu_custom_call.1} parent=1 // pred_check
      _
    $region35: #{tpu_custom_call.1} parent=1 // pred_check_branch
      %1867 = sbr.rel (0) target = $region37
    $region36: #{tpu_custom_call.1} parent=1 // pred_region
      %s1869 = ssub.s32 384, 384
      %1870 = vsyncadd [#allocation4], %s1869
      %s1872 = sshll.u32 [#allocation8], 4
      %s1873 = int_to_ptr.vmem [resolvable:$true] %s1872
      %1875 = dma.vmem_to_hbm [thread:$0]  %s1873, 384, %s5, [#allocation4]
    $region37: #{tpu_custom_call.1} parent=1 // pred_fallthru
      _
    // Predicated region
    $region38: #{tpu_custom_call.1} parent=1 // pred_check
      _
    $region39: #{tpu_custom_call.1} parent=1 // pred_check_branch
      %1877 = sbr.rel (0) target = $region41
    $region40: #{tpu_custom_call.1} parent=1 // pred_region
      %1878 = dma.done [#allocation4], 384
    $region41: #{tpu_custom_call.1} parent=1 // pred_fallthru
      _
    %1879 = vsyncpa [#allocation3], 1
    %1880 = vsyncpa [#allocation6], 1
    %1881 = vsyncpa [#allocation4], 1

// kernel: tpu_custom_call.1
$region0: #{tpu_custom_call.1}
  #allocation0 [shape = 'u32[]', space=smem, size = 0x4, offset = 0x4, fixed_abs, tag = 'smem constant byte address 0x4 - core index']
  #allocation1 [shape = 'u32[144,128]{1,0:T(1,128)}', space=vmem, size = 0x12000, scoped, tag = 'internal scratch']
  %s0 = inlined_call_operand.hbm [shape: f32[2,256], index: 0, kind: input, shape index: {}]
  %s1 = inlined_call_operand.hbm [shape: bf16[256,256], index: 1, kind: input, shape index: {}]
  %s2 = inlined_call_operand.vmem [shape: f32[1,256], index: 2, kind: input, shape index: {}]
  %s3 = inlined_call_operand.hbm [shape: bf16[256,1536], index: 3, kind: input, shape index: {}]
  %s4 = inlined_call_operand.vmem [shape: f32[1,1536], index: 4, kind: input, shape index: {}]
  %s5 = inlined_call_operand.hbm [shape: f32[2,1536], index: 5, kind: output, shape index: {}]
  %s6 = sld [smem:[#allocation0]]
  $region42: #{tpu_custom_call.1} parent=0
    _
  %s8 = ssub.s32 1, %s6
  %s9 = scalar_select 0, %s8, %s6
  $region1: #{tpu_custom_call.1} parent=0
    #allocation2 [shape = 'u8[2048]{0}', space=vmem, size = 0x800, scoped, tag = 'input window, operand 0, single buffered']
    #allocation3 [shape = 's32[1]{0}', space=sflag, size = 0x4, scoped, tag = 'scoped memory for tpu_custom_call.1']
    #allocation4 [shape = 's32[1]{0}', space=sflag, size = 0x4, scoped, tag = 'scoped memory for tpu_custom_call.1']
    #allocation5 [shape = 'u8[131072]{0}', space=vmem, size = 0x20000, scoped, tag = 'input window, operand 1, single buffered']
    #allocation6 [shape = 's32[1]{0}', space=sflag, size = 0x4, scoped, tag = 'scoped memory for tpu_custom_call.1']
    #allocation7 [shape = 'u8[786432]{0}', space=vmem, size = 0xc0000, scoped, tag = 'input window, operand 3, single buffered']
    #allocation8 [shape = 'u8[12288]{0}', space=vmem, size = 0x3000, scoped, tag = 'output window, operand 0, single buffered']
    %10 = vsyncpa [#allocation3], 0
    %11 = vsyncpa [#allocation6], 0
    %12 = vsyncpa [#allocation4], 0
    // Predicated region
    $region2: #{tpu_custom_call.1} parent=1 // pred_check
      _
    $region3: #{tpu_custom_call.1} parent=1 // pred_check_branch
      %14 = sbr.rel (0) target = $region5
    $region4: #{tpu_custom_call.1} parent=1 // pred_region
      %s16 = ssub.s32 64, 64
      %17 = vsyncadd [#allocation3], %s16
      %s19 = sshll.u32 [#allocation2], 4
      %s20 = int_to_ptr.vmem [resolvable:$true] %s19
      %22 = dma.hbm_to_vmem [thread:$0]  %s0, 64, %s20, [#allocation3]
    $region5: #{tpu_custom_call.1} parent=1 // pred_fallthru
      _
    // Predicated region
    $region6: #{tpu_custom_call.1} parent=1 // pred_check
      _
    $region7: #{tpu_custom_call.1} parent=1 // pred_check_branch
      %24 = sbr.rel (0) target = $region9
    $region8: #{tpu_custom_call.1} parent=1 // pred_region
      %s26 = ssub.s32 4096, 4096
      %27 = vsyncadd [#allocation6], %s26
      %s28 = sshll.u32 [#allocation5], 4
      %s29 = int_to_ptr.vmem [resolvable:$true] %s28
      %34 = dma.hbm_to_vmem [thread:$0]  %s1, 4096, %s29, [#allocation6], 128, 128, 8
    $region9: #{tpu_custom_call.1} parent=1 // pred_fallthru
      _
    // Predicated region
    $region10: #{tpu_custom_call.1} parent=1 // pred_check
      _
    $region11: #{tpu_custom_call.1} parent=1 // pred_check_branch
      %36 = sbr.rel (0) target = $region13
    $region12: #{tpu_custom_call.1} parent=1 // pred_region
      _
    $region13: #{tpu_custom_call.1} parent=1 // pred_fallthru
      _
    // Predicated region
    $region14: #{tpu_custom_call.1} parent=1 // pred_check
      _
    $region15: #{tpu_custom_call.1} parent=1 // pred_check_branch
      %38 = sbr.rel (0) target = $region17
    $region16: #{tpu_custom_call.1} parent=1 // pred_region
      %s40 = ssub.s32 24576, 24576
      %41 = vsyncadd [#allocation6], %s40
      %s42 = sshll.u32 [#allocation7], 4
      %s43 = int_to_ptr.vmem [resolvable:$true] %s42
      %48 = dma.hbm_to_vmem [thread:$0]  %s3, 24576, %s43, [#allocation6], 768, 768, 48
    $region17: #{tpu_custom_call.1} parent=1 // pred_fallthru
      _
    // Predicated region
    $region18: #{tpu_custom_call.1} parent=1 // pred_check
      _
    $region19: #{tpu_custom_call.1} parent=1 // pred_check_branch
      %50 = sbr.rel (0) target = $region21
    $region20: #{tpu_custom_call.1} parent=1 // pred_region
      _
    $region21: #{tpu_custom_call.1} parent=1 // pred_fallthru
      _
    // Predicated region
    $region22: #{tpu_custom_call.1} parent=1 // pred_check
      _
    $region23: #{tpu_custom_call.1} parent=1 // pred_check_branch
      %52 = sbr.rel (0) target = $region25
    $region24: #{tpu_custom_call.1} parent=1 // pred_region
      %53 = dma.done [#allocation3], 64
    $region25: #{tpu_custom_call.1} parent=1 // pred_fallthru
      _
    // Predicated region
    $region26: #{tpu_custom_call.1} parent=1 // pred_check
      _
    $region27: #{tpu_custom_call.1} parent=1 // pred_check_branch
      %55 = sbr.rel (0) target = $region29
    $region28: #{tpu_custom_call.1} parent=1 // pred_region
      %56 = dma.done [#allocation6], 4096
    $region29: #{tpu_custom_call.1} parent=1 // pred_fallthru
      _
    // Predicated region
    $region30: #{tpu_custom_call.1} parent=1 // pred_check
      _
    $region31: #{tpu_custom_call.1} parent=1 // pred_check_branch
      %58 = sbr.rel (0) target = $region33
    $region32: #{tpu_custom_call.1} parent=1 // pred_region
      %59 = dma.done [#allocation6], 24576
    $region33: #{tpu_custom_call.1} parent=1 // pred_fallthru
      _
    %v60 = vld [vmem:[#allocation2] sm:$0xf]
    %v63 = vunpack.c.l.s4 1983009808
    %v64 = vunpack.c.0.s8 %v63
    %v65 = vlaneseq
    %v66 = vshrl.u32 %v65, 7
    %v67 = vsub.s32 %v64, %v66
    %v68 = vrot.slane %v60, %v67
    %v69 = vcombine.high %v68, %v68
    %v72 = vpack.c.bf16 %v68, %v68
    %v73 = vpack.c.bf16 %v69, %v69
    %v74 = vld [vmem:[#allocation5] sm:$0xff]
    %v75 = vld [vmem:[#allocation5 + $0x8] sm:$0xff]
    %v76 = vld [vmem:[#allocation5 + $0x10] sm:$0xff]
    %v77 = vld [vmem:[#allocation5 + $0x18] sm:$0xff]
    %v78 = vld [vmem:[#allocation5 + $0x20] sm:$0xff]
    %v79 = vld [vmem:[#allocation5 + $0x28] sm:$0xff]
    %v80 = vld [vmem:[#allocation5 + $0x30] sm:$0xff]
    %v81 = vld [vmem:[#allocation5 + $0x38] sm:$0xff]
    %v82 = vld [vmem:[#allocation5 + $0x40] sm:$0xff]
    %v83 = vld [vmem:[#allocation5 + $0x48] sm:$0xff]
    %v84 = vld [vmem:[#allocation5 + $0x50] sm:$0xff]
    %v85 = vld [vmem:[#allocation5 + $0x58] sm:$0xff]
    %v86 = vld [vmem:[#allocation5 + $0x60] sm:$0xff]
    %v87 = vld [vmem:[#allocation5 + $0x68] sm:$0xff]
    %v88 = vld [vmem:[#allocation5 + $0x70] sm:$0xff]
    %v89 = vld [vmem:[#allocation5 + $0x78] sm:$0xff]
    %v90 = vld [vmem:[#allocation5 + $0x80] sm:$0xff]
    %v91 = vld [vmem:[#allocation5 + $0x88] sm:$0xff]
    %v92 = vld [vmem:[#allocation5 + $0x90] sm:$0xff]
    %v93 = vld [vmem:[#allocation5 + $0x98] sm:$0xff]
    %v94 = vld [vmem:[#allocation5 + $0xa0] sm:$0xff]
    %v95 = vld [vmem:[#allocation5 + $0xa8] sm:$0xff]
    %v96 = vld [vmem:[#allocation5 + $0xb0] sm:$0xff]
    %v97 = vld [vmem:[#allocation5 + $0xb8] sm:$0xff]
    %v98 = vld [vmem:[#allocation5 + $0xc0] sm:$0xff]
    %v99 = vld [vmem:[#allocation5 + $0xc8] sm:$0xff]
    %v100 = vld [vmem:[#allocation5 + $0xd0] sm:$0xff]
    %v101 = vld [vmem:[#allocation5 + $0xd8] sm:$0xff]
    %v102 = vld [vmem:[#allocation5 + $0xe0] sm:$0xff]
    %v103 = vld [vmem:[#allocation5 + $0xe8] sm:$0xff]
    %v104 = vld [vmem:[#allocation5 + $0xf0] sm:$0xff]
    %v105 = vld [vmem:[#allocation5 + $0xf8] sm:$0xff]
    %v106 = vld [vmem:[%s2] sm:$0x3]
    %v108 = vlaneseq
    %v109 = vshrl.u32 %v108, 7
    %v110 = vsub.s32 0, %v109
    %v111 = vrot.slane %v106, %v110
    %v112 = vlaneseq
    %v113 = vshrl.u32 %v112, 7
    %v114 = vsub.s32 1, %v113
    %v115 = vrot.slane %v106, %v114
    %v150 = vunpack.c.l.b16 %v74
    %v151 = vunpack.c.h.b16 %v74
    %v152 = vunpack.c.l.b16 %v75
    %v153 = vunpack.c.h.b16 %v75
    %v154 = vunpack.c.l.b16 %v76
    %v155 = vunpack.c.h.b16 %v76
    %v156 = vunpack.c.l.b16 %v77
    %v157 = vunpack.c.h.b16 %v77
    %v158 = vunpack.c.l.b16 %v78
    %v159 = vunpack.c.h.b16 %v78
    %v160 = vunpack.c.l.b16 %v79
    %v161 = vunpack.c.h.b16 %v79
    %v162 = vunpack.c.l.b16 %v80
    %v163 = vunpack.c.h.b16 %v80
    %v164 = vunpack.c.l.b16 %v81
    %v165 = vunpack.c.h.b16 %v81
    %v166 = vunpack.c.l.b16 %v82
    %v167 = vunpack.c.h.b16 %v82
    %v168 = vunpack.c.l.b16 %v83
    %v169 = vunpack.c.h.b16 %v83
    %v170 = vunpack.c.l.b16 %v84
    %v171 = vunpack.c.h.b16 %v84
    %v172 = vunpack.c.l.b16 %v85
    %v173 = vunpack.c.h.b16 %v85
    %v174 = vunpack.c.l.b16 %v86
    %v175 = vunpack.c.h.b16 %v86
    %v176 = vunpack.c.l.b16 %v87
    %v177 = vunpack.c.h.b16 %v87
    %v178 = vunpack.c.l.b16 %v88
    %v179 = vunpack.c.h.b16 %v88
    %v180 = vunpack.c.l.b16 %v89
    %v181 = vunpack.c.h.b16 %v89
    %v182 = vunpack.c.l.b16 %v90
    %v183 = vunpack.c.h.b16 %v90
    %v184 = vunpack.c.l.b16 %v91
    %v185 = vunpack.c.h.b16 %v91
    %v186 = vunpack.c.l.b16 %v92
    %v187 = vunpack.c.h.b16 %v92
    %v188 = vunpack.c.l.b16 %v93
    %v189 = vunpack.c.h.b16 %v93
    %v190 = vunpack.c.l.b16 %v94
    %v191 = vunpack.c.h.b16 %v94
    %v192 = vunpack.c.l.b16 %v95
    %v193 = vunpack.c.h.b16 %v95
    %v194 = vunpack.c.l.b16 %v96
    %v195 = vunpack.c.h.b16 %v96
    %v196 = vunpack.c.l.b16 %v97
    %v197 = vunpack.c.h.b16 %v97
    %v198 = vunpack.c.l.b16 %v98
    %v199 = vunpack.c.h.b16 %v98
    %v200 = vunpack.c.l.b16 %v99
    %v201 = vunpack.c.h.b16 %v99
    %v202 = vunpack.c.l.b16 %v100
    %v203 = vunpack.c.h.b16 %v100
    %v204 = vunpack.c.l.b16 %v101
    %v205 = vunpack.c.h.b16 %v101
    %v206 = vunpack.c.l.b16 %v102
    %v207 = vunpack.c.h.b16 %v102
    %v208 = vunpack.c.l.b16 %v103
    %v209 = vunpack.c.h.b16 %v103
    %v210 = vunpack.c.l.b16 %v104
    %v211 = vunpack.c.h.b16 %v104
    %v212 = vunpack.c.l.b16 %v105
    %v213 = vunpack.c.h.b16 %v105
    %v214 = vpack.c.b16 %v152, %v150
    %v215 = vpack.c.b16 %v153, %v151
    %v216 = vpack.c.b16 %v156, %v154
    %v217 = vpack.c.b16 %v157, %v155
    %v218 = vpack.c.b16 %v160, %v158
    %v219 = vpack.c.b16 %v161, %v159
    %v220 = vpack.c.b16 %v164, %v162
    %v221 = vpack.c.b16 %v165, %v163
    %v222 = vpack.c.b16 %v168, %v166
    %v223 = vpack.c.b16 %v169, %v167
    %v224 = vpack.c.b16 %v172, %v170
    %v225 = vpack.c.b16 %v173, %v171
    %v226 = vpack.c.b16 %v176, %v174
    %v227 = vpack.c.b16 %v177, %v175
    %v228 = vpack.c.b16 %v180, %v178
    %v229 = vpack.c.b16 %v181, %v179
    %v230 = vpack.c.b16 %v184, %v182
    %v231 = vpack.c.b16 %v185, %v183
    %v232 = vpack.c.b16 %v188, %v186
    %v233 = vpack.c.b16 %v189, %v187
    %v234 = vpack.c.b16 %v192, %v190
    %v235 = vpack.c.b16 %v193, %v191
    %v236 = vpack.c.b16 %v196, %v194
    %v237 = vpack.c.b16 %v197, %v195
    %v238 = vpack.c.b16 %v200, %v198
    %v239 = vpack.c.b16 %v201, %v199
    %v240 = vpack.c.b16 %v204, %v202
    %v241 = vpack.c.b16 %v205, %v203
    %v242 = vpack.c.b16 %v208, %v206
    %v243 = vpack.c.b16 %v209, %v207
    %v244 = vpack.c.b16 %v212, %v210
    %v245 = vpack.c.b16 %v213, %v211
    %278 = vmatprep.subr.bf16.mxu0 %v215
    %279 = vmatpush1.bf16.msra.mxu0 %v214
    %280 = vmatprep.subr.bf16.mxu0 %v217
    %281 = vmatpush1.bf16.msra.mxu0 %v216
    %282 = vmatprep.subr.bf16.mxu0 %v219
    %283 = vmatpush1.bf16.msra.mxu0 %v218
    %284 = vmatprep.subr.bf16.mxu0 %v221
    %285 = vmatpush1.bf16.msra.mxu0 %v220
    %286 = vmatprep.subr.bf16.mxu0 %v223
    %287 = vmatpush1.bf16.msra.mxu0 %v222
    %288 = vmatprep.subr.bf16.mxu0 %v225
    %289 = vmatpush1.bf16.msra.mxu0 %v224
    %290 = vmatprep.subr.bf16.mxu0 %v227
    %291 = vmatpush1.bf16.msra.mxu0 %v226
    %292 = vmatprep.subr.bf16.mxu0 %v229
    %293 = vmatpush1.bf16.msra.mxu0 %v228
    %294 = vmatprep.subr.bf16.mxu0 %v231
    %295 = vmatpush1.bf16.msra.mxu0 %v230
    %296 = vmatprep.subr.bf16.mxu0 %v233
    %297 = vmatpush1.bf16.msra.mxu0 %v232
    %298 = vmatprep.subr.bf16.mxu0 %v235
    %299 = vmatpush1.bf16.msra.mxu0 %v234
    %300 = vmatprep.subr.bf16.mxu0 %v237
    %301 = vmatpush1.bf16.msra.mxu0 %v236
    %302 = vmatprep.subr.bf16.mxu0 %v239
    %303 = vmatpush1.bf16.msra.mxu0 %v238
    %304 = vmatprep.subr.bf16.mxu0 %v241
    %305 = vmatpush1.bf16.msra.mxu0 %v240
    %306 = vmatprep.subr.bf16.mxu0 %v243
    %307 = vmatpush1.bf16.msra.mxu0 %v242
    %308 = vmatprep.subr.bf16.mxu0 %v245
    %309 = vmatpush1.bf16.msra.mxu0 %v244
    %310 = vmatprep.mubr.bf16.mxu0 %v73
    %311 = vmatmul.mubr.bf16.gmra.mrb[0].mxu0 %v72
    %v312 = vpop.f32.mrb[0].mxu0
    %v313 = vadd.f32 %v111, %v312
    %v314 = vpop.f32.mrb[0].mxu0
    %v315 = vadd.f32 %v115, %v314
    %v316 = vpop.f32.mrb[0].mxu0
    %v317 = vpop.f32.mrb[0].mxu0
    %318 = vdwg.mxu0
    %v319 = vxor.u32 %v313, 2147483648
    %v320 = vxor.u32 %v315, 2147483648
    %v321 = vmul.f32 %v319, 1.442695
    %v322 = vpow.pop %v321
    %v323 = vmul.f32 %v320, 1.442695
    %v324 = vpow.pop %v323
    %v325 = vadd.f32 %v322, 1.0
    %v326 = vadd.f32 %v324, 1.0
    %v327 = vrcp.pop %v325
    %v328 = vmul.f32 1.0, %v327
    %v329 = vrcp.pop %v326
    %v330 = vmul.f32 1.0, %v329
    %v331 = vmul.f32 %v313, %v328
    %v332 = vmul.f32 %v315, %v330
    %v333 = vpack.c.bf16 %v331, %v331
    %v334 = vpack.c.bf16 %v332, %v332
    %v335 = vld [vmem:[#allocation7] sm:$0xff]
    %v336 = vld [vmem:[#allocation7 + $0x8] sm:$0xff]
    %v337 = vld [vmem:[#allocation7 + $0x10] sm:$0xff]
    %v338 = vld [vmem:[#allocation7 + $0x18] sm:$0xff]
    %v339 = vld [vmem:[#allocation7 + $0x20] sm:$0xff]
    %v340 = vld [vmem:[#allocation7 + $0x28] sm:$0xff]
    %v341 = vld [vmem:[#allocation7 + $0x30] sm:$0xff]
    %v342 = vld [vmem:[#allocation7 + $0x38] sm:$0xff]
    %v343 = vld [vmem:[#allocation7 + $0x40] sm:$0xff]
    %v344 = vld [vmem:[#allocation7 + $0x48] sm:$0xff]
    %v345 = vld [vmem:[#allocation7 + $0x50] sm:$0xff]
    %v346 = vld [vmem:[#allocation7 + $0x58] sm:$0xff]
    %v347 = vld [vmem:[#allocation7 + $0x60] sm:$0xff]
    %v348 = vld [vmem:[#allocation7 + $0x68] sm:$0xff]
    %v349 = vld [vmem:[#allocation7 + $0x70] sm:$0xff]
    %v350 = vld [vmem:[#allocation7 + $0x78] sm:$0xff]
    %v351 = vld [vmem:[#allocation7 + $0x80] sm:$0xff]
    %v352 = vld [vmem:[#allocation7 + $0x88] sm:$0xff]
    %v353 = vld [vmem:[#allocation7 + $0x90] sm:$0xff]
    %v354 = vld [vmem:[#allocation7 + $0x98] sm:$0xff]
    %v355 = vld [vmem:[#allocation7 + $0xa0] sm:$0xff]
    %v356 = vld [vmem:[#allocation7 + $0xa8] sm:$0xff]
    %v357 = vld [vmem:[#allocation7 + $0xb0] sm:$0xff]
    %v358 = vld [vmem:[#allocation7 + $0xb8] sm:$0xff]
    %v359 = vld [vmem:[#allocation7 + $0xc0] sm:$0xff]
    %v360 = vld [vmem:[#allocation7 + $0xc8] sm:$0xff]
    %v361 = vld [vmem:[#allocation7 + $0xd0] sm:$0xff]
    %v362 = vld [vmem:[#allocation7 + $0xd8] sm:$0xff]
    %v363 = vld [vmem:[#allocation7 + $0xe0] sm:$0xff]
    %v364 = vld [vmem:[#allocation7 + $0xe8] sm:$0xff]
    %v365 = vld [vmem:[#allocation7 + $0xf0] sm:$0xff]
    %v366 = vld [vmem:[#allocation7 + $0xf8] sm:$0xff]
    %v367 = vld [vmem:[#allocation7 + $0x100] sm:$0xff]
    %v368 = vld [vmem:[#allocation7 + $0x108] sm:$0xff]
    %v369 = vld [vmem:[#allocation7 + $0x110] sm:$0xff]
    %v370 = vld [vmem:[#allocation7 + $0x118] sm:$0xff]
    %v371 = vld [vmem:[#allocation7 + $0x120] sm:$0xff]
    %v372 = vld [vmem:[#allocation7 + $0x128] sm:$0xff]
    %v373 = vld [vmem:[#allocation7 + $0x130] sm:$0xff]
    %v374 = vld [vmem:[#allocation7 + $0x138] sm:$0xff]
    %v375 = vld [vmem:[#allocation7 + $0x140] sm:$0xff]
    %v376 = vld [vmem:[#allocation7 + $0x148] sm:$0xff]
    %v377 = vld [vmem:[#allocation7 + $0x150] sm:$0xff]
    %v378 = vld [vmem:[#allocation7 + $0x158] sm:$0xff]
    %v379 = vld [vmem:[#allocation7 + $0x160] sm:$0xff]
    %v380 = vld [vmem:[#allocation7 + $0x168] sm:$0xff]
    %v381 = vld [vmem:[#allocation7 + $0x170] sm:$0xff]
    %v382 = vld [vmem:[#allocation7 + $0x178] sm:$0xff]
    %v383 = vld [vmem:[#allocation7 + $0x180] sm:$0xff]
    %v384 = vld [vmem:[#allocation7 + $0x188] sm:$0xff]
    %v385 = vld [vmem:[#allocation7 + $0x190] sm:$0xff]
    %v386 = vld [vmem:[#allocation7 + $0x198] sm:$0xff]
    %v387 = vld [vmem:[#allocation7 + $0x1a0] sm:$0xff]
    %v388 = vld [vmem:[#allocation7 + $0x1a8] sm:$0xff]
    %v389 = vld [vmem:[#allocation7 + $0x1b0] sm:$0xff]
    %v390 = vld [vmem:[#allocation7 + $0x1b8] sm:$0xff]
    %v391 = vld [vmem:[#allocation7 + $0x1c0] sm:$0xff]
    %v392 = vld [vmem:[#allocation7 + $0x1c8] sm:$0xff]
    %v393 = vld [vmem:[#allocation7 + $0x1d0] sm:$0xff]
    %v394 = vld [vmem:[#allocation7 + $0x1d8] sm:$0xff]
    %v395 = vld [vmem:[#allocation7 + $0x1e0] sm:$0xff]
    %v396 = vld [vmem:[#allocation7 + $0x1e8] sm:$0xff]
    %v397 = vld [vmem:[#allocation7 + $0x1f0] sm:$0xff]
    %v398 = vld [vmem:[#allocation7 + $0x1f8] sm:$0xff]
    %v399 = vld [vmem:[#allocation7 + $0x200] sm:$0xff]
    %v400 = vld [vmem:[#allocation7 + $0x208] sm:$0xff]
    %v401 = vld [vmem:[#allocation7 + $0x210] sm:$0xff]
    %v402 = vld [vmem:[#allocation7 + $0x218] sm:$0xff]
    %v403 = vld [vmem:[#allocation7 + $0x220] sm:$0xff]
    %v404 = vld [vmem:[#allocation7 + $0x228] sm:$0xff]
    %v405 = vld [vmem:[#allocation7 + $0x230] sm:$0xff]
    %v406 = vld [vmem:[#allocation7 + $0x238] sm:$0xff]
    %v407 = vld [vmem:[#allocation7 + $0x240] sm:$0xff]
    %v408 = vld [vmem:[#allocation7 + $0x248] sm:$0xff]
    %v409 = vld [vmem:[#allocation7 + $0x250] sm:$0xff]
    %v410 = vld [vmem:[#allocation7 + $0x258] sm:$0xff]
    %v411 = vld [vmem:[#allocation7 + $0x260] sm:$0xff]
    %v412 = vld [vmem:[#allocation7 + $0x268] sm:$0xff]
    %v413 = vld [vmem:[#allocation7 + $0x270] sm:$0xff]
    %v414 = vld [vmem:[#allocation7 + $0x278] sm:$0xff]
    %v415 = vld [vmem:[#allocation7 + $0x280] sm:$0xff]
    %v416 = vld [vmem:[#allocation7 + $0x288] sm:$0xff]
    %v417 = vld [vmem:[#allocation7 + $0x290] sm:$0xff]
    %v418 = vld [vmem:[#allocation7 + $0x298] sm:$0xff]
    %v419 = vld [vmem:[#allocation7 + $0x2a0] sm:$0xff]
    %v420 = vld [vmem:[#allocation7 + $0x2a8] sm:$0xff]
    %v421 = vld [vmem:[#allocation7 + $0x2b0] sm:$0xff]
    %v422 = vld [vmem:[#allocation7 + $0x2b8] sm:$0xff]
    %v423 = vld [vmem:[#allocation7 + $0x2c0] sm:$0xff]
    %v424 = vld [vmem:[#allocation7 + $0x2c8] sm:$0xff]
    %v425 = vld [vmem:[#allocation7 + $0x2d0] sm:$0xff]
    %v426 = vld [vmem:[#allocation7 + $0x2d8] sm:$0xff]
    %v427 = vld [vmem:[#allocation7 + $0x2e0] sm:$0xff]
    %v428 = vld [vmem:[#allocation7 + $0x2e8] sm:$0xff]
    %v429 = vld [vmem:[#allocation7 + $0x2f0] sm:$0xff]
    %v430 = vld [vmem:[#allocation7 + $0x2f8] sm:$0xff]
    %v431 = vld [vmem:[#allocation7 + $0x300] sm:$0xff]
    %v432 = vld [vmem:[#allocation7 + $0x308] sm:$0xff]
    %v433 = vld [vmem:[#allocation7 + $0x310] sm:$0xff]
    %v434 = vld [vmem:[#allocation7 + $0x318] sm:$0xff]
    %v435 = vld [vmem:[#allocation7 + $0x320] sm:$0xff]
    %v436 = vld [vmem:[#allocation7 + $0x328] sm:$0xff]
    %v437 = vld [vmem:[#allocation7 + $0x330] sm:$0xff]
    %v438 = vld [vmem:[#allocation7 + $0x338] sm:$0xff]
    %v439 = vld [vmem:[#allocation7 + $0x340] sm:$0xff]
    %v440 = vld [vmem:[#allocation7 + $0x348] sm:$0xff]
    %v441 = vld [vmem:[#allocation7 + $0x350] sm:$0xff]
    %v442 = vld [vmem:[#allocation7 + $0x358] sm:$0xff]
    %v443 = vld [vmem:[#allocation7 + $0x360] sm:$0xff]
    %v444 = vld [vmem:[#allocation7 + $0x368] sm:$0xff]
    %v445 = vld [vmem:[#allocation7 + $0x370] sm:$0xff]
    %v446 = vld [vmem:[#allocation7 + $0x378] sm:$0xff]
    %v447 = vld [vmem:[#allocation7 + $0x380] sm:$0xff]
    %v448 = vld [vmem:[#allocation7 + $0x388] sm:$0xff]
    %v449 = vld [vmem:[#allocation7 + $0x390] sm:$0xff]
    %v450 = vld [vmem:[#allocation7 + $0x398] sm:$0xff]
    %v451 = vld [vmem:[#allocation7 + $0x3a0] sm:$0xff]
    %v452 = vld [vmem:[#allocation7 + $0x3a8] sm:$0xff]
    %v453 = vld [vmem:[#allocation7 + $0x3b0] sm:$0xff]
    %v454 = vld [vmem:[#allocation7 + $0x3b8] sm:$0xff]
    %v455 = vld [vmem:[#allocation7 + $0x3c0] sm:$0xff]
    %v456 = vld [vmem:[#allocation7 + $0x3c8] sm:$0xff]
    %v457 = vld [vmem:[#allocation7 + $0x3d0] sm:$0xff]
    %v458 = vld [vmem:[#allocation7 + $0x3d8] sm:$0xff]
    %v459 = vld [vmem:[#allocation7 + $0x3e0] sm:$0xff]
    %v460 = vld [vmem:[#allocation7 + $0x3e8] sm:$0xff]
    %v461 = vld [vmem:[#allocation7 + $0x3f0] sm:$0xff]
    %v462 = vld [vmem:[#allocation7 + $0x3f8] sm:$0xff]
    %v463 = vld [vmem:[#allocation7 + $0x400] sm:$0xff]
    %v464 = vld [vmem:[#allocation7 + $0x408] sm:$0xff]
    %v465 = vld [vmem:[#allocation7 + $0x410] sm:$0xff]
    %v466 = vld [vmem:[#allocation7 + $0x418] sm:$0xff]
    %v467 = vld [vmem:[#allocation7 + $0x420] sm:$0xff]
    %v468 = vld [vmem:[#allocation7 + $0x428] sm:$0xff]
    %v469 = vld [vmem:[#allocation7 + $0x430] sm:$0xff]
    %v470 = vld [vmem:[#allocation7 + $0x438] sm:$0xff]
    %v471 = vld [vmem:[#allocation7 + $0x440] sm:$0xff]
    %v472 = vld [vmem:[#allocation7 + $0x448] sm:$0xff]
    %v473 = vld [vmem:[#allocation7 + $0x450] sm:$0xff]
    %v474 = vld [vmem:[#allocation7 + $0x458] sm:$0xff]
    %v475 = vld [vmem:[#allocation7 + $0x460] sm:$0xff]
    %v476 = vld [vmem:[#allocation7 + $0x468] sm:$0xff]
    %v477 = vld [vmem:[#allocation7 + $0x470] sm:$0xff]
    %v478 = vld [vmem:[#allocation7 + $0x478] sm:$0xff]
    %v479 = vld [vmem:[#allocation7 + $0x480] sm:$0xff]
    %v480 = vld [vmem:[#allocation7 + $0x488] sm:$0xff]
    %v481 = vld [vmem:[#allocation7 + $0x490] sm:$0xff]
    %v482 = vld [vmem:[#allocation7 + $0x498] sm:$0xff]
    %v483 = vld [vmem:[#allocation7 + $0x4a0] sm:$0xff]
    %v484 = vld [vmem:[#allocation7 + $0x4a8] sm:$0xff]
    %v485 = vld [vmem:[#allocation7 + $0x4b0] sm:$0xff]
    %v486 = vld [vmem:[#allocation7 + $0x4b8] sm:$0xff]
    %v487 = vld [vmem:[#allocation7 + $0x4c0] sm:$0xff]
    %v488 = vld [vmem:[#allocation7 + $0x4c8] sm:$0xff]
    %v489 = vld [vmem:[#allocation7 + $0x4d0] sm:$0xff]
    %v490 = vld [vmem:[#allocation7 + $0x4d8] sm:$0xff]
    %v491 = vld [vmem:[#allocation7 + $0x4e0] sm:$0xff]
    %v492 = vld [vmem:[#allocation7 + $0x4e8] sm:$0xff]
    %v493 = vld [vmem:[#allocation7 + $0x4f0] sm:$0xff]
    %v494 = vld [vmem:[#allocation7 + $0x4f8] sm:$0xff]
    %v495 = vld [vmem:[#allocation7 + $0x500] sm:$0xff]
    %v496 = vld [vmem:[#allocation7 + $0x508] sm:$0xff]
    %v497 = vld [vmem:[#allocation7 + $0x510] sm:$0xff]
    %v498 = vld [vmem:[#allocation7 + $0x518] sm:$0xff]
    %v499 = vld [vmem:[#allocation7 + $0x520] sm:$0xff]
    %v500 = vld [vmem:[#allocation7 + $0x528] sm:$0xff]
    %v501 = vld [vmem:[#allocation7 + $0x530] sm:$0xff]
    %v502 = vld [vmem:[#allocation7 + $0x538] sm:$0xff]
    %v503 = vld [vmem:[#allocation7 + $0x540] sm:$0xff]
    %v504 = vld [vmem:[#allocation7 + $0x548] sm:$0xff]
    %v505 = vld [vmem:[#allocation7 + $0x550] sm:$0xff]
    %v506 = vld [vmem:[#allocation7 + $0x558] sm:$0xff]
    %v507 = vld [vmem:[#allocation7 + $0x560] sm:$0xff]
    %v508 = vld [vmem:[#allocation7 + $0x568] sm:$0xff]
    %v509 = vld [vmem:[#allocation7 + $0x570] sm:$0xff]
    %v510 = vld [vmem:[#allocation7 + $0x578] sm:$0xff]
    %v511 = vld [vmem:[#allocation7 + $0x580] sm:$0xff]
    %v512 = vld [vmem:[#allocation7 + $0x588] sm:$0xff]
    %v513 = vld [vmem:[#allocation7 + $0x590] sm:$0xff]
    %v514 = vld [vmem:[#allocation7 + $0x598] sm:$0xff]
    %v515 = vld [vmem:[#allocation7 + $0x5a0] sm:$0xff]
    %v516 = vld [vmem:[#allocation7 + $0x5a8] sm:$0xff]
    %v517 = vld [vmem:[#allocation7 + $0x5b0] sm:$0xff]
    %v518 = vld [vmem:[#allocation7 + $0x5b8] sm:$0xff]
    %v519 = vld [vmem:[#allocation7 + $0x5c0] sm:$0xff]
    %v520 = vld [vmem:[#allocation7 + $0x5c8] sm:$0xff]
    %v521 = vld [vmem:[#allocation7 + $0x5d0] sm:$0xff]
    %v522 = vld [vmem:[#allocation7 + $0x5d8] sm:$0xff]
    %v523 = vld [vmem:[#allocation7 + $0x5e0] sm:$0xff]
    %v524 = vld [vmem:[#allocation7 + $0x5e8] sm:$0xff]
    %v525 = vld [vmem:[#allocation7 + $0x5f0] sm:$0xff]
    %v526 = vld [vmem:[#allocation7 + $0x5f8] sm:$0xff]
    %v527 = vld [vmem:[%s4] sm:$0xff]
    %v528 = vld [vmem:[%s4 + $0x8] sm:$0xf]
    %v531 = vlaneseq
    %v532 = vshrl.u32 %v531, 7
    %v533 = vsub.s32 0, %v532
    %v534 = vrot.slane %v527, %v533
    %v535 = vlaneseq
    %v536 = vshrl.u32 %v535, 7
    %v537 = vsub.s32 1, %v536
    %v538 = vrot.slane %v527, %v537
    %v539 = vlaneseq
    %v540 = vshrl.u32 %v539, 7
    %v541 = vsub.s32 2, %v540
    %v542 = vrot.slane %v527, %v541
    %v543 = vlaneseq
    %v544 = vshrl.u32 %v543, 7
    %v545 = vsub.s32 3, %v544
    %v546 = vrot.slane %v527, %v545
    %v547 = vlaneseq
    %v548 = vshrl.u32 %v547, 7
    %v549 = vsub.s32 4, %v548
    %v550 = vrot.slane %v527, %v549
    %v551 = vlaneseq
    %v552 = vshrl.u32 %v551, 7
    %v553 = vsub.s32 5, %v552
    %v554 = vrot.slane %v527, %v553
    %v555 = vlaneseq
    %v556 = vshrl.u32 %v555, 7
    %v557 = vsub.s32 6, %v556
    %v558 = vrot.slane %v527, %v557
    %v559 = vlaneseq
    %v560 = vshrl.u32 %v559, 7
    %v561 = vsub.s32 7, %v560
    %v562 = vrot.slane %v527, %v561
    %v563 = vlaneseq
    %v564 = vshrl.u32 %v563, 7
    %v565 = vsub.s32 0, %v564
    %v566 = vrot.slane %v528, %v565
    %v567 = vlaneseq
    %v568 = vshrl.u32 %v567, 7
    %v569 = vsub.s32 1, %v568
    %v570 = vrot.slane %v528, %v569
    %v571 = vlaneseq
    %v572 = vshrl.u32 %v571, 7
    %v573 = vsub.s32 2, %v572
    %v574 = vrot.slane %v528, %v573
    %v575 = vlaneseq
    %v576 = vshrl.u32 %v575, 7
    %v577 = vsub.s32 3, %v576
    %v578 = vrot.slane %v528, %v577
    %v783 = vunpack.c.l.b16 %v335
    %v784 = vunpack.c.h.b16 %v335
    %v785 = vunpack.c.l.b16 %v336
    %v786 = vunpack.c.h.b16 %v336
    %v787 = vunpack.c.l.b16 %v337
    %v788 = vunpack.c.h.b16 %v337
    %v789 = vunpack.c.l.b16 %v338
    %v790 = vunpack.c.h.b16 %v338
    %v791 = vunpack.c.l.b16 %v339
    %v792 = vunpack.c.h.b16 %v339
    %v793 = vunpack.c.l.b16 %v340
    %v794 = vunpack.c.h.b16 %v340
    %v795 = vunpack.c.l.b16 %v341
    %v796 = vunpack.c.h.b16 %v341
    %v797 = vunpack.c.l.b16 %v342
    %v798 = vunpack.c.h.b16 %v342
    %v799 = vunpack.c.l.b16 %v343
    %v800 = vunpack.c.h.b16 %v343
    %v801 = vunpack.c.l.b16 %v344
    %v802 = vunpack.c.h.b16 %v344
    %v803 = vunpack.c.l.b16 %v345
    %v804 = vunpack.c.h.b16 %v345
    %v805 = vunpack.c.l.b16 %v346
    %v806 = vunpack.c.h.b16 %v346
    %v807 = vunpack.c.l.b16 %v347
    %v808 = vunpack.c.h.b16 %v347
    %v809 = vunpack.c.l.b16 %v348
    %v810 = vunpack.c.h.b16 %v348
    %v811 = vunpack.c.l.b16 %v349
    %v812 = vunpack.c.h.b16 %v349
    %v813 = vunpack.c.l.b16 %v350
    %v814 = vunpack.c.h.b16 %v350
    %v815 = vunpack.c.l.b16 %v351
    %v816 = vunpack.c.h.b16 %v351
    %v817 = vunpack.c.l.b16 %v352
    %v818 = vunpack.c.h.b16 %v352
    %v819 = vunpack.c.l.b16 %v353
    %v820 = vunpack.c.h.b16 %v353
    %v821 = vunpack.c.l.b16 %v354
    %v822 = vunpack.c.h.b16 %v354
    %v823 = vunpack.c.l.b16 %v355
    %v824 = vunpack.c.h.b16 %v355
    %v825 = vunpack.c.l.b16 %v356
    %v826 = vunpack.c.h.b16 %v356
    %v827 = vunpack.c.l.b16 %v357
    %v828 = vunpack.c.h.b16 %v357
    %v829 = vunpack.c.l.b16 %v358
    %v830 = vunpack.c.h.b16 %v358
    %v831 = vunpack.c.l.b16 %v359
    %v832 = vunpack.c.h.b16 %v359
    %v833 = vunpack.c.l.b16 %v360
    %v834 = vunpack.c.h.b16 %v360
    %v835 = vunpack.c.l.b16 %v361
    %v836 = vunpack.c.h.b16 %v361
    %v837 = vunpack.c.l.b16 %v362
    %v838 = vunpack.c.h.b16 %v362
    %v839 = vunpack.c.l.b16 %v363
    %v840 = vunpack.c.h.b16 %v363
    %v841 = vunpack.c.l.b16 %v364
    %v842 = vunpack.c.h.b16 %v364
    %v843 = vunpack.c.l.b16 %v365
    %v844 = vunpack.c.h.b16 %v365
    %v845 = vunpack.c.l.b16 %v366
    %v846 = vunpack.c.h.b16 %v366
    %v847 = vunpack.c.l.b16 %v367
    %v848 = vunpack.c.h.b16 %v367
    %v849 = vunpack.c.l.b16 %v368
    %v850 = vunpack.c.h.b16 %v368
    %v851 = vunpack.c.l.b16 %v369
    %v852 = vunpack.c.h.b16 %v369
    %v853 = vunpack.c.l.b16 %v370
    %v854 = vunpack.c.h.b16 %v370
    %v855 = vunpack.c.l.b16 %v371
    %v856 = vunpack.c.h.b16 %v371
    %v857 = vunpack.c.l.b16 %v372
    %v858 = vunpack.c.h.b16 %v372
    %v859 = vunpack.c.l.b16 %v373
    %v860 = vunpack.c.h.b16 %v373
    %v861 = vunpack.c.l.b16 %v374
    %v862 = vunpack.c.h.b16 %v374
    %v863 = vunpack.c.l.b16 %v375
    %v864 = vunpack.c.h.b16 %v375
    %v865 = vunpack.c.l.b16 %v376
    %v866 = vunpack.c.h.b16 %v376
    %v867 = vunpack.c.l.b16 %v377
    %v868 = vunpack.c.h.b16 %v377
    %v869 = vunpack.c.l.b16 %v378
    %v870 = vunpack.c.h.b16 %v378
    %v871 = vunpack.c.l.b16 %v379
    %v872 = vunpack.c.h.b16 %v379
    %v873 = vunpack.c.l.b16 %v380
    %v874 = vunpack.c.h.b16 %v380
    %v875 = vunpack.c.l.b16 %v381
    %v876 = vunpack.c.h.b16 %v381
    %v877 = vunpack.c.l.b16 %v382
    %v878 = vunpack.c.h.b16 %v382
    %v879 = vunpack.c.l.b16 %v383
    %v880 = vunpack.c.h.b16 %v383
    %v881 = vunpack.c.l.b16 %v384
    %v882 = vunpack.c.h.b16 %v384
    %v883 = vunpack.c.l.b16 %v385
    %v884 = vunpack.c.h.b16 %v385
    %v885 = vunpack.c.l.b16 %v386
    %v886 = vunpack.c.h.b16 %v386
    %v887 = vunpack.c.l.b16 %v387
    %v888 = vunpack.c.h.b16 %v387
    %v889 = vunpack.c.l.b16 %v388
    %v890 = vunpack.c.h.b16 %v388
    %v891 = vunpack.c.l.b16 %v389
    %v892 = vunpack.c.h.b16 %v389
    %v893 = vunpack.c.l.b16 %v390
    %v894 = vunpack.c.h.b16 %v390
    %v895 = vunpack.c.l.b16 %v391
    %v896 = vunpack.c.h.b16 %v391
    %v897 = vunpack.c.l.b16 %v392
    %v898 = vunpack.c.h.b16 %v392
    %v899 = vunpack.c.l.b16 %v393
    %v900 = vunpack.c.h.b16 %v393
    %v901 = vunpack.c.l.b16 %v394
    %v902 = vunpack.c.h.b16 %v394
    %v903 = vunpack.c.l.b16 %v395
    %v904 = vunpack.c.h.b16 %v395
    %v905 = vunpack.c.l.b16 %v396
    %v906 = vunpack.c.h.b16 %v396
    %v907 = vunpack.c.l.b16 %v397
    %v908 = vunpack.c.h.b16 %v397
    %v909 = vunpack.c.l.b16 %v398
    %v910 = vunpack.c.h.b16 %v398
    %v911 = vunpack.c.l.b16 %v399
    %v912 = vunpack.c.h.b16 %v399
    %v913 = vunpack.c.l.b16 %v400
    %v914 = vunpack.c.h.b16 %v400
    %v915 = vunpack.c.l.b16 %v401
    %v916 = vunpack.c.h.b16 %v401
    %v917 = vunpack.c.l.b16 %v402
    %v918 = vunpack.c.h.b16 %v402
    %v919 = vunpack.c.l.b16 %v403
    %v920 = vunpack.c.h.b16 %v403
    %v921 = vunpack.c.l.b16 %v404
    %v922 = vunpack.c.h.b16 %v404
    %v923 = vunpack.c.l.b16 %v405
    %v924 = vunpack.c.h.b16 %v405
    %v925 = vunpack.c.l.b16 %v406
    %v926 = vunpack.c.h.b16 %v406
    %v927 = vunpack.c.l.b16 %v407
    %v928 = vunpack.c.h.b16 %v407
    %v929 = vunpack.c.l.b16 %v408
    %v930 = vunpack.c.h.b16 %v408
    %v931 = vunpack.c.l.b16 %v409
    %v932 = vunpack.c.h.b16 %v409
    %v933 = vunpack.c.l.b16 %v410
    %v934 = vunpack.c.h.b16 %v410
    %v935 = vunpack.c.l.b16 %v411
    %v936 = vunpack.c.h.b16 %v411
    %v937 = vunpack.c.l.b16 %v412
    %v938 = vunpack.c.h.b16 %v412
    %v939 = vunpack.c.l.b16 %v413
    %v940 = vunpack.c.h.b16 %v413
    %v941 = vunpack.c.l.b16 %v414
    %v942 = vunpack.c.h.b16 %v414
    %v943 = vunpack.c.l.b16 %v415
    %v944 = vunpack.c.h.b16 %v415
    %v945 = vunpack.c.l.b16 %v416
    %v946 = vunpack.c.h.b16 %v416
    %v947 = vunpack.c.l.b16 %v417
    %v948 = vunpack.c.h.b16 %v417
    %v949 = vunpack.c.l.b16 %v418
    %v950 = vunpack.c.h.b16 %v418
    %v951 = vunpack.c.l.b16 %v419
    %v952 = vunpack.c.h.b16 %v419
    %v953 = vunpack.c.l.b16 %v420
    %v954 = vunpack.c.h.b16 %v420
    %v955 = vunpack.c.l.b16 %v421
    %v956 = vunpack.c.h.b16 %v421
    %v957 = vunpack.c.l.b16 %v422
    %v958 = vunpack.c.h.b16 %v422
    %v959 = vunpack.c.l.b16 %v423
    %v960 = vunpack.c.h.b16 %v423
    %v961 = vunpack.c.l.b16 %v424
    %v962 = vunpack.c.h.b16 %v424
    %v963 = vunpack.c.l.b16 %v425
    %v964 = vunpack.c.h.b16 %v425
    %v965 = vunpack.c.l.b16 %v426
    %v966 = vunpack.c.h.b16 %v426
    %v967 = vunpack.c.l.b16 %v427
    %v968 = vunpack.c.h.b16 %v427
    %v969 = vunpack.c.l.b16 %v428
    %v970 = vunpack.c.h.b16 %v428
    %v971 = vunpack.c.l.b16 %v429
    %v972 = vunpack.c.h.b16 %v429
    %v973 = vunpack.c.l.b16 %v430
    %v974 = vunpack.c.h.b16 %v430
    %v975 = vunpack.c.l.b16 %v431
    %v976 = vunpack.c.h.b16 %v431
    %v977 = vunpack.c.l.b16 %v432
    %v978 = vunpack.c.h.b16 %v432
    %v979 = vunpack.c.l.b16 %v433
    %v980 = vunpack.c.h.b16 %v433
    %v981 = vunpack.c.l.b16 %v434
    %v982 = vunpack.c.h.b16 %v434
    %v983 = vunpack.c.l.b16 %v435
    %v984 = vunpack.c.h.b16 %v435
    %v985 = vunpack.c.l.b16 %v436
    %v986 = vunpack.c.h.b16 %v436
    %v987 = vunpack.c.l.b16 %v437
    %v988 = vunpack.c.h.b16 %v437
    %v989 = vunpack.c.l.b16 %v438
    %v990 = vunpack.c.h.b16 %v438
    %v991 = vunpack.c.l.b16 %v439
    %v992 = vunpack.c.h.b16 %v439
    %v993 = vunpack.c.l.b16 %v440
    %v994 = vunpack.c.h.b16 %v440
    %v995 = vunpack.c.l.b16 %v441
    %v996 = vunpack.c.h.b16 %v441
    %v997 = vunpack.c.l.b16 %v442
    %v998 = vunpack.c.h.b16 %v442
    %v999 = vunpack.c.l.b16 %v443
    %v1000 = vunpack.c.h.b16 %v443
    %v1001 = vunpack.c.l.b16 %v444
    %v1002 = vunpack.c.h.b16 %v444
    %v1003 = vunpack.c.l.b16 %v445
    %v1004 = vunpack.c.h.b16 %v445
    %v1005 = vunpack.c.l.b16 %v446
    %v1006 = vunpack.c.h.b16 %v446
    %v1007 = vunpack.c.l.b16 %v447
    %v1008 = vunpack.c.h.b16 %v447
    %v1009 = vunpack.c.l.b16 %v448
    %v1010 = vunpack.c.h.b16 %v448
    %v1011 = vunpack.c.l.b16 %v449
    %v1012 = vunpack.c.h.b16 %v449
    %v1013 = vunpack.c.l.b16 %v450
    %v1014 = vunpack.c.h.b16 %v450
    %v1015 = vunpack.c.l.b16 %v451
    %v1016 = vunpack.c.h.b16 %v451
    %v1017 = vunpack.c.l.b16 %v452
    %v1018 = vunpack.c.h.b16 %v452
    %v1019 = vunpack.c.l.b16 %v453
    %v1020 = vunpack.c.h.b16 %v453
    %v1021 = vunpack.c.l.b16 %v454
    %v1022 = vunpack.c.h.b16 %v454
    %v1023 = vunpack.c.l.b16 %v455
    %v1024 = vunpack.c.h.b16 %v455
    %v1025 = vunpack.c.l.b16 %v456
    %v1026 = vunpack.c.h.b16 %v456
    %v1027 = vunpack.c.l.b16 %v457
    %v1028 = vunpack.c.h.b16 %v457
    %v1029 = vunpack.c.l.b16 %v458
    %v1030 = vunpack.c.h.b16 %v458
    %v1031 = vunpack.c.l.b16 %v459
    %v1032 = vunpack.c.h.b16 %v459
    %v1033 = vunpack.c.l.b16 %v460
    %v1034 = vunpack.c.h.b16 %v460
    %v1035 = vunpack.c.l.b16 %v461
    %v1036 = vunpack.c.h.b16 %v461
    %v1037 = vunpack.c.l.b16 %v462
    %v1038 = vunpack.c.h.b16 %v462
    %v1039 = vunpack.c.l.b16 %v463
    %v1040 = vunpack.c.h.b16 %v463
    %v1041 = vunpack.c.l.b16 %v464
    %v1042 = vunpack.c.h.b16 %v464
    %v1043 = vunpack.c.l.b16 %v465
    %v1044 = vunpack.c.h.b16 %v465
    %v1045 = vunpack.c.l.b16 %v466
    %v1046 = vunpack.c.h.b16 %v466
    %v1047 = vunpack.c.l.b16 %v467
    %v1048 = vunpack.c.h.b16 %v467
    %v1049 = vunpack.c.l.b16 %v468
    %v1050 = vunpack.c.h.b16 %v468
    %v1051 = vunpack.c.l.b16 %v469
    %v1052 = vunpack.c.h.b16 %v469
    %v1053 = vunpack.c.l.b16 %v470
    %v1054 = vunpack.c.h.b16 %v470
    %v1055 = vunpack.c.l.b16 %v471
    %v1056 = vunpack.c.h.b16 %v471
    %v1057 = vunpack.c.l.b16 %v472
    %v1058 = vunpack.c.h.b16 %v472
    %v1059 = vunpack.c.l.b16 %v473
    %v1060 = vunpack.c.h.b16 %v473
    %v1061 = vunpack.c.l.b16 %v474
    %v1062 = vunpack.c.h.b16 %v474
    %v1063 = vunpack.c.l.b16 %v475
    %v1064 = vunpack.c.h.b16 %v475
    %v1065 = vunpack.c.l.b16 %v476
    %v1066 = vunpack.c.h.b16 %v476
    %v1067 = vunpack.c.l.b16 %v477
    %v1068 = vunpack.c.h.b16 %v477
    %v1069 = vunpack.c.l.b16 %v478
    %v1070 = vunpack.c.h.b16 %v478
    %v1071 = vunpack.c.l.b16 %v479
    %v1072 = vunpack.c.h.b16 %v479
    %v1073 = vunpack.c.l.b16 %v480
    %v1074 = vunpack.c.h.b16 %v480
    %v1075 = vunpack.c.l.b16 %v481
    %v1076 = vunpack.c.h.b16 %v481
    %v1077 = vunpack.c.l.b16 %v482
    %v1078 = vunpack.c.h.b16 %v482
    %v1079 = vunpack.c.l.b16 %v483
    %v1080 = vunpack.c.h.b16 %v483
    %v1081 = vunpack.c.l.b16 %v484
    %v1082 = vunpack.c.h.b16 %v484
    %v1083 = vunpack.c.l.b16 %v485
    %v1084 = vunpack.c.h.b16 %v485
    %v1085 = vunpack.c.l.b16 %v486
    %v1086 = vunpack.c.h.b16 %v486
    %v1087 = vunpack.c.l.b16 %v487
    %v1088 = vunpack.c.h.b16 %v487
    %v1089 = vunpack.c.l.b16 %v488
    %v1090 = vunpack.c.h.b16 %v488
    %v1091 = vunpack.c.l.b16 %v489
    %v1092 = vunpack.c.h.b16 %v489
    %v1093 = vunpack.c.l.b16 %v490
    %v1094 = vunpack.c.h.b16 %v490
    %v1095 = vunpack.c.l.b16 %v491
    %v1096 = vunpack.c.h.b16 %v491
    %v1097 = vunpack.c.l.b16 %v492
    %v1098 = vunpack.c.h.b16 %v492
    %v1099 = vunpack.c.l.b16 %v493
    %v1100 = vunpack.c.h.b16 %v493
    %v1101 = vunpack.c.l.b16 %v494
    %v1102 = vunpack.c.h.b16 %v494
    %v1103 = vunpack.c.l.b16 %v495
    %v1104 = vunpack.c.h.b16 %v495
    %v1105 = vunpack.c.l.b16 %v496
    %v1106 = vunpack.c.h.b16 %v496
    %v1107 = vunpack.c.l.b16 %v497
    %v1108 = vunpack.c.h.b16 %v497
    %v1109 = vunpack.c.l.b16 %v498
    %v1110 = vunpack.c.h.b16 %v498
    %v1111 = vunpack.c.l.b16 %v499
    %v1112 = vunpack.c.h.b16 %v499
    %v1113 = vunpack.c.l.b16 %v500
    %v1114 = vunpack.c.h.b16 %v500
    %v1115 = vunpack.c.l.b16 %v501
    %v1116 = vunpack.c.h.b16 %v501
    %v1117 = vunpack.c.l.b16 %v502
    %v1118 = vunpack.c.h.b16 %v502
    %v1119 = vunpack.c.l.b16 %v503
    %v1120 = vunpack.c.h.b16 %v503
    %v1121 = vunpack.c.l.b16 %v504
    %v1122 = vunpack.c.h.b16 %v504
    %v1123 = vunpack.c.l.b16 %v505
    %v1124 = vunpack.c.h.b16 %v505
    %v1125 = vunpack.c.l.b16 %v506
    %v1126 = vunpack.c.h.b16 %v506
    %v1127 = vunpack.c.l.b16 %v507
    %v1128 = vunpack.c.h.b16 %v507
    %v1129 = vunpack.c.l.b16 %v508
    %v1130 = vunpack.c.h.b16 %v508
    %v1131 = vunpack.c.l.b16 %v509
    %v1132 = vunpack.c.h.b16 %v509
    %v1133 = vunpack.c.l.b16 %v510
    %v1134 = vunpack.c.h.b16 %v510
    %v1135 = vunpack.c.l.b16 %v511
    %v1136 = vunpack.c.h.b16 %v511
    %v1137 = vunpack.c.l.b16 %v512
    %v1138 = vunpack.c.h.b16 %v512
    %v1139 = vunpack.c.l.b16 %v513
    %v1140 = vunpack.c.h.b16 %v513
    %v1141 = vunpack.c.l.b16 %v514
    %v1142 = vunpack.c.h.b16 %v514
    %v1143 = vunpack.c.l.b16 %v515
    %v1144 = vunpack.c.h.b16 %v515
    %v1145 = vunpack.c.l.b16 %v516
    %v1146 = vunpack.c.h.b16 %v516
    %v1147 = vunpack.c.l.b16 %v517
    %v1148 = vunpack.c.h.b16 %v517
    %v1149 = vunpack.c.l.b16 %v518
    %v1150 = vunpack.c.h.b16 %v518
    %v1151 = vunpack.c.l.b16 %v519
    %v1152 = vunpack.c.h.b16 %v519
    %v1153 = vunpack.c.l.b16 %v520
    %v1154 = vunpack.c.h.b16 %v520
    %v1155 = vunpack.c.l.b16 %v521
    %v1156 = vunpack.c.h.b16 %v521
    %v1157 = vunpack.c.l.b16 %v522
    %v1158 = vunpack.c.h.b16 %v522
    %v1159 = vunpack.c.l.b16 %v523
    %v1160 = vunpack.c.h.b16 %v523
    %v1161 = vunpack.c.l.b16 %v524
    %v1162 = vunpack.c.h.b16 %v524
    %v1163 = vunpack.c.l.b16 %v525
    %v1164 = vunpack.c.h.b16 %v525
    %v1165 = vunpack.c.l.b16 %v526
    %v1166 = vunpack.c.h.b16 %v526
    %v1167 = vpack.c.b16 %v795, %v783
    %v1168 = vpack.c.b16 %v796, %v784
    %v1169 = vpack.c.b16 %v797, %v785
    %v1170 = vpack.c.b16 %v798, %v786
    %v1171 = vpack.c.b16 %v799, %v787
    %v1172 = vpack.c.b16 %v800, %v788
    %v1173 = vpack.c.b16 %v801, %v789
    %v1174 = vpack.c.b16 %v802, %v790
    %v1175 = vpack.c.b16 %v803, %v791
    %v1176 = vpack.c.b16 %v804, %v792
    %v1177 = vpack.c.b16 %v805, %v793
    %v1178 = vpack.c.b16 %v806, %v794
    %v1179 = vpack.c.b16 %v819, %v807
    %v1180 = vpack.c.b16 %v820, %v808
    %v1181 = vpack.c.b16 %v821, %v809
    %v1182 = vpack.c.b16 %v822, %v810
    %v1183 = vpack.c.b16 %v823, %v811
    %v1184 = vpack.c.b16 %v824, %v812
    %v1185 = vpack.c.b16 %v825, %v813
    %v1186 = vpack.c.b16 %v826, %v814
    %v1187 = vpack.c.b16 %v827, %v815
    %v1188 = vpack.c.b16 %v828, %v816
    %v1189 = vpack.c.b16 %v829, %v817
    %v1190 = vpack.c.b16 %v830, %v818
    %v1191 = vpack.c.b16 %v843, %v831
    %v1192 = vpack.c.b16 %v844, %v832
    %v1193 = vpack.c.b16 %v845, %v833
    %v1194 = vpack.c.b16 %v846, %v834
    %v1195 = vpack.c.b16 %v847, %v835
    %v1196 = vpack.c.b16 %v848, %v836
    %v1197 = vpack.c.b16 %v849, %v837
    %v1198 = vpack.c.b16 %v850, %v838
    %v1199 = vpack.c.b16 %v851, %v839
    %v1200 = vpack.c.b16 %v852, %v840
    %v1201 = vpack.c.b16 %v853, %v841
    %v1202 = vpack.c.b16 %v854, %v842
    %v1203 = vpack.c.b16 %v867, %v855
    %v1204 = vpack.c.b16 %v868, %v856
    %v1205 = vpack.c.b16 %v869, %v857
    %v1206 = vpack.c.b16 %v870, %v858
    %v1207 = vpack.c.b16 %v871, %v859
    %v1208 = vpack.c.b16 %v872, %v860
    %v1209 = vpack.c.b16 %v873, %v861
    %v1210 = vpack.c.b16 %v874, %v862
    %v1211 = vpack.c.b16 %v875, %v863
    %v1212 = vpack.c.b16 %v876, %v864
    %v1213 = vpack.c.b16 %v877, %v865
    %v1214 = vpack.c.b16 %v878, %v866
    %v1215 = vpack.c.b16 %v891, %v879
    %v1216 = vpack.c.b16 %v892, %v880
    %v1217 = vpack.c.b16 %v893, %v881
    %v1218 = vpack.c.b16 %v894, %v882
    %v1219 = vpack.c.b16 %v895, %v883
    %v1220 = vpack.c.b16 %v896, %v884
    %v1221 = vpack.c.b16 %v897, %v885
    %v1222 = vpack.c.b16 %v898, %v886
    %v1223 = vpack.c.b16 %v899, %v887
    %v1224 = vpack.c.b16 %v900, %v888
    %v1225 = vpack.c.b16 %v901, %v889
    %v1226 = vpack.c.b16 %v902, %v890
    %v1227 = vpack.c.b16 %v915, %v903
    %v1228 = vpack.c.b16 %v916, %v904
    %v1229 = vpack.c.b16 %v917, %v905
    %v1230 = vpack.c.b16 %v918, %v906
    %v1231 = vpack.c.b16 %v919, %v907
    %v1232 = vpack.c.b16 %v920, %v908
    %v1233 = vpack.c.b16 %v921, %v909
    %v1234 = vpack.c.b16 %v922, %v910
    %v1235 = vpack.c.b16 %v923, %v911
    %v1236 = vpack.c.b16 %v924, %v912
    %v1237 = vpack.c.b16 %v925, %v913
    %v1238 = vpack.c.b16 %v926, %v914
    %v1239 = vpack.c.b16 %v939, %v927
    %v1240 = vpack.c.b16 %v940, %v928
    %v1241 = vpack.c.b16 %v941, %v929
    %v1242 = vpack.c.b16 %v942, %v930
    %v1243 = vpack.c.b16 %v943, %v931
    %v1244 = vpack.c.b16 %v944, %v932
    %v1245 = vpack.c.b16 %v945, %v933
    %v1246 = vpack.c.b16 %v946, %v934
    %v1247 = vpack.c.b16 %v947, %v935
    %v1248 = vpack.c.b16 %v948, %v936
    %v1249 = vpack.c.b16 %v949, %v937
    %v1250 = vpack.c.b16 %v950, %v938
    %v1251 = vpack.c.b16 %v963, %v951
    %v1252 = vpack.c.b16 %v964, %v952
    %v1253 = vpack.c.b16 %v965, %v953
    %v1254 = vpack.c.b16 %v966, %v954
    %v1255 = vpack.c.b16 %v967, %v955
    %v1256 = vpack.c.b16 %v968, %v956
    %v1257 = vpack.c.b16 %v969, %v957
    %v1258 = vpack.c.b16 %v970, %v958
    %v1259 = vpack.c.b16 %v971, %v959
    %v1260 = vpack.c.b16 %v972, %v960
    %v1261 = vpack.c.b16 %v973, %v961
    %v1262 = vpack.c.b16 %v974, %v962
    %v1263 = vpack.c.b16 %v987, %v975
    %v1264 = vpack.c.b16 %v988, %v976
    %v1265 = vpack.c.b16 %v989, %v977
    %v1266 = vpack.c.b16 %v990, %v978
    %v1267 = vpack.c.b16 %v991, %v979
    %v1268 = vpack.c.b16 %v992, %v980
    %v1269 = vpack.c.b16 %v993, %v981
    %v1270 = vpack.c.b16 %v994, %v982
    %v1271 = vpack.c.b16 %v995, %v983
    %v1272 = vpack.c.b16 %v996, %v984
    %v1273 = vpack.c.b16 %v997, %v985
    %v1274 = vpack.c.b16 %v998, %v986
    %v1275 = vpack.c.b16 %v1011, %v999
    %v1276 = vpack.c.b16 %v1012, %v1000
    %v1277 = vpack.c.b16 %v1013, %v1001
    %v1278 = vpack.c.b16 %v1014, %v1002
    %v1279 = vpack.c.b16 %v1015, %v1003
    %v1280 = vpack.c.b16 %v1016, %v1004
    %v1281 = vpack.c.b16 %v1017, %v1005
    %v1282 = vpack.c.b16 %v1018, %v1006
    %v1283 = vpack.c.b16 %v1019, %v1007
    %v1284 = vpack.c.b16 %v1020, %v1008
    %v1285 = vpack.c.b16 %v1021, %v1009
    %v1286 = vpack.c.b16 %v1022, %v1010
    %v1287 = vpack.c.b16 %v1035, %v1023
    %v1288 = vpack.c.b16 %v1036, %v1024
    %v1289 = vpack.c.b16 %v1037, %v1025
    %v1290 = vpack.c.b16 %v1038, %v1026
    %v1291 = vpack.c.b16 %v1039, %v1027
    %v1292 = vpack.c.b16 %v1040, %v1028
    %v1293 = vpack.c.b16 %v1041, %v1029
    %v1294 = vpack.c.b16 %v1042, %v1030
    %v1295 = vpack.c.b16 %v1043, %v1031
    %v1296 = vpack.c.b16 %v1044, %v1032
    %v1297 = vpack.c.b16 %v1045, %v1033
    %v1298 = vpack.c.b16 %v1046, %v1034
    %v1299 = vpack.c.b16 %v1059, %v1047
    %v1300 = vpack.c.b16 %v1060, %v1048
    %v1301 = vpack.c.b16 %v1061, %v1049
    %v1302 = vpack.c.b16 %v1062, %v1050
    %v1303 = vpack.c.b16 %v1063, %v1051
    %v1304 = vpack.c.b16 %v1064, %v1052
    %v1305 = vpack.c.b16 %v1065, %v1053
    %v1306 = vpack.c.b16 %v1066, %v1054
    %v1307 = vpack.c.b16 %v1067, %v1055
    %v1308 = vpack.c.b16 %v1068, %v1056
    %v1309 = vpack.c.b16 %v1069, %v1057
    %v1310 = vpack.c.b16 %v1070, %v1058
    %v1311 = vpack.c.b16 %v1083, %v1071
    %v1312 = vpack.c.b16 %v1084, %v1072
    %v1313 = vpack.c.b16 %v1085, %v1073
    %v1314 = vpack.c.b16 %v1086, %v1074
    %v1315 = vpack.c.b16 %v1087, %v1075
    %v1316 = vpack.c.b16 %v1088, %v1076
    %v1317 = vpack.c.b16 %v1089, %v1077
    %v1318 = vpack.c.b16 %v1090, %v1078
    %v1319 = vpack.c.b16 %v1091, %v1079
    %v1320 = vpack.c.b16 %v1092, %v1080
    %v1321 = vpack.c.b16 %v1093, %v1081
    %v1322 = vpack.c.b16 %v1094, %v1082
    %v1323 = vpack.c.b16 %v1107, %v1095
    %v1324 = vpack.c.b16 %v1108, %v1096
    %v1325 = vpack.c.b16 %v1109, %v1097
    %v1326 = vpack.c.b16 %v1110, %v1098
    %v1327 = vpack.c.b16 %v1111, %v1099
    %v1328 = vpack.c.b16 %v1112, %v1100
    %v1329 = vpack.c.b16 %v1113, %v1101
    %v1330 = vpack.c.b16 %v1114, %v1102
    %v1331 = vpack.c.b16 %v1115, %v1103
    %v1332 = vpack.c.b16 %v1116, %v1104
    %v1333 = vpack.c.b16 %v1117, %v1105
    %v1334 = vpack.c.b16 %v1118, %v1106
    %v1335 = vpack.c.b16 %v1131, %v1119
    %v1336 = vpack.c.b16 %v1132, %v1120
    %v1337 = vpack.c.b16 %v1133, %v1121
    %v1338 = vpack.c.b16 %v1134, %v1122
    %v1339 = vpack.c.b16 %v1135, %v1123
    %v1340 = vpack.c.b16 %v1136, %v1124
    %v1341 = vpack.c.b16 %v1137, %v1125
    %v1342 = vpack.c.b16 %v1138, %v1126
    %v1343 = vpack.c.b16 %v1139, %v1127
    %v1344 = vpack.c.b16 %v1140, %v1128
    %v1345 = vpack.c.b16 %v1141, %v1129
    %v1346 = vpack.c.b16 %v1142, %v1130
    %v1347 = vpack.c.b16 %v1155, %v1143
    %v1348 = vpack.c.b16 %v1156, %v1144
    %v1349 = vpack.c.b16 %v1157, %v1145
    %v1350 = vpack.c.b16 %v1158, %v1146
    %v1351 = vpack.c.b16 %v1159, %v1147
    %v1352 = vpack.c.b16 %v1160, %v1148
    %v1353 = vpack.c.b16 %v1161, %v1149
    %v1354 = vpack.c.b16 %v1162, %v1150
    %v1355 = vpack.c.b16 %v1163, %v1151
    %v1356 = vpack.c.b16 %v1164, %v1152
    %v1357 = vpack.c.b16 %v1165, %v1153
    %v1358 = vpack.c.b16 %v1166, %v1154
    %1551 = vmatprep.subr.bf16.mxu0 %v1168
    %1552 = vmatpush1.bf16.msra.mxu0 %v1167
    %1553 = vmatprep.subr.bf16.mxu0 %v1180
    %1554 = vmatpush1.bf16.msra.mxu0 %v1179
    %1555 = vmatprep.subr.bf16.mxu0 %v1192
    %1556 = vmatpush1.bf16.msra.mxu0 %v1191
    %1557 = vmatprep.subr.bf16.mxu0 %v1204
    %1558 = vmatpush1.bf16.msra.mxu0 %v1203
    %1559 = vmatprep.subr.bf16.mxu0 %v1216
    %1560 = vmatpush1.bf16.msra.mxu0 %v1215
    %1561 = vmatprep.subr.bf16.mxu0 %v1228
    %1562 = vmatpush1.bf16.msra.mxu0 %v1227
    %1563 = vmatprep.subr.bf16.mxu0 %v1240
    %1564 = vmatpush1.bf16.msra.mxu0 %v1239
    %1565 = vmatprep.subr.bf16.mxu0 %v1252
    %1566 = vmatpush1.bf16.msra.mxu0 %v1251
    %1567 = vmatprep.subr.bf16.mxu0 %v1264
    %1568 = vmatpush1.bf16.msra.mxu0 %v1263
    %1569 = vmatprep.subr.bf16.mxu0 %v1276
    %1570 = vmatpush1.bf16.msra.mxu0 %v1275
    %1571 = vmatprep.subr.bf16.mxu0 %v1288
    %1572 = vmatpush1.bf16.msra.mxu0 %v1287
    %1573 = vmatprep.subr.bf16.mxu0 %v1300
    %1574 = vmatpush1.bf16.msra.mxu0 %v1299
    %1575 = vmatprep.subr.bf16.mxu0 %v1312
    %1576 = vmatpush1.bf16.msra.mxu0 %v1311
    %1577 = vmatprep.subr.bf16.mxu0 %v1324
    %1578 = vmatpush1.bf16.msra.mxu0 %v1323
    %1579 = vmatprep.subr.bf16.mxu0 %v1336
    %1580 = vmatpush1.bf16.msra.mxu0 %v1335
    %1581 = vmatprep.subr.bf16.mxu0 %v1348
    %1582 = vmatpush1.bf16.msra.mxu0 %v1347
    %1583 = vmatprep.mubr.bf16.mxu0 %v334
    %1584 = vmatmul.mubr.bf16.gmra.mrb[0].mxu0 %v333
    %v1585 = vpop.f32.mrb[0].mxu0
    %v1586 = vadd.f32 %v534, %v1585
    %v1587 = vpop.f32.mrb[0].mxu0
    %v1588 = vadd.f32 %v538, %v1587
    %v1589 = vpop.f32.mrb[0].mxu0
    %v1590 = vpop.f32.mrb[0].mxu0
    %1591 = vdwg.mxu0
    %1592 = vmatprep.subr.bf16.mxu0 %v1170
    %1593 = vmatpush1.bf16.msra.mxu0 %v1169
    %1594 = vmatprep.subr.bf16.mxu0 %v1182
    %1595 = vmatpush1.bf16.msra.mxu0 %v1181
    %1596 = vmatprep.subr.bf16.mxu0 %v1194
    %1597 = vmatpush1.bf16.msra.mxu0 %v1193
    %1598 = vmatprep.subr.bf16.mxu0 %v1206
    %1599 = vmatpush1.bf16.msra.mxu0 %v1205
    %1600 = vmatprep.subr.bf16.mxu0 %v1218
    %1601 = vmatpush1.bf16.msra.mxu0 %v1217
    %1602 = vmatprep.subr.bf16.mxu0 %v1230
    %1603 = vmatpush1.bf16.msra.mxu0 %v1229
    %1604 = vmatprep.subr.bf16.mxu0 %v1242
    %1605 = vmatpush1.bf16.msra.mxu0 %v1241
    %1606 = vmatprep.subr.bf16.mxu0 %v1254
    %1607 = vmatpush1.bf16.msra.mxu0 %v1253
    %1608 = vmatprep.subr.bf16.mxu0 %v1266
    %1609 = vmatpush1.bf16.msra.mxu0 %v1265
    %1610 = vmatprep.subr.bf16.mxu0 %v1278
    %1611 = vmatpush1.bf16.msra.mxu0 %v1277
    %1612 = vmatprep.subr.bf16.mxu0 %v1290
    %1613 = vmatpush1.bf16.msra.mxu0 %v1289
    %1614 = vmatprep.subr.bf16.mxu0 %v1302
    %1615 = vmatpush1.bf16.msra.mxu0 %v1301
    %1616 = vmatprep.subr.bf16.mxu0 %v1314
    %1617 = vmatpush1.bf16.msra.mxu0 %v1313
    %1618 = vmatprep.subr.bf16.mxu0 %v1326
    %1619 = vmatpush1.bf16.msra.mxu0 %v1325
    %1620 = vmatprep.subr.bf16.mxu0 %v1338
    %1621 = vmatpush1.bf16.msra.mxu0 %v1337
    %1622 = vmatprep.subr.bf16.mxu0 %v1350
    %1623 = vmatpush1.bf16.msra.mxu0 %v1349
    %1624 = vmatprep.mubr.bf16.mxu0 %v334
    %1625 = vmatmul.mubr.bf16.gmra.mrb[0].mxu0 %v333
    %v1626 = vpop.f32.mrb[0].mxu0
    %v1627 = vadd.f32 %v542, %v1626
    %v1628 = vpop.f32.mrb[0].mxu0
    %v1629 = vadd.f32 %v546, %v1628
    %v1630 = vpop.f32.mrb[0].mxu0
    %v1631 = vpop.f32.mrb[0].mxu0
    %1632 = vdwg.mxu0
    %1633 = vmatprep.subr.bf16.mxu0 %v1172
    %1634 = vmatpush1.bf16.msra.mxu0 %v1171
    %1635 = vmatprep.subr.bf16.mxu0 %v1184
    %1636 = vmatpush1.bf16.msra.mxu0 %v1183
    %1637 = vmatprep.subr.bf16.mxu0 %v1196
    %1638 = vmatpush1.bf16.msra.mxu0 %v1195
    %1639 = vmatprep.subr.bf16.mxu0 %v1208
    %1640 = vmatpush1.bf16.msra.mxu0 %v1207
    %1641 = vmatprep.subr.bf16.mxu0 %v1220
    %1642 = vmatpush1.bf16.msra.mxu0 %v1219
    %1643 = vmatprep.subr.bf16.mxu0 %v1232
    %1644 = vmatpush1.bf16.msra.mxu0 %v1231
    %1645 = vmatprep.subr.bf16.mxu0 %v1244
    %1646 = vmatpush1.bf16.msra.mxu0 %v1243
    %1647 = vmatprep.subr.bf16.mxu0 %v1256
    %1648 = vmatpush1.bf16.msra.mxu0 %v1255
    %1649 = vmatprep.subr.bf16.mxu0 %v1268
    %1650 = vmatpush1.bf16.msra.mxu0 %v1267
    %1651 = vmatprep.subr.bf16.mxu0 %v1280
    %1652 = vmatpush1.bf16.msra.mxu0 %v1279
    %1653 = vmatprep.subr.bf16.mxu0 %v1292
    %1654 = vmatpush1.bf16.msra.mxu0 %v1291
    %1655 = vmatprep.subr.bf16.mxu0 %v1304
    %1656 = vmatpush1.bf16.msra.mxu0 %v1303
    %1657 = vmatprep.subr.bf16.mxu0 %v1316
    %1658 = vmatpush1.bf16.msra.mxu0 %v1315
    %1659 = vmatprep.subr.bf16.mxu0 %v1328
    %1660 = vmatpush1.bf16.msra.mxu0 %v1327
    %1661 = vmatprep.subr.bf16.mxu0 %v1340
    %1662 = vmatpush1.bf16.msra.mxu0 %v1339
    %1663 = vmatprep.subr.bf16.mxu0 %v1352
    %1664 = vmatpush1.bf16.msra.mxu0 %v1351
    %1665 = vmatprep.mubr.bf16.mxu0 %v334
    %1666 = vmatmul.mubr.bf16.gmra.mrb[0].mxu0 %v333
    %v1667 = vpop.f32.mrb[0].mxu0
    %v1668 = vadd.f32 %v550, %v1667
    %v1669 = vpop.f32.mrb[0].mxu0
    %v1670 = vadd.f32 %v554, %v1669
    %v1671 = vpop.f32.mrb[0].mxu0
    %v1672 = vpop.f32.mrb[0].mxu0
    %1673 = vdwg.mxu0
    %1674 = vmatprep.subr.bf16.mxu0 %v1174
    %1675 = vmatpush1.bf16.msra.mxu0 %v1173
    %1676 = vmatprep.subr.bf16.mxu0 %v1186
    %1677 = vmatpush1.bf16.msra.mxu0 %v1185
    %1678 = vmatprep.subr.bf16.mxu0 %v1198
    %1679 = vmatpush1.bf16.msra.mxu0 %v1197
    %1680 = vmatprep.subr.bf16.mxu0 %v1210
    %1681 = vmatpush1.bf16.msra.mxu0 %v1209
    %1682 = vmatprep.subr.bf16.mxu0 %v1222
    %1683 = vmatpush1.bf16.msra.mxu0 %v1221
    %1684 = vmatprep.subr.bf16.mxu0 %v1234
    %1685 = vmatpush1.bf16.msra.mxu0 %v1233
    %1686 = vmatprep.subr.bf16.mxu0 %v1246
    %1687 = vmatpush1.bf16.msra.mxu0 %v1245
    %1688 = vmatprep.subr.bf16.mxu0 %v1258
    %1689 = vmatpush1.bf16.msra.mxu0 %v1257
    %1690 = vmatprep.subr.bf16.mxu0 %v1270
    %1691 = vmatpush1.bf16.msra.mxu0 %v1269
    %1692 = vmatprep.subr.bf16.mxu0 %v1282
    %1693 = vmatpush1.bf16.msra.mxu0 %v1281
    %1694 = vmatprep.subr.bf16.mxu0 %v1294
    %1695 = vmatpush1.bf16.msra.mxu0 %v1293
    %1696 = vmatprep.subr.bf16.mxu0 %v1306
    %1697 = vmatpush1.bf16.msra.mxu0 %v1305
    %1698 = vmatprep.subr.bf16.mxu0 %v1318
    %1699 = vmatpush1.bf16.msra.mxu0 %v1317
    %1700 = vmatprep.subr.bf16.mxu0 %v1330
    %1701 = vmatpush1.bf16.msra.mxu0 %v1329
    %1702 = vmatprep.subr.bf16.mxu0 %v1342
    %1703 = vmatpush1.bf16.msra.mxu0 %v1341
    %1704 = vmatprep.subr.bf16.mxu0 %v1354
    %1705 = vmatpush1.bf16.msra.mxu0 %v1353
    %1706 = vmatprep.mubr.bf16.mxu0 %v334
    %1707 = vmatmul.mubr.bf16.gmra.mrb[0].mxu0 %v333
    %v1708 = vpop.f32.mrb[0].mxu0
    %v1709 = vadd.f32 %v558, %v1708
    %v1710 = vpop.f32.mrb[0].mxu0
    %v1711 = vadd.f32 %v562, %v1710
    %v1712 = vpop.f32.mrb[0].mxu0
    %v1713 = vpop.f32.mrb[0].mxu0
    %1714 = vdwg.mxu0
    %1715 = vmatprep.subr.bf16.mxu0 %v1176
    %1716 = vmatpush1.bf16.msra.mxu0 %v1175
    %1717 = vmatprep.subr.bf16.mxu0 %v1188
    %1718 = vmatpush1.bf16.msra.mxu0 %v1187
    %1719 = vmatprep.subr.bf16.mxu0 %v1200
    %1720 = vmatpush1.bf16.msra.mxu0 %v1199
    %1721 = vmatprep.subr.bf16.mxu0 %v1212
    %1722 = vmatpush1.bf16.msra.mxu0 %v1211
    %1723 = vmatprep.subr.bf16.mxu0 %v1224
    %1724 = vmatpush1.bf16.msra.mxu0 %v1223
    %1725 = vmatprep.subr.bf16.mxu0 %v1236
    %1726 = vmatpush1.bf16.msra.mxu0 %v1235
    %1727 = vmatprep.subr.bf16.mxu0 %v1248
    %1728 = vmatpush1.bf16.msra.mxu0 %v1247
    %1729 = vmatprep.subr.bf16.mxu0 %v1260
    %1730 = vmatpush1.bf16.msra.mxu0 %v1259
    %1731 = vmatprep.subr.bf16.mxu0 %v1272
    %1732 = vmatpush1.bf16.msra.mxu0 %v1271
    %1733 = vmatprep.subr.bf16.mxu0 %v1284
    %1734 = vmatpush1.bf16.msra.mxu0 %v1283
    %1735 = vmatprep.subr.bf16.mxu0 %v1296
    %1736 = vmatpush1.bf16.msra.mxu0 %v1295
    %1737 = vmatprep.subr.bf16.mxu0 %v1308
    %1738 = vmatpush1.bf16.msra.mxu0 %v1307
    %1739 = vmatprep.subr.bf16.mxu0 %v1320
    %1740 = vmatpush1.bf16.msra.mxu0 %v1319
    %1741 = vmatprep.subr.bf16.mxu0 %v1332
    %1742 = vmatpush1.bf16.msra.mxu0 %v1331
    %1743 = vmatprep.subr.bf16.mxu0 %v1344
    %1744 = vmatpush1.bf16.msra.mxu0 %v1343
    %1745 = vmatprep.subr.bf16.mxu0 %v1356
    %1746 = vmatpush1.bf16.msra.mxu0 %v1355
    %1747 = vmatprep.mubr.bf16.mxu0 %v334
    %1748 = vmatmul.mubr.bf16.gmra.mrb[0].mxu0 %v333
    %v1749 = vpop.f32.mrb[0].mxu0
    %v1750 = vadd.f32 %v566, %v1749
    %v1751 = vpop.f32.mrb[0].mxu0
    %v1752 = vadd.f32 %v570, %v1751
    %v1753 = vpop.f32.mrb[0].mxu0
    %v1754 = vpop.f32.mrb[0].mxu0
    %1755 = vdwg.mxu0
    %1756 = vmatprep.subr.bf16.mxu0 %v1178
    %1757 = vmatpush1.bf16.msra.mxu0 %v1177
    %1758 = vmatprep.subr.bf16.mxu0 %v1190
    %1759 = vmatpush1.bf16.msra.mxu0 %v1189
    %1760 = vmatprep.subr.bf16.mxu0 %v1202
    %1761 = vmatpush1.bf16.msra.mxu0 %v1201
    %1762 = vmatprep.subr.bf16.mxu0 %v1214
    %1763 = vmatpush1.bf16.msra.mxu0 %v1213
    %1764 = vmatprep.subr.bf16.mxu0 %v1226
    %1765 = vmatpush1.bf16.msra.mxu0 %v1225
    %1766 = vmatprep.subr.bf16.mxu0 %v1238
    %1767 = vmatpush1.bf16.msra.mxu0 %v1237
    %1768 = vmatprep.subr.bf16.mxu0 %v1250
    %1769 = vmatpush1.bf16.msra.mxu0 %v1249
    %1770 = vmatprep.subr.bf16.mxu0 %v1262
    %1771 = vmatpush1.bf16.msra.mxu0 %v1261
    %1772 = vmatprep.subr.bf16.mxu0 %v1274
    %1773 = vmatpush1.bf16.msra.mxu0 %v1273
    %1774 = vmatprep.subr.bf16.mxu0 %v1286
    %1775 = vmatpush1.bf16.msra.mxu0 %v1285
    %1776 = vmatprep.subr.bf16.mxu0 %v1298
    %1777 = vmatpush1.bf16.msra.mxu0 %v1297
    %1778 = vmatprep.subr.bf16.mxu0 %v1310
    %1779 = vmatpush1.bf16.msra.mxu0 %v1309
    %1780 = vmatprep.subr.bf16.mxu0 %v1322
    %1781 = vmatpush1.bf16.msra.mxu0 %v1321
    %1782 = vmatprep.subr.bf16.mxu0 %v1334
    %1783 = vmatpush1.bf16.msra.mxu0 %v1333
    %1784 = vmatprep.subr.bf16.mxu0 %v1346
    %1785 = vmatpush1.bf16.msra.mxu0 %v1345
    %1786 = vmatprep.subr.bf16.mxu0 %v1358
    %1787 = vmatpush1.bf16.msra.mxu0 %v1357
    %1788 = vmatprep.mubr.bf16.mxu0 %v334
    %1789 = vmatmul.mubr.bf16.gmra.mrb[0].mxu0 %v333
    %v1790 = vpop.f32.mrb[0].mxu0
    %v1791 = vadd.f32 %v574, %v1790
    %v1792 = vpop.f32.mrb[0].mxu0
    %v1793 = vadd.f32 %v578, %v1792
    %v1794 = vpop.f32.mrb[0].mxu0
    %v1795 = vpop.f32.mrb[0].mxu0
    %1796 = vdwg.mxu0
    %v1809 = vcombine.low %v1586, %v1588
    %v1810 = vcombine.low %v1627, %v1629
    %v1812 = vunpack.c.l.s4 1983009808
    %v1813 = vunpack.c.0.s8 %v1812
    %v1814 = vlaneseq
    %v1815 = vshrl.u32 %v1814, 7
    %v1816 = vsub.s32 %v1813, %v1815
    %v1817 = vrot.slane %v1809, %v1816
    %v1819 = vunpack.c.l.s4 1983009808
    %v1820 = vunpack.c.0.s8 %v1819
    %v1821 = vlaneseq
    %v1822 = vshrl.u32 %v1821, 7
    %v1823 = vsub.s32 %v1820, %v1822
    %v1824 = vrot.slane %v1810, %v1823
    %v1825 = vcombine.low %v1817, %v1824
    %v1826 = vcombine.low %v1668, %v1670
    %v1827 = vcombine.low %v1709, %v1711
    %v1829 = vunpack.c.l.s4 1983009808
    %v1830 = vunpack.c.0.s8 %v1829
    %v1831 = vlaneseq
    %v1832 = vshrl.u32 %v1831, 7
    %v1833 = vsub.s32 %v1830, %v1832
    %v1834 = vrot.slane %v1826, %v1833
    %v1836 = vunpack.c.l.s4 1983009808
    %v1837 = vunpack.c.0.s8 %v1836
    %v1838 = vlaneseq
    %v1839 = vshrl.u32 %v1838, 7
    %v1840 = vsub.s32 %v1837, %v1839
    %v1841 = vrot.slane %v1827, %v1840
    %v1842 = vcombine.low %v1834, %v1841
    %v1843 = vcombine.low %v1750, %v1752
    %v1844 = vcombine.low %v1791, %v1793
    %v1846 = vunpack.c.l.s4 1983009808
    %v1847 = vunpack.c.0.s8 %v1846
    %v1848 = vlaneseq
    %v1849 = vshrl.u32 %v1848, 7
    %v1850 = vsub.s32 %v1847, %v1849
    %v1851 = vrot.slane %v1843, %v1850
    %v1853 = vunpack.c.l.s4 1983009808
    %v1854 = vunpack.c.0.s8 %v1853
    %v1855 = vlaneseq
    %v1856 = vshrl.u32 %v1855, 7
    %v1857 = vsub.s32 %v1854, %v1856
    %v1858 = vrot.slane %v1844, %v1857
    %v1859 = vcombine.low %v1851, %v1858
    %1863 = vst [vmem:[#allocation8] sm:$0xff] %v1825
    %1864 = vst [vmem:[#allocation8 + $0x8] sm:$0xff] %v1842
    %1865 = vst [vmem:[#allocation8 + $0x10] sm:$0xff] %v1859
    // Predicated region
    $region34: #{tpu_custom_call.1} parent=1 // pred_check
      _
    $region35: #{tpu_custom_call.1} parent=1 // pred_check_branch
      %1867 = sbr.rel (0) target = $region37
    $region36: #{tpu_custom_call.1} parent=1 // pred_region
      %s1869 = ssub.s32 384, 384
      %1870 = vsyncadd [#allocation4], %s1869
      %s1872 = sshll.u32 [#allocation8], 4
      %s1873 = int_to_ptr.vmem [resolvable:$true] %s1872
      %1875 = dma.vmem_to_hbm [thread:$0]  %s1873, 384, %s5, [#allocation4]
    $region37: #{tpu_custom_call.1} parent=1 // pred_fallthru
      _
    // Predicated region
    $region38: #{tpu_custom_call.1} parent=1 // pred_check
      _
    $region39: #{tpu_custom_call.1} parent=1 // pred_check_branch
      %1877 = sbr.rel (0) target = $region41
    $region40: #{tpu_custom_call.1} parent=1 // pred_region
      %1878 = dma.done [#allocation4], 384
    $region41: #{tpu_custom_call.1} parent=1 // pred_fallthru
      _
    %1879 = vsyncpa [#allocation3], 1
    %1880 = vsyncpa [#allocation6], 1
    %1881 = vsyncpa [#allocation4], 1

</llo_original>
